<compile_context>
chip_gen: v5e
topology: v5e:2x2
jax: 0.10.0
libtpu: 0.0.40
codegen_flags: <defaults>
</compile_context>

<pallas_src>
import functools

import jax
import jax.numpy as jnp
from jax import lax
from jax.experimental import pallas as pl
from jax.experimental.pallas import tpu as pltpu

EPS = 1e-5
LANE = 128
SUBLANE = 8
COMPUTE_DTYPE = jnp.bfloat16            # MXU operand / intermediate storage dtype


def _round_up(x, m):
    return (x + m - 1) // m * m


def _pick_row_tile(total_rows, target=2048):
    """Largest multiple-of-8 divisor of total_rows that is <= target.

    Falls back to the whole extent when the array is small or has no aligned divisor
    (keeps every BlockSpec legal: tile divisible by 8, or equal to the full dim)."""
    if total_rows <= target or total_rows % SUBLANE:
        return total_rows
    best = SUBLANE
    d = SUBLANE
    while d <= target:
        if total_rows % d == 0:
            best = d
        d += SUBLANE
    return best


def _vmem_limit_bytes():
    """Generation-dependent VMEM budget (v7x: 64 MiB physical, v5e/v6e: 128 MiB)."""
    cap = None
    try:
        info = pltpu.get_tpu_info()
        cap = getattr(info, "vmem_capacity_bytes", None)
    except Exception:
        cap = None
    if not cap:
        cap = 64 * 1024 * 1024          # conservative fallback (v7x physical VMEM)
    return int(min(cap * 3 // 4, 100 * 1024 * 1024))


# ---------------------------------------------------------------------------
# Stage 1: 1x1 conv (MXU) + BN1 partial statistics          (row-tiled stream)
# ---------------------------------------------------------------------------
def _conv1x1_stats_kernel(x_ref, w1_ref, y1_ref, s_ref, q_ref):
    """x_ref : (TR, Cp) bf16   row tile of the spatially+channel zero-padded input
       w1_ref: (Cp, Cp) bf16
       y1_ref: (TR, Cp) bf16   conv1 output, pre-BN1 (padded rows stay exactly zero)
       s_ref : (1, 1, Cp) f32  per-tile column sum
       q_ref : (1, 1, Cp) f32  per-tile column sum of squares"""
    y = jnp.dot(x_ref[...], w1_ref[...], preferred_element_type=jnp.float32)
    y1_ref[...] = y.astype(y1_ref.dtype)
    # Padded rows / channels are exactly zero -> contribute nothing; the true element
    # count is divided out in the fused finalize of the consuming kernel.
    s_ref[...] = jnp.sum(y, axis=0, keepdims=True)[None]
    q_ref[...] = jnp.sum(y * y, axis=0, keepdims=True)[None]


# ---------------------------------------------------------------------------
# Stage 2: fused BN1 finalize + ReLU, 3x3 conv (stride 1, pad 1), BN2 stats
# ---------------------------------------------------------------------------
def _bn1_conv3x3_stats_kernel(y1_ref, w2_ref, s1_ref, q1_ref, g1_ref, b1_ref,
                              y2_ref, s2_ref, q2_ref, *, hp, wp, h, w, inv_count):
    """y1_ref : (Hp*Wp, Cp)  bf16  one image's flat padded conv1 output
       w2_ref : (3, 3, Cp, Cp) bf16  HWIO
       s1/q1  : (T1, 1, Cp)   f32   stage-1 per-tile partial sums
       g1/b1  : (1, Cp)       f32   BN1 gamma / beta (channel padded)
       y2_ref : (1, H, W, Cp) bf16  conv2 output, pre-BN2
       s2/q2  : (1, 1, Cp)    f32   per-image partial sums for BN2"""
    cp = y1_ref.shape[-1]

    # Fused BN1 finalize (tiny VPU work, removes the XLA round trip between calls).
    mean = jnp.sum(s1_ref[...], axis=0) * inv_count               # (1, Cp)
    ex2 = jnp.sum(q1_ref[...], axis=0) * inv_count
    var = jnp.maximum(ex2 - mean * mean, 0.0)                      # cancellation guard
    scale = g1_ref[...] * lax.rsqrt(var + EPS)
    shift = b1_ref[...] - mean * scale

    # BN1 + ReLU in f32 over the whole padded slab, force the conv halo border back to
    # exactly zero (3x3 zero padding must come AFTER bn+relu), then ONE bf16 cast.
    a3 = y1_ref[...].astype(jnp.float32).reshape(hp, wp, cp)
    a3 = jnp.maximum(a3 * scale + shift, 0.0)
    row = lax.broadcasted_iota(jnp.int32, (hp, wp, 1), 0)
    col = lax.broadcasted_iota(jnp.int32, (hp, wp, 1), 1)
    interior = (row >= 1) & (row <= h) & (col >= 1) & (col <= w)
    a = jnp.where(interior, a3, 0.0).reshape(hp * wp, cp).astype(COMPUTE_DTYPE)

    # 3x3 conv = 9 full-lane-width matmuls on the flat padded layout.  Output slot
    # p = i*wp + j needs input flat index p + ky*wp + kx, so per kx we shift the whole
    # slab by kx rows once (np.roll equivalent; wrapped rows only feed the junk W-pad
    # columns, which are masked / dropped below) and per ky take a sublane-aligned
    # contiguous row window.  TODO(synk): pltpu.roll(a, -kx, 0) would use the XLU slot.
    acc = jnp.zeros((h * wp, cp), jnp.float32)
    for kx in range(3):
        a_kx = a if kx == 0 else jnp.concatenate([a[kx:], a[:kx]], axis=0)
        for ky in range(3):
            off = ky * wp
            acc = acc + jnp.dot(a_kx[off:off + h * wp], w2_ref[ky, kx],
                                preferred_element_type=jnp.float32)

    # BN2 partial stats over the valid columns only (W-pad columns masked to zero).
    acc3 = acc.reshape(h, wp, cp)
    colmask = lax.broadcasted_iota(jnp.int32, (h, wp, 1), 1) < w
    acc_m = jnp.where(colmask, acc3, 0.0).reshape(h * wp, cp)
    s2_ref[...] = jnp.sum(acc_m, axis=0, keepdims=True)[None]
    q2_ref[...] = jnp.sum(acc_m * acc_m, axis=0, keepdims=True)[None]

    # Extract the valid columns once (single relayout instead of 9 on the input side).
    y2_ref[...] = acc3[:, :w, :].reshape(1, h, w, cp).astype(y2_ref.dtype)


# ---------------------------------------------------------------------------
# Stage 3: fused BN2 finalize + residual add + ReLU          (row-tiled stream)
# ---------------------------------------------------------------------------
def _bn2_residual_relu_kernel(y2_ref, res_ref, s2_ref, q2_ref, g2_ref, b2_ref,
                              o_ref, *, inv_count):
    """y2_ref : (TR, Cp) bf16   conv2 output rows
       res_ref: (TR, Cp) bf16   residual = channel-padded (NOT spatially padded) input
       s2/q2  : (N, 1, Cp) f32  per-image BN2 partial sums
       g2/b2  : (1, Cp) f32
       o_ref  : (TR, Cp)        block output (bf16 by default: memory-bound stage)"""
    mean = jnp.sum(s2_ref[...], axis=0) * inv_count
    ex2 = jnp.sum(q2_ref[...], axis=0) * inv_count
    var = jnp.maximum(ex2 - mean * mean, 0.0)
    scale = g2_ref[...] * lax.rsqrt(var + EPS)
    shift = b2_ref[...] - mean * scale

    y = y2_ref[...].astype(jnp.float32)
    r = res_ref[...].astype(jnp.float32)
    o_ref[...] = jnp.maximum(y * scale + shift + r, 0.0).astype(o_ref.dtype)


# ---------------------------------------------------------------------------
# Host-side helpers
# ---------------------------------------------------------------------------
def prepare_params(w1_oihw, g1, b1, w2_oihw, g2, b2):
    """One-time weight re-layout (hoist out of the hot path): OIHW -> IO / HWIO,
    channels zero-padded to a 128-lane multiple, bf16 MXU operands."""
    co, ci = w1_oihw.shape[0], w1_oihw.shape[1]
    cp = _round_up(max(ci, co), LANE)
    w1 = jnp.pad(jnp.transpose(w1_oihw[:, :, 0, 0], (1, 0)),
                 ((0, cp - ci), (0, cp - co))).astype(COMPUTE_DTYPE)
    w2 = jnp.pad(jnp.transpose(w2_oihw, (2, 3, 1, 0)),
                 ((0, 0), (0, 0), (0, cp - co), (0, cp - co))).astype(COMPUTE_DTYPE)

    def vec(v):
        return jnp.pad(v.astype(jnp.float32), (0, cp - co))[None]   # (1, Cp)

    return dict(w1=w1, w2=w2, g1=vec(g1), b1=vec(b1), g2=vec(g2), b2=vec(b2))


def basic_block_nhwc(x_nhwc, params, out_dtype=COMPUTE_DTYPE):
    n, h, w, c = x_nhwc.shape
    cp = params["w1"].shape[1]
    hp = h + 2
    wp = _round_up(w + 2, SUBLANE)     # right edge padded so flat reshapes stay no-ops

    # Channel-padded residual (no spatial pad) + spatially padded conv-halo input.
    x_cp = jnp.pad(x_nhwc, ((0, 0), (0, 0), (0, 0), (0, cp - c))).astype(COMPUTE_DTYPE)
    xp = jnp.pad(x_cp, ((0, 0), (1, 1), (1, wp - w - 1), (0, 0)))   # (N, Hp, Wp, Cp)
    xp2d = xp.reshape(n * hp * wp, cp)                              # free reshape

    count = n * h * w
    inv_count = 1.0 / float(count)
    cparams = pltpu.CompilerParams(
        dimension_semantics=("parallel",),
        vmem_limit_bytes=_vmem_limit_bytes(),
    )

    # ---- stage 1: conv1x1 + BN1 partial stats (row-tiled) ----
    r1 = n * hp * wp
    tr1 = _pick_row_tile(r1)
    t1 = r1 // tr1
    y1_2d, s1, q1 = pl.pallas_call(
        _conv1x1_stats_kernel,
        grid=(t1,),
        in_specs=[
            pl.BlockSpec((tr1, cp), lambda i: (i, 0)),
            pl.BlockSpec((cp, cp), lambda i: (0, 0)),
        ],
        out_specs=(
            pl.BlockSpec((tr1, cp), lambda i: (i, 0)),
            pl.BlockSpec((1, 1, cp), lambda i: (i, 0, 0)),
            pl.BlockSpec((1, 1, cp), lambda i: (i, 0, 0)),
        ),
        out_shape=(
            jax.ShapeDtypeStruct((r1, cp), COMPUTE_DTYPE),
            jax.ShapeDtypeStruct((t1, 1, cp), jnp.float32),
            jax.ShapeDtypeStruct((t1, 1, cp), jnp.float32),
        ),
        compiler_params=cparams,
    )(xp2d, params["w1"])

    # ---- stage 2: fused BN1 finalize + ReLU, 3x3 conv, BN2 partial stats ----
    # TODO(synk): H row-band tiling for very large spatial extents (v7x VMEM).
    y2, s2, q2 = pl.pallas_call(
        functools.partial(_bn1_conv3x3_stats_kernel,
                          hp=hp, wp=wp, h=h, w=w, inv_count=inv_count),
        grid=(n,),
        in_specs=[
            pl.BlockSpec((hp * wp, cp), lambda i: (i, 0)),
            pl.BlockSpec((3, 3, cp, cp), lambda i: (0, 0, 0, 0)),
            pl.BlockSpec((t1, 1, cp), lambda i: (0, 0, 0)),
            pl.BlockSpec((t1, 1, cp), lambda i: (0, 0, 0)),
            pl.BlockSpec((1, cp), lambda i: (0, 0)),
            pl.BlockSpec((1, cp), lambda i: (0, 0)),
        ],
        out_specs=(
            pl.BlockSpec((1, h, w, cp), lambda i: (i, 0, 0, 0)),
            pl.BlockSpec((1, 1, cp), lambda i: (i, 0, 0)),
            pl.BlockSpec((1, 1, cp), lambda i: (i, 0, 0)),
        ),
        out_shape=(
            jax.ShapeDtypeStruct((n, h, w, cp), COMPUTE_DTYPE),
            jax.ShapeDtypeStruct((n, 1, cp), jnp.float32),
            jax.ShapeDtypeStruct((n, 1, cp), jnp.float32),
        ),
        compiler_params=cparams,
    )(y1_2d, params["w2"], s1, q1, params["g1"], params["b1"])

    # ---- stage 3: fused BN2 finalize + residual + ReLU (row-tiled stream) ----
    r3 = n * h * w
    tr3 = _pick_row_tile(r3)
    t3 = r3 // tr3
    y2f = y2.reshape(r3, cp)          # free reshape
    resf = x_cp.reshape(r3, cp)       # free reshape
    outf = pl.pallas_call(
        functools.partial(_bn2_residual_relu_kernel, inv_count=inv_count),
        grid=(t3,),
        in_specs=[
            pl.BlockSpec((tr3, cp), lambda i: (i, 0)),
            pl.BlockSpec((tr3, cp), lambda i: (i, 0)),
            pl.BlockSpec((n, 1, cp), lambda i: (0, 0, 0)),
            pl.BlockSpec((n, 1, cp), lambda i: (0, 0, 0)),
            pl.BlockSpec((1, cp), lambda i: (0, 0)),
            pl.BlockSpec((1, cp), lambda i: (0, 0)),
        ],
        out_specs=pl.BlockSpec((tr3, cp), lambda i: (i, 0)),
        out_shape=jax.ShapeDtypeStruct((r3, cp), out_dtype),
        compiler_params=cparams,
    )(y2f, resf, s2, q2, params["g2"], params["b2"])

    return outf.reshape(n, h, w, cp)[..., :c]


@jax.jit
def basic_block_nchw(x_nchw, w1_oihw, g1, b1, w2_oihw, g2, b2):
    """PyTorch-facing wrapper: NCHW input, OIHW weights, training-mode BN."""
    n, c, h, w = x_nchw.shape
    planes = w1_oihw.shape[0]
    assert planes == c and w2_oihw.shape[:2] == (planes, planes), (
        "residual add requires inplanes == planes (stride=1, downsample=None)")
    params = prepare_params(w1_oihw, g1, b1, w2_oihw, g2, b2)
    x_nhwc = jnp.transpose(x_nchw, (0, 2, 3, 1))
    out = basic_block_nhwc(x_nhwc, params)
    return jnp.transpose(out, (0, 3, 1, 2)).astype(x_nchw.dtype)


def reference_nchw(x, w1_oihw, g1, b1, w2_oihw, g2, b2):
    """Pure-JAX f32 reference mirroring the PyTorch forward (training-mode BN)."""
    dn = ("NCHW", "OIHW", "NCHW")

    def bn(o, g, b):
        m = o.mean(axis=(0, 2, 3), keepdims=True)
        v = ((o - m) ** 2).mean(axis=(0, 2, 3), keepdims=True)
        return (o - m) / jnp.sqrt(v + EPS) * g.reshape(1, -1, 1, 1) + b.reshape(1, -1, 1, 1)

    out = lax.conv_general_dilated(x, w1_oihw, (1, 1), "VALID", dimension_numbers=dn)
    out = jnp.maximum(bn(out, g1, b1), 0.0)
    out = lax.conv_general_dilated(out, w2_oihw, (1, 1), ((1, 1), (1, 1)),
                                   dimension_numbers=dn)
    out = bn(out, g2, b2)
    return jnp.maximum(out + x, 0.0)


if __name__ == "__main__":
    N, planes, H, W = 2, 32, 16, 16      # inplanes == planes, stride=1

    key = jax.random.PRNGKey(0)
    kx, k1, k2, kg1, kb1, kg2, kb2 = jax.random.split(key, 7)
    x = jax.random.normal(kx, (N, planes, H, W), dtype=jnp.float32)
    w1 = jax.random.normal(k1, (planes, planes, 1, 1), dtype=jnp.float32) * 0.2
    w2 = jax.random.normal(k2, (planes, planes, 3, 3), dtype=jnp.float32) * 0.1
    g1 = 1.0 + 0.1 * jax.random.normal(kg1, (planes,), dtype=jnp.float32)
    b1 = 0.1 * jax.random.normal(kb1, (planes,), dtype=jnp.float32)
    g2 = 1.0 + 0.1 * jax.random.normal(kg2, (planes,), dtype=jnp.float32)
    b2 = 0.1 * jax.random.normal(kb2, (planes,), dtype=jnp.float32)

    out = jax.block_until_ready(basic_block_nchw(x, w1, g1, b1, w2, g2, b2))
    ref = reference_nchw(x, w1, g1, b1, w2, g2, b2)
    assert out.shape == ref.shape == (N, planes, H, W)

    max_err = float(jnp.max(jnp.abs(out - ref)))
    rel_rms = float(jnp.sqrt(jnp.mean((out - ref) ** 2) /
                             (jnp.mean(ref ** 2) + 1e-9)))
    # bf16 MXU operands / bf16 intermediates & output vs f32 reference -> loose but
    # meaningful tolerance (any geometry/BN bug would be O(1) wrong).
    assert max_err < 0.2 and rel_rms < 0.05, (
        f"mismatch: max_abs_err={max_err:.4f} rel_rms={rel_rms:.4f}")
    print("KERNEL_OK")
</pallas_src>

<mosaic_0001>
module attributes {stable_mosaic.version = 11 : i64} {
  func.func @_conv1x1_stats_kernel(%arg0: i32, %arg1: memref<864x128xbf16, #tpu.memory_space<vmem>>, %arg2: memref<128x128xbf16, #tpu.memory_space<vmem>>, %arg3: memref<864x128xbf16, #tpu.memory_space<vmem>>, %arg4: memref<1x1x128xf32, #tpu.memory_space<vmem>>, %arg5: memref<1x1x128xf32, #tpu.memory_space<vmem>>) attributes {dimension_semantics = [#tpu.dimension_semantics<parallel>], iteration_bounds = array<i64: 1>, scalar_prefetch = 0 : i64, scratch_operands = 0 : i64, tpu.core_type = #tpu.core_type<tc>, window_params = [{transform_indices = @transform_0, window_bounds = array<i64: 864, 128>}, {pipeline_mode = #tpu.pipeline_mode<synchronous>, transform_indices = @transform_1, window_bounds = array<i64: 128, 128>}, {transform_indices = @transform_2, window_bounds = array<i64: 864, 128>}, {transform_indices = @transform_3, window_bounds = array<i64: 1, 1, 128>}, {transform_indices = @transform_4, window_bounds = array<i64: 1, 1, 128>}]} {
    %c0 = arith.constant 0 : index
    %c0_0 = arith.constant 0 : index
    %0 = vector.load %arg1[%c0, %c0_0] : memref<864x128xbf16, #tpu.memory_space<vmem>>, vector<864x128xbf16>
    %c0_1 = arith.constant 0 : index
    %c0_2 = arith.constant 0 : index
    %1 = vector.load %arg2[%c0_1, %c0_2] : memref<128x128xbf16, #tpu.memory_space<vmem>>, vector<128x128xbf16>
    %cst = arith.constant dense<0.000000e+00> : vector<864x128xf32>
    %2 = tpu.matmul %0, %1, %cst {dimension_numbers = #tpu.dot_dimension_numbers<[1], [0], [0], [1], [0, 0, 1, 1], [], []>} : vector<864x128xbf16>, vector<128x128xbf16>, vector<864x128xf32> -> vector<864x128xf32>
    %3 = arith.truncf %2 : vector<864x128xf32> to vector<864x128xbf16>
    %c0_3 = arith.constant 0 : index
    %c0_4 = arith.constant 0 : index
    %4 = vector.load %arg3[%c0_3, %c0_4] : memref<864x128xbf16, #tpu.memory_space<vmem>>, vector<864x128xbf16>
    tpu.vector_store %arg3[%c0_3, %c0_4], %3 {strides = array<i32>} : memref<864x128xbf16, #tpu.memory_space<vmem>>, vector<864x128xbf16>,
    %cst_5 = arith.constant dense<0.000000e+00> : vector<128xf32>
    %5 = vector.multi_reduction <add>, %2, %cst_5 [0] : vector<864x128xf32> to vector<128xf32>
    %6 = vector.shape_cast %5 : vector<128xf32> to vector<1x128xf32>
    %7 = vector.shape_cast %6 : vector<1x128xf32> to vector<1x1x128xf32>
    %c0_6 = arith.constant 0 : index
    %c0_7 = arith.constant 0 : index
    %c0_8 = arith.constant 0 : index
    %8 = vector.load %arg4[%c0_6, %c0_7, %c0_8] : memref<1x1x128xf32, #tpu.memory_space<vmem>>, vector<1x1x128xf32>
    tpu.vector_store %arg4[%c0_6, %c0_7, %c0_8], %7 {strides = array<i32>} : memref<1x1x128xf32, #tpu.memory_space<vmem>>, vector<1x1x128xf32>,
    %9 = arith.mulf %2, %2 : vector<864x128xf32>
    %cst_9 = arith.constant dense<0.000000e+00> : vector<128xf32>
    %10 = vector.multi_reduction <add>, %9, %cst_9 [0] : vector<864x128xf32> to vector<128xf32>
    %11 = vector.shape_cast %10 : vector<128xf32> to vector<1x128xf32>
    %12 = vector.shape_cast %11 : vector<1x128xf32> to vector<1x1x128xf32>
    %c0_10 = arith.constant 0 : index
    %c0_11 = arith.constant 0 : index
    %c0_12 = arith.constant 0 : index
    %13 = vector.load %arg5[%c0_10, %c0_11, %c0_12] : memref<1x1x128xf32, #tpu.memory_space<vmem>>, vector<1x1x128xf32>
    tpu.vector_store %arg5[%c0_10, %c0_11, %c0_12], %12 {strides = array<i32>} : memref<1x1x128xf32, #tpu.memory_space<vmem>>, vector<1x1x128xf32>,
    return
  }
  func.func @transform_0(%arg0: i32) -> (i32, i32) {
    %c0_i32 = arith.constant 0 : i32
    %c0_i32_0 = arith.constant 0 : i32
    return %arg0, %c0_i32 : i32, i32
  }
  func.func @transform_1(%arg0: i32) -> (i32, i32) {
    %c0_i32 = arith.constant 0 : i32
    %c0_i32_0 = arith.constant 0 : i32
    %c0_i32_1 = arith.constant 0 : i32
    return %c0_i32, %c0_i32_0 : i32, i32
  }
  func.func @transform_2(%arg0: i32) -> (i32, i32) {
    %c0_i32 = arith.constant 0 : i32
    %c0_i32_0 = arith.constant 0 : i32
    return %arg0, %c0_i32 : i32, i32
  }
  func.func @transform_3(%arg0: i32) -> (i32, i32, i32) {
    %c0_i32 = arith.constant 0 : i32
    %c0_i32_0 = arith.constant 0 : i32
    %c0_i32_1 = arith.constant 0 : i32
    return %arg0, %c0_i32, %c0_i32_0 : i32, i32, i32
  }
  func.func @transform_4(%arg0: i32) -> (i32, i32, i32) {
    %c0_i32 = arith.constant 0 : i32
    %c0_i32_0 = arith.constant 0 : i32
    %c0_i32_1 = arith.constant 0 : i32
    return %arg0, %c0_i32, %c0_i32_0 : i32, i32, i32
  }
}

module attributes {stable_mosaic.version = 11 : i64} {
  func.func @_bn2_residual_relu_kernel(%arg0: i32, %arg1: memref<512x128xbf16, #tpu.memory_space<vmem>>, %arg2: memref<512x128xbf16, #tpu.memory_space<vmem>>, %arg3: memref<2x1x128xf32, #tpu.memory_space<vmem>>, %arg4: memref<2x1x128xf32, #tpu.memory_space<vmem>>, %arg5: memref<1x128xf32, #tpu.memory_space<vmem>>, %arg6: memref<1x128xf32, #tpu.memory_space<vmem>>, %arg7: memref<512x128xbf16, #tpu.memory_space<vmem>>) attributes {dimension_semantics = [#tpu.dimension_semantics<parallel>], iteration_bounds = array<i64: 1>, scalar_prefetch = 0 : i64, scratch_operands = 0 : i64, tpu.core_type = #tpu.core_type<tc>, window_params = [{transform_indices = @transform_0, window_bounds = array<i64: 512, 128>}, {transform_indices = @transform_1, window_bounds = array<i64: 512, 128>}, {pipeline_mode = #tpu.pipeline_mode<synchronous>, transform_indices = @transform_2, window_bounds = array<i64: 2, 1, 128>}, {pipeline_mode = #tpu.pipeline_mode<synchronous>, transform_indices = @transform_3, window_bounds = array<i64: 2, 1, 128>}, {pipeline_mode = #tpu.pipeline_mode<synchronous>, transform_indices = @transform_4, window_bounds = array<i64: 1, 128>}, {pipeline_mode = #tpu.pipeline_mode<synchronous>, transform_indices = @transform_5, window_bounds = array<i64: 1, 128>}, {transform_indices = @transform_6, window_bounds = array<i64: 512, 128>}]} {
    %c0 = arith.constant 0 : index
    %c0_0 = arith.constant 0 : index
    %c0_1 = arith.constant 0 : index
    %0 = vector.load %arg3[%c0, %c0_0, %c0_1] : memref<2x1x128xf32, #tpu.memory_space<vmem>>, vector<2x1x128xf32>
    %cst = arith.constant dense<0.000000e+00> : vector<1x128xf32>
    %1 = vector.multi_reduction <add>, %0, %cst [0] : vector<2x1x128xf32> to vector<1x128xf32>
    %cst_2 = arith.constant 0.001953125 : f32
    %2 = vector.broadcast %cst_2 : f32 to vector<1x128xf32>
    %3 = arith.mulf %1, %2 : vector<1x128xf32>
    %c0_3 = arith.constant 0 : index
    %c0_4 = arith.constant 0 : index
    %c0_5 = arith.constant 0 : index
    %4 = vector.load %arg4[%c0_3, %c0_4, %c0_5] : memref<2x1x128xf32, #tpu.memory_space<vmem>>, vector<2x1x128xf32>
    %cst_6 = arith.constant dense<0.000000e+00> : vector<1x128xf32>
    %5 = vector.multi_reduction <add>, %4, %cst_6 [0] : vector<2x1x128xf32> to vector<1x128xf32>
    %cst_7 = arith.constant 0.001953125 : f32
    %6 = vector.broadcast %cst_7 : f32 to vector<1x128xf32>
    %7 = arith.mulf %5, %6 : vector<1x128xf32>
    %8 = arith.mulf %3, %3 : vector<1x128xf32>
    %9 = arith.subf %7, %8 : vector<1x128xf32>
    %cst_8 = arith.constant 0.000000e+00 : f32
    %10 = vector.broadcast %cst_8 : f32 to vector<1x128xf32>
    %11 = arith.maximumf %9, %10 : vector<1x128xf32>
    %c0_9 = arith.constant 0 : index
    %c0_10 = arith.constant 0 : index
    %12 = vector.load %arg5[%c0_9, %c0_10] : memref<1x128xf32, #tpu.memory_space<vmem>>, vector<1x128xf32>
    %cst_11 = arith.constant 9.99999974E-6 : f32
    %13 = vector.broadcast %cst_11 : f32 to vector<1x128xf32>
    %14 = arith.addf %11, %13 : vector<1x128xf32>
    %15 = math.rsqrt %14 : vector<1x128xf32>
    %16 = arith.mulf %12, %15 : vector<1x128xf32>
    %c0_12 = arith.constant 0 : index
    %c0_13 = arith.constant 0 : index
    %17 = vector.load %arg6[%c0_12, %c0_13] : memref<1x128xf32, #tpu.memory_space<vmem>>, vector<1x128xf32>
    %18 = arith.mulf %3, %16 : vector<1x128xf32>
    %19 = arith.subf %17, %18 : vector<1x128xf32>
    %c0_14 = arith.constant 0 : index
    %c0_15 = arith.constant 0 : index
    %20 = vector.load %arg1[%c0_14, %c0_15] : memref<512x128xbf16, #tpu.memory_space<vmem>>, vector<512x128xbf16>
    %21 = arith.extf %20 : vector<512x128xbf16> to vector<512x128xf32>
    %c0_16 = arith.constant 0 : index
    %c0_17 = arith.constant 0 : index
    %22 = vector.load %arg2[%c0_16, %c0_17] : memref<512x128xbf16, #tpu.memory_space<vmem>>, vector<512x128xbf16>
    %23 = arith.extf %22 : vector<512x128xbf16> to vector<512x128xf32>
    %24 = vector.broadcast %16 : vector<1x128xf32> to vector<512x128xf32>
    %25 = arith.mulf %21, %24 : vector<512x128xf32>
    %26 = vector.broadcast %19 : vector<1x128xf32> to vector<512x128xf32>
    %27 = arith.addf %25, %26 : vector<512x128xf32>
    %28 = arith.addf %27, %23 : vector<512x128xf32>
    %cst_18 = arith.constant 0.000000e+00 : f32
    %29 = vector.broadcast %cst_18 : f32 to vector<512x128xf32>
    %30 = arith.maximumf %28, %29 : vector<512x128xf32>
    %31 = arith.truncf %30 : vector<512x128xf32> to vector<512x128xbf16>
    %c0_19 = arith.constant 0 : index
    %c0_20 = arith.constant 0 : index
    %32 = vector.load %arg7[%c0_19, %c0_20] : memref<512x128xbf16, #tpu.memory_space<vmem>>, vector<512x128xbf16>
    tpu.vector_store %arg7[%c0_19, %c0_20], %31 {strides = array<i32>} : memref<512x128xbf16, #tpu.memory_space<vmem>>, vector<512x128xbf16>,
    return
  }
  func.func @transform_0(%arg0: i32) -> (i32, i32) {
    %c0_i32 = arith.constant 0 : i32
    %c0_i32_0 = arith.constant 0 : i32
    return %arg0, %c0_i32 : i32, i32
  }
  func.func @transform_1(%arg0: i32) -> (i32, i32) {
    %c0_i32 = arith.constant 0 : i32
    %c0_i32_0 = arith.constant 0 : i32
    return %arg0, %c0_i32 : i32, i32
  }
  func.func @transform_2(%arg0: i32) -> (i32, i32, i32) {
    %c0_i32 = arith.constant 0 : i32
    %c0_i32_0 = arith.constant 0 : i32
    %c0_i32_1 = arith.constant 0 : i32
    %c0_i32_2 = arith.constant 0 : i32
    return %c0_i32, %c0_i32_0, %c0_i32_1 : i32, i32, i32
  }
  func.func @transform_3(%arg0: i32) -> (i32, i32, i32) {
    %c0_i32 = arith.constant 0 : i32
    %c0_i32_0 = arith.constant 0 : i32
    %c0_i32_1 = arith.constant 0 : i32
    %c0_i32_2 = arith.constant 0 : i32
    return %c0_i32, %c0_i32_0, %c0_i32_1 : i32, i32, i32
  }
  func.func @transform_4(%arg0: i32) -> (i32, i32) {
    %c0_i32 = arith.constant 0 : i32
    %c0_i32_0 = arith.constant 0 : i32
    %c0_i32_1 = arith.constant 0 : i32
    return %c0_i32, %c0_i32_0 : i32, i32
  }
  func.func @transform_5(%arg0: i32) -> (i32, i32) {
    %c0_i32 = arith.constant 0 : i32
    %c0_i32_0 = arith.constant 0 : i32
    %c0_i32_1 = arith.constant 0 : i32
    return %c0_i32, %c0_i32_0 : i32, i32
  }
  func.func @transform_6(%arg0: i32) -> (i32, i32) {
    %c0_i32 = arith.constant 0 : i32
    %c0_i32_0 = arith.constant 0 : i32
    return %arg0, %c0_i32 : i32, i32
  }
}

module attributes {stable_mosaic.version = 11 : i64} {
  func.func @_bn1_conv3x3_stats_kernel(%arg0: i32, %arg1: memref<432x128xbf16, #tpu.memory_space<vmem>>, %arg2: memref<3x3x128x128xbf16, #tpu.memory_space<vmem>>, %arg3: memref<1x1x128xf32, #tpu.memory_space<vmem>>, %arg4: memref<1x1x128xf32, #tpu.memory_space<vmem>>, %arg5: memref<1x128xf32, #tpu.memory_space<vmem>>, %arg6: memref<1x128xf32, #tpu.memory_space<vmem>>, %arg7: memref<1x16x16x128xbf16, #tpu.memory_space<vmem>>, %arg8: memref<1x1x128xf32, #tpu.memory_space<vmem>>, %arg9: memref<1x1x128xf32, #tpu.memory_space<vmem>>) attributes {dimension_semantics = [#tpu.dimension_semantics<parallel>], iteration_bounds = array<i64: 2>, scalar_prefetch = 0 : i64, scratch_operands = 0 : i64, tpu.core_type = #tpu.core_type<tc>, window_params = [{transform_indices = @transform_0, window_bounds = array<i64: 432, 128>}, {pipeline_mode = #tpu.pipeline_mode<synchronous>, transform_indices = @transform_1, window_bounds = array<i64: 3, 3, 128, 128>}, {pipeline_mode = #tpu.pipeline_mode<synchronous>, transform_indices = @transform_2, window_bounds = array<i64: 1, 1, 128>}, {pipeline_mode = #tpu.pipeline_mode<synchronous>, transform_indices = @transform_3, window_bounds = array<i64: 1, 1, 128>}, {pipeline_mode = #tpu.pipeline_mode<synchronous>, transform_indices = @transform_4, window_bounds = array<i64: 1, 128>}, {pipeline_mode = #tpu.pipeline_mode<synchronous>, transform_indices = @transform_5, window_bounds = array<i64: 1, 128>}, {transform_indices = @transform_6, window_bounds = array<i64: 1, 16, 16, 128>}, {transform_indices = @transform_7, window_bounds = array<i64: 1, 1, 128>}, {transform_indices = @transform_8, window_bounds = array<i64: 1, 1, 128>}]} {
    %c0 = arith.constant 0 : index
    %c0_0 = arith.constant 0 : index
    %c0_1 = arith.constant 0 : index
    %0 = vector.load %arg3[%c0, %c0_0, %c0_1] : memref<1x1x128xf32, #tpu.memory_space<vmem>>, vector<1x1x128xf32>
    %cst = arith.constant dense<0.000000e+00> : vector<1x128xf32>
    %1 = vector.multi_reduction <add>, %0, %cst [0] : vector<1x1x128xf32> to vector<1x128xf32>
    %cst_2 = arith.constant 0.001953125 : f32
    %2 = vector.broadcast %cst_2 : f32 to vector<1x128xf32>
    %3 = arith.mulf %1, %2 : vector<1x128xf32>
    %c0_3 = arith.constant 0 : index
    %c0_4 = arith.constant 0 : index
    %c0_5 = arith.constant 0 : index
    %4 = vector.load %arg4[%c0_3, %c0_4, %c0_5] : memref<1x1x128xf32, #tpu.memory_space<vmem>>, vector<1x1x128xf32>
    %cst_6 = arith.constant dense<0.000000e+00> : vector<1x128xf32>
    %5 = vector.multi_reduction <add>, %4, %cst_6 [0] : vector<1x1x128xf32> to vector<1x128xf32>
    %cst_7 = arith.constant 0.001953125 : f32
    %6 = vector.broadcast %cst_7 : f32 to vector<1x128xf32>
    %7 = arith.mulf %5, %6 : vector<1x128xf32>
    %8 = arith.mulf %3, %3 : vector<1x128xf32>
    %9 = arith.subf %7, %8 : vector<1x128xf32>
    %cst_8 = arith.constant 0.000000e+00 : f32
    %10 = vector.broadcast %cst_8 : f32 to vector<1x128xf32>
    %11 = arith.maximumf %9, %10 : vector<1x128xf32>
    %c0_9 = arith.constant 0 : index
    %c0_10 = arith.constant 0 : index
    %12 = vector.load %arg5[%c0_9, %c0_10] : memref<1x128xf32, #tpu.memory_space<vmem>>, vector<1x128xf32>
    %cst_11 = arith.constant 9.99999974E-6 : f32
    %13 = vector.broadcast %cst_11 : f32 to vector<1x128xf32>
    %14 = arith.addf %11, %13 : vector<1x128xf32>
    %15 = math.rsqrt %14 : vector<1x128xf32>
    %16 = arith.mulf %12, %15 : vector<1x128xf32>
    %c0_12 = arith.constant 0 : index
    %c0_13 = arith.constant 0 : index
    %17 = vector.load %arg6[%c0_12, %c0_13] : memref<1x128xf32, #tpu.memory_space<vmem>>, vector<1x128xf32>
    %18 = arith.mulf %3, %16 : vector<1x128xf32>
    %19 = arith.subf %17, %18 : vector<1x128xf32>
    %c0_14 = arith.constant 0 : index
    %c0_15 = arith.constant 0 : index
    %20 = vector.load %arg1[%c0_14, %c0_15] : memref<432x128xbf16, #tpu.memory_space<vmem>>, vector<432x128xbf16>
    %21 = arith.extf %20 : vector<432x128xbf16> to vector<432x128xf32>
    %22 = vector.shape_cast %21 : vector<432x128xf32> to vector<18x24x128xf32>
    %23 = vector.shape_cast %16 : vector<1x128xf32> to vector<1x1x128xf32>
    %24 = vector.broadcast %23 : vector<1x1x128xf32> to vector<18x24x128xf32>
    %25 = arith.mulf %22, %24 : vector<18x24x128xf32>
    %26 = vector.shape_cast %19 : vector<1x128xf32> to vector<1x1x128xf32>
    %27 = vector.broadcast %26 : vector<1x1x128xf32> to vector<18x24x128xf32>
    %28 = arith.addf %25, %27 : vector<18x24x128xf32>
    %cst_16 = arith.constant 0.000000e+00 : f32
    %29 = vector.broadcast %cst_16 : f32 to vector<18x24x128xf32>
    %30 = arith.maximumf %28, %29 : vector<18x24x128xf32>
    %31 = tpu.iota {dimensions = array<i32: 0>} : vector<18x24x1xi32>
    %32 = tpu.iota {dimensions = array<i32: 1>} : vector<18x24x1xi32>
    %c1_i32 = arith.constant 1 : i32
    %33 = vector.broadcast %c1_i32 : i32 to vector<18x24x1xi32>
    %34 = arith.cmpi sge, %31, %33 : vector<18x24x1xi32>
    %c16_i32 = arith.constant 16 : i32
    %35 = vector.broadcast %c16_i32 : i32 to vector<18x24x1xi32>
    %36 = arith.cmpi sle, %31, %35 : vector<18x24x1xi32>
    %37 = arith.andi %34, %36 : vector<18x24x1xi1>
    %c1_i32_17 = arith.constant 1 : i32
    %38 = vector.broadcast %c1_i32_17 : i32 to vector<18x24x1xi32>
    %39 = arith.cmpi sge, %32, %38 : vector<18x24x1xi32>
    %40 = arith.andi %37, %39 : vector<18x24x1xi1>
    %c16_i32_18 = arith.constant 16 : i32
    %41 = vector.broadcast %c16_i32_18 : i32 to vector<18x24x1xi32>
    %42 = arith.cmpi sle, %32, %41 : vector<18x24x1xi32>
    %43 = arith.andi %40, %42 : vector<18x24x1xi1>
    %cst_19 = arith.constant 0.000000e+00 : f32
    %44 = vector.shape_cast %43 : vector<18x24x1xi1> to vector<18x24x1xi1>
    %45 = vector.broadcast %44 : vector<18x24x1xi1> to vector<18x24x128xi1>
    %46 = vector.broadcast %cst_19 : f32 to vector<18x24x128xf32>
    %47 = arith.select %45, %30, %46 : vector<18x24x128xi1>, vector<18x24x128xf32>
    %48 = vector.shape_cast %47 : vector<18x24x128xf32> to vector<432x128xf32>
    %49 = arith.truncf %48 : vector<432x128xf32> to vector<432x128xbf16>
    %cst_20 = arith.constant 0.000000e+00 : f32
    %50 = vector.broadcast %cst_20 : f32 to vector<384x128xf32>
    %51 = vector.extract_strided_slice %49 {offsets = [0, 0], sizes = [384, 128], strides = [1, 1]} : vector<432x128xbf16> to vector<384x128xbf16>
    %c0_21 = arith.constant 0 : index
    %c0_22 = arith.constant 0 : index
    %c0_23 = arith.constant 0 : index
    %c0_24 = arith.constant 0 : index
    %52 = vector.load %arg2[%c0_21, %c0_22, %c0_23, %c0_24] : memref<3x3x128x128xbf16, #tpu.memory_space<vmem>>, vector<1x1x128x128xbf16>
    %53 = vector.shape_cast %52 : vector<1x1x128x128xbf16> to vector<128x128xbf16>
    %cst_25 = arith.constant dense<0.000000e+00> : vector<384x128xf32>
    %54 = tpu.matmul %51, %53, %cst_25 {dimension_numbers = #tpu.dot_dimension_numbers<[1], [0], [0], [1], [0, 0, 1, 1], [], []>} : vector<384x128xbf16>, vector<128x128xbf16>, vector<384x128xf32> -> vector<384x128xf32>
    %55 = arith.addf %50, %54 : vector<384x128xf32>
    %56 = vector.extract_strided_slice %49 {offsets = [24, 0], sizes = [384, 128], strides = [1, 1]} : vector<432x128xbf16> to vector<384x128xbf16>
    %c1 = arith.constant 1 : index
    %c0_26 = arith.constant 0 : index
    %c0_27 = arith.constant 0 : index
    %c0_28 = arith.constant 0 : index
    %57 = vector.load %arg2[%c1, %c0_26, %c0_27, %c0_28] : memref<3x3x128x128xbf16, #tpu.memory_space<vmem>>, vector<1x1x128x128xbf16>
    %58 = vector.shape_cast %57 : vector<1x1x128x128xbf16> to vector<128x128xbf16>
    %cst_29 = arith.constant dense<0.000000e+00> : vector<384x128xf32>
    %59 = tpu.matmul %56, %58, %cst_29 {dimension_numbers = #tpu.dot_dimension_numbers<[1], [0], [0], [1], [0, 0, 1, 1], [], []>} : vector<384x128xbf16>, vector<128x128xbf16>, vector<384x128xf32> -> vector<384x128xf32>
    %60 = arith.addf %55, %59 : vector<384x128xf32>
    %61 = vector.extract_strided_slice %49 {offsets = [48, 0], sizes = [384, 128], strides = [1, 1]} : vector<432x128xbf16> to vector<384x128xbf16>
    %c2 = arith.constant 2 : index
    %c0_30 = arith.constant 0 : index
    %c0_31 = arith.constant 0 : index
    %c0_32 = arith.constant 0 : index
    %62 = vector.load %arg2[%c2, %c0_30, %c0_31, %c0_32] : memref<3x3x128x128xbf16, #tpu.memory_space<vmem>>, vector<1x1x128x128xbf16>
    %63 = vector.shape_cast %62 : vector<1x1x128x128xbf16> to vector<128x128xbf16>
    %cst_33 = arith.constant dense<0.000000e+00> : vector<384x128xf32>
    %64 = tpu.matmul %61, %63, %cst_33 {dimension_numbers = #tpu.dot_dimension_numbers<[1], [0], [0], [1], [0, 0, 1, 1], [], []>} : vector<384x128xbf16>, vector<128x128xbf16>, vector<384x128xf32> -> vector<384x128xf32>
    %65 = arith.addf %60, %64 : vector<384x128xf32>
    %66 = vector.extract_strided_slice %49 {offsets = [1, 0], sizes = [431, 128], strides = [1, 1]} : vector<432x128xbf16> to vector<431x128xbf16>
    %67 = vector.extract_strided_slice %49 {offsets = [0, 0], sizes = [1, 128], strides = [1, 1]} : vector<432x128xbf16> to vector<1x128xbf16>
    %68 = tpu.concatenate %66, %67 in 0 : vector<431x128xbf16>, vector<1x128xbf16> -> vector<432x128xbf16>
    %69 = vector.extract_strided_slice %68 {offsets = [0, 0], sizes = [384, 128], strides = [1, 1]} : vector<432x128xbf16> to vector<384x128xbf16>
    %c0_34 = arith.constant 0 : index
    %c1_35 = arith.constant 1 : index
    %c0_36 = arith.constant 0 : index
    %c0_37 = arith.constant 0 : index
    %70 = vector.load %arg2[%c0_34, %c1_35, %c0_36, %c0_37] : memref<3x3x128x128xbf16, #tpu.memory_space<vmem>>, vector<1x1x128x128xbf16>
    %71 = vector.shape_cast %70 : vector<1x1x128x128xbf16> to vector<128x128xbf16>
    %cst_38 = arith.constant dense<0.000000e+00> : vector<384x128xf32>
    %72 = tpu.matmul %69, %71, %cst_38 {dimension_numbers = #tpu.dot_dimension_numbers<[1], [0], [0], [1], [0, 0, 1, 1], [], []>} : vector<384x128xbf16>, vector<128x128xbf16>, vector<384x128xf32> -> vector<384x128xf32>
    %73 = arith.addf %65, %72 : vector<384x128xf32>
    %74 = vector.extract_strided_slice %68 {offsets = [24, 0], sizes = [384, 128], strides = [1, 1]} : vector<432x128xbf16> to vector<384x128xbf16>
    %c1_39 = arith.constant 1 : index
    %c1_40 = arith.constant 1 : index
    %c0_41 = arith.constant 0 : index
    %c0_42 = arith.constant 0 : index
    %75 = vector.load %arg2[%c1_39, %c1_40, %c0_41, %c0_42] : memref<3x3x128x128xbf16, #tpu.memory_space<vmem>>, vector<1x1x128x128xbf16>
    %76 = vector.shape_cast %75 : vector<1x1x128x128xbf16> to vector<128x128xbf16>
    %cst_43 = arith.constant dense<0.000000e+00> : vector<384x128xf32>
    %77 = tpu.matmul %74, %76, %cst_43 {dimension_numbers = #tpu.dot_dimension_numbers<[1], [0], [0], [1], [0, 0, 1, 1], [], []>} : vector<384x128xbf16>, vector<128x128xbf16>, vector<384x128xf32> -> vector<384x128xf32>
    %78 = arith.addf %73, %77 : vector<384x128xf32>
    %79 = vector.extract_strided_slice %68 {offsets = [48, 0], sizes = [384, 128], strides = [1, 1]} : vector<432x128xbf16> to vector<384x128xbf16>
    %c2_44 = arith.constant 2 : index
    %c1_45 = arith.constant 1 : index
    %c0_46 = arith.constant 0 : index
    %c0_47 = arith.constant 0 : index
    %80 = vector.load %arg2[%c2_44, %c1_45, %c0_46, %c0_47] : memref<3x3x128x128xbf16, #tpu.memory_space<vmem>>, vector<1x1x128x128xbf16>
    %81 = vector.shape_cast %80 : vector<1x1x128x128xbf16> to vector<128x128xbf16>
    %cst_48 = arith.constant dense<0.000000e+00> : vector<384x128xf32>
    %82 = tpu.matmul %79, %81, %cst_48 {dimension_numbers = #tpu.dot_dimension_numbers<[1], [0], [0], [1], [0, 0, 1, 1], [], []>} : vector<384x128xbf16>, vector<128x128xbf16>, vector<384x128xf32> -> vector<384x128xf32>
    %83 = arith.addf %78, %82 : vector<384x128xf32>
    %84 = vector.extract_strided_slice %49 {offsets = [2, 0], sizes = [430, 128], strides = [1, 1]} : vector<432x128xbf16> to vector<430x128xbf16>
    %85 = vector.extract_strided_slice %49 {offsets = [0, 0], sizes = [2, 128], strides = [1, 1]} : vector<432x128xbf16> to vector<2x128xbf16>
    %86 = tpu.concatenate %84, %85 in 0 : vector<430x128xbf16>, vector<2x128xbf16> -> vector<432x128xbf16>
    %87 = vector.extract_strided_slice %86 {offsets = [0, 0], sizes = [384, 128], strides = [1, 1]} : vector<432x128xbf16> to vector<384x128xbf16>
    %c0_49 = arith.constant 0 : index
    %c2_50 = arith.constant 2 : index
    %c0_51 = arith.constant 0 : index
    %c0_52 = arith.constant 0 : index
    %88 = vector.load %arg2[%c0_49, %c2_50, %c0_51, %c0_52] : memref<3x3x128x128xbf16, #tpu.memory_space<vmem>>, vector<1x1x128x128xbf16>
    %89 = vector.shape_cast %88 : vector<1x1x128x128xbf16> to vector<128x128xbf16>
    %cst_53 = arith.constant dense<0.000000e+00> : vector<384x128xf32>
    %90 = tpu.matmul %87, %89, %cst_53 {dimension_numbers = #tpu.dot_dimension_numbers<[1], [0], [0], [1], [0, 0, 1, 1], [], []>} : vector<384x128xbf16>, vector<128x128xbf16>, vector<384x128xf32> -> vector<384x128xf32>
    %91 = arith.addf %83, %90 : vector<384x128xf32>
    %92 = vector.extract_strided_slice %86 {offsets = [24, 0], sizes = [384, 128], strides = [1, 1]} : vector<432x128xbf16> to vector<384x128xbf16>
    %c1_54 = arith.constant 1 : index
    %c2_55 = arith.constant 2 : index
    %c0_56 = arith.constant 0 : index
    %c0_57 = arith.constant 0 : index
    %93 = vector.load %arg2[%c1_54, %c2_55, %c0_56, %c0_57] : memref<3x3x128x128xbf16, #tpu.memory_space<vmem>>, vector<1x1x128x128xbf16>
    %94 = vector.shape_cast %93 : vector<1x1x128x128xbf16> to vector<128x128xbf16>
    %cst_58 = arith.constant dense<0.000000e+00> : vector<384x128xf32>
    %95 = tpu.matmul %92, %94, %cst_58 {dimension_numbers = #tpu.dot_dimension_numbers<[1], [0], [0], [1], [0, 0, 1, 1], [], []>} : vector<384x128xbf16>, vector<128x128xbf16>, vector<384x128xf32> -> vector<384x128xf32>
    %96 = arith.addf %91, %95 : vector<384x128xf32>
    %97 = vector.extract_strided_slice %86 {offsets = [48, 0], sizes = [384, 128], strides = [1, 1]} : vector<432x128xbf16> to vector<384x128xbf16>
    %c2_59 = arith.constant 2 : index
    %c2_60 = arith.constant 2 : index
    %c0_61 = arith.constant 0 : index
    %c0_62 = arith.constant 0 : index
    %98 = vector.load %arg2[%c2_59, %c2_60, %c0_61, %c0_62] : memref<3x3x128x128xbf16, #tpu.memory_space<vmem>>, vector<1x1x128x128xbf16>
    %99 = vector.shape_cast %98 : vector<1x1x128x128xbf16> to vector<128x128xbf16>
    %cst_63 = arith.constant dense<0.000000e+00> : vector<384x128xf32>
    %100 = tpu.matmul %97, %99, %cst_63 {dimension_numbers = #tpu.dot_dimension_numbers<[1], [0], [0], [1], [0, 0, 1, 1], [], []>} : vector<384x128xbf16>, vector<128x128xbf16>, vector<384x128xf32> -> vector<384x128xf32>
    %101 = arith.addf %96, %100 : vector<384x128xf32>
    %102 = vector.shape_cast %101 : vector<384x128xf32> to vector<16x24x128xf32>
    %103 = tpu.iota {dimensions = array<i32: 1>} : vector<16x24x1xi32>
    %c16_i32_64 = arith.constant 16 : i32
    %104 = vector.broadcast %c16_i32_64 : i32 to vector<16x24x1xi32>
    %105 = arith.cmpi slt, %103, %104 : vector<16x24x1xi32>
    %cst_65 = arith.constant 0.000000e+00 : f32
    %106 = vector.shape_cast %105 : vector<16x24x1xi1> to vector<16x24x1xi1>
    %107 = vector.broadcast %106 : vector<16x24x1xi1> to vector<16x24x128xi1>
    %108 = vector.broadcast %cst_65 : f32 to vector<16x24x128xf32>
    %109 = arith.select %107, %102, %108 : vector<16x24x128xi1>, vector<16x24x128xf32>
    %110 = vector.shape_cast %109 : vector<16x24x128xf32> to vector<384x128xf32>
    %cst_66 = arith.constant dense<0.000000e+00> : vector<128xf32>
    %111 = vector.multi_reduction <add>, %110, %cst_66 [0] : vector<384x128xf32> to vector<128xf32>
    %112 = vector.shape_cast %111 : vector<128xf32> to vector<1x128xf32>
    %113 = vector.shape_cast %112 : vector<1x128xf32> to vector<1x1x128xf32>
    %c0_67 = arith.constant 0 : index
    %c0_68 = arith.constant 0 : index
    %c0_69 = arith.constant 0 : index
    %114 = vector.load %arg8[%c0_67, %c0_68, %c0_69] : memref<1x1x128xf32, #tpu.memory_space<vmem>>, vector<1x1x128xf32>
    tpu.vector_store %arg8[%c0_67, %c0_68, %c0_69], %113 {strides = array<i32>} : memref<1x1x128xf32, #tpu.memory_space<vmem>>, vector<1x1x128xf32>,
    %115 = arith.mulf %110, %110 : vector<384x128xf32>
    %cst_70 = arith.constant dense<0.000000e+00> : vector<128xf32>
    %116 = vector.multi_reduction <add>, %115, %cst_70 [0] : vector<384x128xf32> to vector<128xf32>
    %117 = vector.shape_cast %116 : vector<128xf32> to vector<1x128xf32>
    %118 = vector.shape_cast %117 : vector<1x128xf32> to vector<1x1x128xf32>
    %c0_71 = arith.constant 0 : index
    %c0_72 = arith.constant 0 : index
    %c0_73 = arith.constant 0 : index
    %119 = vector.load %arg9[%c0_71, %c0_72, %c0_73] : memref<1x1x128xf32, #tpu.memory_space<vmem>>, vector<1x1x128xf32>
    tpu.vector_store %arg9[%c0_71, %c0_72, %c0_73], %118 {strides = array<i32>} : memref<1x1x128xf32, #tpu.memory_space<vmem>>, vector<1x1x128xf32>,
    %120 = vector.extract_strided_slice %102 {offsets = [0, 0, 0], sizes = [16, 16, 128], strides = [1, 1, 1]} : vector<16x24x128xf32> to vector<16x16x128xf32>
    %121 = vector.shape_cast %120 : vector<16x16x128xf32> to vector<1x16x16x128xf32>
    %122 = arith.truncf %121 : vector<1x16x16x128xf32> to vector<1x16x16x128xbf16>
    %c0_74 = arith.constant 0 : index
    %c0_75 = arith.constant 0 : index
    %c0_76 = arith.constant 0 : index
    %c0_77 = arith.constant 0 : index
    %123 = vector.load %arg7[%c0_74, %c0_75, %c0_76, %c0_77] : memref<1x16x16x128xbf16, #tpu.memory_space<vmem>>, vector<1x16x16x128xbf16>
    tpu.vector_store %arg7[%c0_74, %c0_75, %c0_76, %c0_77], %122 {strides = array<i32>} : memref<1x16x16x128xbf16, #tpu.memory_space<vmem>>, vector<1x16x16x128xbf16>,
    return
  }
  func.func @transform_0(%arg0: i32) -> (i32, i32) {
    %c0_i32 = arith.constant 0 : i32
    %c0_i32_0 = arith.constant 0 : i32
    return %arg0, %c0_i32 : i32, i32
  }
  func.func @transform_1(%arg0: i32) -> (i32, i32, i32, i32) {
    %c0_i32 = arith.constant 0 : i32
    %c0_i32_0 = arith.constant 0 : i32
    %c0_i32_1 = arith.constant 0 : i32
    %c0_i32_2 = arith.constant 0 : i32
    %c0_i32_3 = arith.constant 0 : i32
    return %c0_i32, %c0_i32_0, %c0_i32_1, %c0_i32_2 : i32, i32, i32, i32
  }
  func.func @transform_2(%arg0: i32) -> (i32, i32, i32) {
    %c0_i32 = arith.constant 0 : i32
    %c0_i32_0 = arith.constant 0 : i32
    %c0_i32_1 = arith.constant 0 : i32
    %c0_i32_2 = arith.constant 0 : i32
    return %c0_i32, %c0_i32_0, %c0_i32_1 : i32, i32, i32
  }
  func.func @transform_3(%arg0: i32) -> (i32, i32, i32) {
    %c0_i32 = arith.constant 0 : i32
    %c0_i32_0 = arith.constant 0 : i32
    %c0_i32_1 = arith.constant 0 : i32
    %c0_i32_2 = arith.constant 0 : i32
    return %c0_i32, %c0_i32_0, %c0_i32_1 : i32, i32, i32
  }
  func.func @transform_4(%arg0: i32) -> (i32, i32) {
    %c0_i32 = arith.constant 0 : i32
    %c0_i32_0 = arith.constant 0 : i32
    %c0_i32_1 = arith.constant 0 : i32
    return %c0_i32, %c0_i32_0 : i32, i32
  }
  func.func @transform_5(%arg0: i32) -> (i32, i32) {
    %c0_i32 = arith.constant 0 : i32
    %c0_i32_0 = arith.constant 0 : i32
    %c0_i32_1 = arith.constant 0 : i32
    return %c0_i32, %c0_i32_0 : i32, i32
  }
  func.func @transform_6(%arg0: i32) -> (i32, i32, i32, i32) {
    %c0_i32 = arith.constant 0 : i32
    %c0_i32_0 = arith.constant 0 : i32
    %c0_i32_1 = arith.constant 0 : i32
    %c0_i32_2 = arith.constant 0 : i32
    return %arg0, %c0_i32, %c0_i32_0, %c0_i32_1 : i32, i32, i32, i32
  }
  func.func @transform_7(%arg0: i32) -> (i32, i32, i32) {
    %c0_i32 = arith.constant 0 : i32
    %c0_i32_0 = arith.constant 0 : i32
    %c0_i32_1 = arith.constant 0 : i32
    return %arg0, %c0_i32, %c0_i32_0 : i32, i32, i32
  }
  func.func @transform_8(%arg0: i32) -> (i32, i32, i32) {
    %c0_i32 = arith.constant 0 : i32
    %c0_i32_0 = arith.constant 0 : i32
    %c0_i32_1 = arith.constant 0 : i32
    return %arg0, %c0_i32, %c0_i32_0 : i32, i32, i32
  }
}

</mosaic_0001>

<llo_original>
// kernel: basic_block_nchw.5
$region0: #{basic_block_nchw.5}
  #allocation0 [shape = 'u32[]', space=smem, size = 0x4, offset = 0x4, fixed_abs, tag = 'smem constant byte address 0x4 - core index']
  #allocation1 [shape = 'u32[72,128]{1,0:T(1,128)}', space=vmem, size = 0x9000, scoped, tag = 'internal scratch']
  %s0 = inlined_call_operand.vmem [shape: bf16[512,128], index: 0, kind: input, shape index: {}]
  %s1 = inlined_call_operand.vmem [shape: bf16[512,128], index: 1, kind: input, shape index: {}]
  %s2 = inlined_call_operand.vmem [shape: f32[2,1,128], index: 2, kind: input, shape index: {}]
  %s3 = inlined_call_operand.vmem [shape: f32[2,1,128], index: 3, kind: input, shape index: {}]
  %s4 = inlined_call_operand.vmem [shape: f32[1,128], index: 4, kind: input, shape index: {}]
  %s5 = inlined_call_operand.vmem [shape: f32[1,128], index: 5, kind: input, shape index: {}]
  %s6 = inlined_call_operand.vmem [shape: bf16[512,128], index: 6, kind: output, shape index: {}]
  %s7 = sld [smem:[#allocation0]]
  $region34: #{basic_block_nchw.5} parent=0
    _
  %s9 = ssub.s32 1, %s7
  %s10 = scalar_select 0, %s9, %s7
  // Predicated region
  $region2: #{basic_block_nchw.5} parent=0 // pred_check
    _
  $region3: #{basic_block_nchw.5} parent=0 // pred_check_branch
    %12 = sbr.rel (0) target = $region5
  $region4: #{basic_block_nchw.5} parent=0 // pred_region
    _
  $region5: #{basic_block_nchw.5} parent=0 // pred_fallthru
    _
  // Predicated region
  $region6: #{basic_block_nchw.5} parent=0 // pred_check
    _
  $region7: #{basic_block_nchw.5} parent=0 // pred_check_branch
    %14 = sbr.rel (0) target = $region9
  $region8: #{basic_block_nchw.5} parent=0 // pred_region
    _
  $region9: #{basic_block_nchw.5} parent=0 // pred_fallthru
    _
  // Predicated region
  $region10: #{basic_block_nchw.5} parent=0 // pred_check
    _
  $region11: #{basic_block_nchw.5} parent=0 // pred_check_branch
    %16 = sbr.rel (0) target = $region13
  $region12: #{basic_block_nchw.5} parent=0 // pred_region
    _
  $region13: #{basic_block_nchw.5} parent=0 // pred_fallthru
    _
  // Predicated region
  $region14: #{basic_block_nchw.5} parent=0 // pred_check
    _
  $region15: #{basic_block_nchw.5} parent=0 // pred_check_branch
    %18 = sbr.rel (0) target = $region17
  $region16: #{basic_block_nchw.5} parent=0 // pred_region
    _
  $region17: #{basic_block_nchw.5} parent=0 // pred_fallthru
    _
  // Predicated region
  $region18: #{basic_block_nchw.5} parent=0 // pred_check
    _
  $region19: #{basic_block_nchw.5} parent=0 // pred_check_branch
    %20 = sbr.rel (0) target = $region21
  $region20: #{basic_block_nchw.5} parent=0 // pred_region
    _
  $region21: #{basic_block_nchw.5} parent=0 // pred_fallthru
    _
  // Predicated region
  $region22: #{basic_block_nchw.5} parent=0 // pred_check
    _
  $region23: #{basic_block_nchw.5} parent=0 // pred_check_branch
    %22 = sbr.rel (0) target = $region25
  $region24: #{basic_block_nchw.5} parent=0 // pred_region
    _
  $region25: #{basic_block_nchw.5} parent=0 // pred_fallthru
    _
  %v23 = vld [vmem:[%s2] sm:$0x1]
  %v24 = vld [vmem:[%s2 + $0x1] sm:$0x1]
  %vm25 = vcmask 1040384
  %v26 = vsel %vm25, %v23, 0.0
  %v27 = vsel %vm25, %v24, 0.0
  %v28 = vadd.f32 %v26, %v27
  %v29 = vmul.f32 %v28, 0.001953125
  %v30 = vld [vmem:[%s3] sm:$0x1]
  %v31 = vld [vmem:[%s3 + $0x1] sm:$0x1]
  %v32 = vsel %vm25, %v30, 0.0
  %v33 = vsel %vm25, %v31, 0.0
  %v34 = vadd.f32 %v32, %v33
  %v35 = vmul.f32 %v34, 0.001953125
  %v36 = vmul.f32 %v29, %v29
  %v37 = vsub.f32 %v35, %v36
  %v38 = vmax.f32 %v37, 0.0
  %v39 = vld [vmem:[%s4] sm:$0x1]
  %v40 = vadd.f32 %v38, 1e-05
  %v41 = vrsqrt.pop %v40
  %v42 = vmul.f32 %v41, %v40
  %v43 = vmul.f32 %v42, %v41
  %v44 = vmul.f32 0.5, %v43
  %v45 = vsub.f32 1.5, %v44
  %v46 = vmul.f32 %v41, %v45
  %vm47 = vweird.f32 %v40
  %vm48 = vweird.f32 %v41
  %vm49 = vmor %vm47, %vm48
  %v50 = vsel %vm49, %v41, %v46
  %v51 = vmul.f32 %v39, %v50
  %v52 = vld [vmem:[%s5] sm:$0x1]
  %v53 = vmul.f32 %v29, %v51
  %v54 = vsub.f32 %v52, %v53
  %v55 = vld [vmem:[%s0] sm:$0xf]
  %v56 = vld [vmem:[%s0 + $0x4] sm:$0xf]
  %v57 = vld [vmem:[%s0 + $0x8] sm:$0xf]
  %v58 = vld [vmem:[%s0 + $0xc] sm:$0xf]
  %v59 = vld [vmem:[%s0 + $0x10] sm:$0xf]
  %v60 = vld [vmem:[%s0 + $0x14] sm:$0xf]
  %v61 = vld [vmem:[%s0 + $0x18] sm:$0xf]
  %v62 = vld [vmem:[%s0 + $0x1c] sm:$0xf]
  %v63 = vld [vmem:[%s0 + $0x20] sm:$0xf]
  %v64 = vld [vmem:[%s0 + $0x24] sm:$0xf]
  %v65 = vld [vmem:[%s0 + $0x28] sm:$0xf]
  %v66 = vld [vmem:[%s0 + $0x2c] sm:$0xf]
  %v67 = vld [vmem:[%s0 + $0x30] sm:$0xf]
  %v68 = vld [vmem:[%s0 + $0x34] sm:$0xf]
  %v69 = vld [vmem:[%s0 + $0x38] sm:$0xf]
  %v70 = vld [vmem:[%s0 + $0x3c] sm:$0xf]
  %v71 = vld [vmem:[%s0 + $0x40] sm:$0xf]
  %v72 = vld [vmem:[%s0 + $0x44] sm:$0xf]
  %v73 = vld [vmem:[%s0 + $0x48] sm:$0xf]
  %v74 = vld [vmem:[%s0 + $0x4c] sm:$0xf]
  %v75 = vld [vmem:[%s0 + $0x50] sm:$0xf]
  %v76 = vld [vmem:[%s0 + $0x54] sm:$0xf]
  %v77 = vld [vmem:[%s0 + $0x58] sm:$0xf]
  %v78 = vld [vmem:[%s0 + $0x5c] sm:$0xf]
  %v79 = vld [vmem:[%s0 + $0x60] sm:$0xf]
  %v80 = vld [vmem:[%s0 + $0x64] sm:$0xf]
  %v81 = vld [vmem:[%s0 + $0x68] sm:$0xf]
  %v82 = vld [vmem:[%s0 + $0x6c] sm:$0xf]
  %v83 = vld [vmem:[%s0 + $0x70] sm:$0xf]
  %v84 = vld [vmem:[%s0 + $0x74] sm:$0xf]
  %v85 = vld [vmem:[%s0 + $0x78] sm:$0xf]
  %v86 = vld [vmem:[%s0 + $0x7c] sm:$0xf]
  %v87 = vld [vmem:[%s0 + $0x80] sm:$0xf]
  %v88 = vld [vmem:[%s0 + $0x84] sm:$0xf]
  %v89 = vld [vmem:[%s0 + $0x88] sm:$0xf]
  %v90 = vld [vmem:[%s0 + $0x8c] sm:$0xf]
  %v91 = vld [vmem:[%s0 + $0x90] sm:$0xf]
  %v92 = vld [vmem:[%s0 + $0x94] sm:$0xf]
  %v93 = vld [vmem:[%s0 + $0x98] sm:$0xf]
  %v94 = vld [vmem:[%s0 + $0x9c] sm:$0xf]
  %v95 = vld [vmem:[%s0 + $0xa0] sm:$0xf]
  %v96 = vld [vmem:[%s0 + $0xa4] sm:$0xf]
  %v97 = vld [vmem:[%s0 + $0xa8] sm:$0xf]
  %v98 = vld [vmem:[%s0 + $0xac] sm:$0xf]
  %v99 = vld [vmem:[%s0 + $0xb0] sm:$0xf]
  %v100 = vld [vmem:[%s0 + $0xb4] sm:$0xf]
  %v101 = vld [vmem:[%s0 + $0xb8] sm:$0xf]
  %v102 = vld [vmem:[%s0 + $0xbc] sm:$0xf]
  %v103 = vld [vmem:[%s0 + $0xc0] sm:$0xf]
  %v104 = vld [vmem:[%s0 + $0xc4] sm:$0xf]
  %v105 = vld [vmem:[%s0 + $0xc8] sm:$0xf]
  %v106 = vld [vmem:[%s0 + $0xcc] sm:$0xf]
  %v107 = vld [vmem:[%s0 + $0xd0] sm:$0xf]
  %v108 = vld [vmem:[%s0 + $0xd4] sm:$0xf]
  %v109 = vld [vmem:[%s0 + $0xd8] sm:$0xf]
  %v110 = vld [vmem:[%s0 + $0xdc] sm:$0xf]
  %v111 = vld [vmem:[%s0 + $0xe0] sm:$0xf]
  %v112 = vld [vmem:[%s0 + $0xe4] sm:$0xf]
  %v113 = vld [vmem:[%s0 + $0xe8] sm:$0xf]
  %v114 = vld [vmem:[%s0 + $0xec] sm:$0xf]
  %v115 = vld [vmem:[%s0 + $0xf0] sm:$0xf]
  %v116 = vld [vmem:[%s0 + $0xf4] sm:$0xf]
  %v117 = vld [vmem:[%s0 + $0xf8] sm:$0xf]
  %v118 = vld [vmem:[%s0 + $0xfc] sm:$0xf]
  %v119 = vunpack.c.l.bf16 %v55
  %v120 = vunpack.c.l.bf16 %v56
  %v121 = vunpack.c.l.bf16 %v57
  %v122 = vunpack.c.l.bf16 %v58
  %v123 = vunpack.c.l.bf16 %v59
  %v124 = vunpack.c.l.bf16 %v60
  %v125 = vunpack.c.l.bf16 %v61
  %v126 = vunpack.c.l.bf16 %v62
  %v127 = vunpack.c.l.bf16 %v63
  %v128 = vunpack.c.l.bf16 %v64
  %v129 = vunpack.c.l.bf16 %v65
  %v130 = vunpack.c.l.bf16 %v66
  %v131 = vunpack.c.l.bf16 %v67
  %v132 = vunpack.c.l.bf16 %v68
  %v133 = vunpack.c.l.bf16 %v69
  %v134 = vunpack.c.l.bf16 %v70
  %v135 = vunpack.c.l.bf16 %v71
  %v136 = vunpack.c.l.bf16 %v72
  %v137 = vunpack.c.l.bf16 %v73
  %v138 = vunpack.c.l.bf16 %v74
  %v139 = vunpack.c.l.bf16 %v75
  %v140 = vunpack.c.l.bf16 %v76
  %v141 = vunpack.c.l.bf16 %v77
  %v142 = vunpack.c.l.bf16 %v78
  %v143 = vunpack.c.l.bf16 %v79
  %v144 = vunpack.c.l.bf16 %v80
  %v145 = vunpack.c.l.bf16 %v81
  %v146 = vunpack.c.l.bf16 %v82
  %v147 = vunpack.c.l.bf16 %v83
  %v148 = vunpack.c.l.bf16 %v84
  %v149 = vunpack.c.l.bf16 %v85
  %v150 = vunpack.c.l.bf16 %v86
  %v151 = vunpack.c.l.bf16 %v87
  %v152 = vunpack.c.l.bf16 %v88
  %v153 = vunpack.c.l.bf16 %v89
  %v154 = vunpack.c.l.bf16 %v90
  %v155 = vunpack.c.l.bf16 %v91
  %v156 = vunpack.c.l.bf16 %v92
  %v157 = vunpack.c.l.bf16 %v93
  %v158 = vunpack.c.l.bf16 %v94
  %v159 = vunpack.c.l.bf16 %v95
  %v160 = vunpack.c.l.bf16 %v96
  %v161 = vunpack.c.l.bf16 %v97
  %v162 = vunpack.c.l.bf16 %v98
  %v163 = vunpack.c.l.bf16 %v99
  %v164 = vunpack.c.l.bf16 %v100
  %v165 = vunpack.c.l.bf16 %v101
  %v166 = vunpack.c.l.bf16 %v102
  %v167 = vunpack.c.l.bf16 %v103
  %v168 = vunpack.c.l.bf16 %v104
  %v169 = vunpack.c.l.bf16 %v105
  %v170 = vunpack.c.l.bf16 %v106
  %v171 = vunpack.c.l.bf16 %v107
  %v172 = vunpack.c.l.bf16 %v108
  %v173 = vunpack.c.l.bf16 %v109
  %v174 = vunpack.c.l.bf16 %v110
  %v175 = vunpack.c.l.bf16 %v111
  %v176 = vunpack.c.l.bf16 %v112
  %v177 = vunpack.c.l.bf16 %v113
  %v178 = vunpack.c.l.bf16 %v114
  %v179 = vunpack.c.l.bf16 %v115
  %v180 = vunpack.c.l.bf16 %v116
  %v181 = vunpack.c.l.bf16 %v117
  %v182 = vunpack.c.l.bf16 %v118
  %v183 = vld [vmem:[%s1] sm:$0xf]
  %v184 = vld [vmem:[%s1 + $0x4] sm:$0xf]
  %v185 = vld [vmem:[%s1 + $0x8] sm:$0xf]
  %v186 = vld [vmem:[%s1 + $0xc] sm:$0xf]
  %v187 = vld [vmem:[%s1 + $0x10] sm:$0xf]
  %v188 = vld [vmem:[%s1 + $0x14] sm:$0xf]
  %v189 = vld [vmem:[%s1 + $0x18] sm:$0xf]
  %v190 = vld [vmem:[%s1 + $0x1c] sm:$0xf]
  %v191 = vld [vmem:[%s1 + $0x20] sm:$0xf]
  %v192 = vld [vmem:[%s1 + $0x24] sm:$0xf]
  %v193 = vld [vmem:[%s1 + $0x28] sm:$0xf]
  %v194 = vld [vmem:[%s1 + $0x2c] sm:$0xf]
  %v195 = vld [vmem:[%s1 + $0x30] sm:$0xf]
  %v196 = vld [vmem:[%s1 + $0x34] sm:$0xf]
  %v197 = vld [vmem:[%s1 + $0x38] sm:$0xf]
  %v198 = vld [vmem:[%s1 + $0x3c] sm:$0xf]
  %v199 = vld [vmem:[%s1 + $0x40] sm:$0xf]
  %v200 = vld [vmem:[%s1 + $0x44] sm:$0xf]
  %v201 = vld [vmem:[%s1 + $0x48] sm:$0xf]
  %v202 = vld [vmem:[%s1 + $0x4c] sm:$0xf]
  %v203 = vld [vmem:[%s1 + $0x50] sm:$0xf]
  %v204 = vld [vmem:[%s1 + $0x54] sm:$0xf]
  %v205 = vld [vmem:[%s1 + $0x58] sm:$0xf]
  %v206 = vld [vmem:[%s1 + $0x5c] sm:$0xf]
  %v207 = vld [vmem:[%s1 + $0x60] sm:$0xf]
  %v208 = vld [vmem:[%s1 + $0x64] sm:$0xf]
  %v209 = vld [vmem:[%s1 + $0x68] sm:$0xf]
  %v210 = vld [vmem:[%s1 + $0x6c] sm:$0xf]
  %v211 = vld [vmem:[%s1 + $0x70] sm:$0xf]
  %v212 = vld [vmem:[%s1 + $0x74] sm:$0xf]
  %v213 = vld [vmem:[%s1 + $0x78] sm:$0xf]
  %v214 = vld [vmem:[%s1 + $0x7c] sm:$0xf]
  %v215 = vld [vmem:[%s1 + $0x80] sm:$0xf]
  %v216 = vld [vmem:[%s1 + $0x84] sm:$0xf]
  %v217 = vld [vmem:[%s1 + $0x88] sm:$0xf]
  %v218 = vld [vmem:[%s1 + $0x8c] sm:$0xf]
  %v219 = vld [vmem:[%s1 + $0x90] sm:$0xf]
  %v220 = vld [vmem:[%s1 + $0x94] sm:$0xf]
  %v221 = vld [vmem:[%s1 + $0x98] sm:$0xf]
  %v222 = vld [vmem:[%s1 + $0x9c] sm:$0xf]
  %v223 = vld [vmem:[%s1 + $0xa0] sm:$0xf]
  %v224 = vld [vmem:[%s1 + $0xa4] sm:$0xf]
  %v225 = vld [vmem:[%s1 + $0xa8] sm:$0xf]
  %v226 = vld [vmem:[%s1 + $0xac] sm:$0xf]
  %v227 = vld [vmem:[%s1 + $0xb0] sm:$0xf]
  %v228 = vld [vmem:[%s1 + $0xb4] sm:$0xf]
  %v229 = vld [vmem:[%s1 + $0xb8] sm:$0xf]
  %v230 = vld [vmem:[%s1 + $0xbc] sm:$0xf]
  %v231 = vld [vmem:[%s1 + $0xc0] sm:$0xf]
  %v232 = vld [vmem:[%s1 + $0xc4] sm:$0xf]
  %v233 = vld [vmem:[%s1 + $0xc8] sm:$0xf]
  %v234 = vld [vmem:[%s1 + $0xcc] sm:$0xf]
  %v235 = vld [vmem:[%s1 + $0xd0] sm:$0xf]
  %v236 = vld [vmem:[%s1 + $0xd4] sm:$0xf]
  %v237 = vld [vmem:[%s1 + $0xd8] sm:$0xf]
  %v238 = vld [vmem:[%s1 + $0xdc] sm:$0xf]
  %v239 = vld [vmem:[%s1 + $0xe0] sm:$0xf]
  %v240 = vld [vmem:[%s1 + $0xe4] sm:$0xf]
  %v241 = vld [vmem:[%s1 + $0xe8] sm:$0xf]
  %v242 = vld [vmem:[%s1 + $0xec] sm:$0xf]
  %v243 = vld [vmem:[%s1 + $0xf0] sm:$0xf]
  %v244 = vld [vmem:[%s1 + $0xf4] sm:$0xf]
  %v245 = vld [vmem:[%s1 + $0xf8] sm:$0xf]
  %v246 = vld [vmem:[%s1 + $0xfc] sm:$0xf]
  %v247 = vunpack.c.l.bf16 %v183
  %v248 = vunpack.c.l.bf16 %v184
  %v249 = vunpack.c.l.bf16 %v185
  %v250 = vunpack.c.l.bf16 %v186
  %v251 = vunpack.c.l.bf16 %v187
  %v252 = vunpack.c.l.bf16 %v188
  %v253 = vunpack.c.l.bf16 %v189
  %v254 = vunpack.c.l.bf16 %v190
  %v255 = vunpack.c.l.bf16 %v191
  %v256 = vunpack.c.l.bf16 %v192
  %v257 = vunpack.c.l.bf16 %v193
  %v258 = vunpack.c.l.bf16 %v194
  %v259 = vunpack.c.l.bf16 %v195
  %v260 = vunpack.c.l.bf16 %v196
  %v261 = vunpack.c.l.bf16 %v197
  %v262 = vunpack.c.l.bf16 %v198
  %v263 = vunpack.c.l.bf16 %v199
  %v264 = vunpack.c.l.bf16 %v200
  %v265 = vunpack.c.l.bf16 %v201
  %v266 = vunpack.c.l.bf16 %v202
  %v267 = vunpack.c.l.bf16 %v203
  %v268 = vunpack.c.l.bf16 %v204
  %v269 = vunpack.c.l.bf16 %v205
  %v270 = vunpack.c.l.bf16 %v206
  %v271 = vunpack.c.l.bf16 %v207
  %v272 = vunpack.c.l.bf16 %v208
  %v273 = vunpack.c.l.bf16 %v209
  %v274 = vunpack.c.l.bf16 %v210
  %v275 = vunpack.c.l.bf16 %v211
  %v276 = vunpack.c.l.bf16 %v212
  %v277 = vunpack.c.l.bf16 %v213
  %v278 = vunpack.c.l.bf16 %v214
  %v279 = vunpack.c.l.bf16 %v215
  %v280 = vunpack.c.l.bf16 %v216
  %v281 = vunpack.c.l.bf16 %v217
  %v282 = vunpack.c.l.bf16 %v218
  %v283 = vunpack.c.l.bf16 %v219
  %v284 = vunpack.c.l.bf16 %v220
  %v285 = vunpack.c.l.bf16 %v221
  %v286 = vunpack.c.l.bf16 %v222
  %v287 = vunpack.c.l.bf16 %v223
  %v288 = vunpack.c.l.bf16 %v224
  %v289 = vunpack.c.l.bf16 %v225
  %v290 = vunpack.c.l.bf16 %v226
  %v291 = vunpack.c.l.bf16 %v227
  %v292 = vunpack.c.l.bf16 %v228
  %v293 = vunpack.c.l.bf16 %v229
  %v294 = vunpack.c.l.bf16 %v230
  %v295 = vunpack.c.l.bf16 %v231
  %v296 = vunpack.c.l.bf16 %v232
  %v297 = vunpack.c.l.bf16 %v233
  %v298 = vunpack.c.l.bf16 %v234
  %v299 = vunpack.c.l.bf16 %v235
  %v300 = vunpack.c.l.bf16 %v236
  %v301 = vunpack.c.l.bf16 %v237
  %v302 = vunpack.c.l.bf16 %v238
  %v303 = vunpack.c.l.bf16 %v239
  %v304 = vunpack.c.l.bf16 %v240
  %v305 = vunpack.c.l.bf16 %v241
  %v306 = vunpack.c.l.bf16 %v242
  %v307 = vunpack.c.l.bf16 %v243
  %v308 = vunpack.c.l.bf16 %v244
  %v309 = vunpack.c.l.bf16 %v245
  %v310 = vunpack.c.l.bf16 %v246
  %v312 = vperm.slane %v51, 0
  %v314 = vmul.f32 %v119, %v312
  %v315 = vmul.f32 %v120, %v312
  %v316 = vmul.f32 %v121, %v312
  %v317 = vmul.f32 %v122, %v312
  %v318 = vmul.f32 %v123, %v312
  %v319 = vmul.f32 %v124, %v312
  %v320 = vmul.f32 %v125, %v312
  %v321 = vmul.f32 %v126, %v312
  %v322 = vmul.f32 %v127, %v312
  %v323 = vmul.f32 %v128, %v312
  %v324 = vmul.f32 %v129, %v312
  %v325 = vmul.f32 %v130, %v312
  %v326 = vmul.f32 %v131, %v312
  %v327 = vmul.f32 %v132, %v312
  %v328 = vmul.f32 %v133, %v312
  %v329 = vmul.f32 %v134, %v312
  %v330 = vmul.f32 %v135, %v312
  %v331 = vmul.f32 %v136, %v312
  %v332 = vmul.f32 %v137, %v312
  %v333 = vmul.f32 %v138, %v312
  %v334 = vmul.f32 %v139, %v312
  %v335 = vmul.f32 %v140, %v312
  %v336 = vmul.f32 %v141, %v312
  %v337 = vmul.f32 %v142, %v312
  %v338 = vmul.f32 %v143, %v312
  %v339 = vmul.f32 %v144, %v312
  %v340 = vmul.f32 %v145, %v312
  %v341 = vmul.f32 %v146, %v312
  %v342 = vmul.f32 %v147, %v312
  %v343 = vmul.f32 %v148, %v312
  %v344 = vmul.f32 %v149, %v312
  %v345 = vmul.f32 %v150, %v312
  %v346 = vmul.f32 %v151, %v312
  %v347 = vmul.f32 %v152, %v312
  %v348 = vmul.f32 %v153, %v312
  %v349 = vmul.f32 %v154, %v312
  %v350 = vmul.f32 %v155, %v312
  %v351 = vmul.f32 %v156, %v312
  %v352 = vmul.f32 %v157, %v312
  %v353 = vmul.f32 %v158, %v312
  %v354 = vmul.f32 %v159, %v312
  %v355 = vmul.f32 %v160, %v312
  %v356 = vmul.f32 %v161, %v312
  %v357 = vmul.f32 %v162, %v312
  %v358 = vmul.f32 %v163, %v312
  %v359 = vmul.f32 %v164, %v312
  %v360 = vmul.f32 %v165, %v312
  %v361 = vmul.f32 %v166, %v312
  %v362 = vmul.f32 %v167, %v312
  %v363 = vmul.f32 %v168, %v312
  %v364 = vmul.f32 %v169, %v312
  %v365 = vmul.f32 %v170, %v312
  %v366 = vmul.f32 %v171, %v312
  %v367 = vmul.f32 %v172, %v312
  %v368 = vmul.f32 %v173, %v312
  %v369 = vmul.f32 %v174, %v312
  %v370 = vmul.f32 %v175, %v312
  %v371 = vmul.f32 %v176, %v312
  %v372 = vmul.f32 %v177, %v312
  %v373 = vmul.f32 %v178, %v312
  %v374 = vmul.f32 %v179, %v312
  %v375 = vmul.f32 %v180, %v312
  %v376 = vmul.f32 %v181, %v312
  %v377 = vmul.f32 %v182, %v312
  %v379 = vperm.slane %v54, 0
  %v381 = vadd.f32 %v314, %v379
  %v382 = vadd.f32 %v315, %v379
  %v383 = vadd.f32 %v316, %v379
  %v384 = vadd.f32 %v317, %v379
  %v385 = vadd.f32 %v318, %v379
  %v386 = vadd.f32 %v319, %v379
  %v387 = vadd.f32 %v320, %v379
  %v388 = vadd.f32 %v321, %v379
  %v389 = vadd.f32 %v322, %v379
  %v390 = vadd.f32 %v323, %v379
  %v391 = vadd.f32 %v324, %v379
  %v392 = vadd.f32 %v325, %v379
  %v393 = vadd.f32 %v326, %v379
  %v394 = vadd.f32 %v327, %v379
  %v395 = vadd.f32 %v328, %v379
  %v396 = vadd.f32 %v329, %v379
  %v397 = vadd.f32 %v330, %v379
  %v398 = vadd.f32 %v331, %v379
  %v399 = vadd.f32 %v332, %v379
  %v400 = vadd.f32 %v333, %v379
  %v401 = vadd.f32 %v334, %v379
  %v402 = vadd.f32 %v335, %v379
  %v403 = vadd.f32 %v336, %v379
  %v404 = vadd.f32 %v337, %v379
  %v405 = vadd.f32 %v338, %v379
  %v406 = vadd.f32 %v339, %v379
  %v407 = vadd.f32 %v340, %v379
  %v408 = vadd.f32 %v341, %v379
  %v409 = vadd.f32 %v342, %v379
  %v410 = vadd.f32 %v343, %v379
  %v411 = vadd.f32 %v344, %v379
  %v412 = vadd.f32 %v345, %v379
  %v413 = vadd.f32 %v346, %v379
  %v414 = vadd.f32 %v347, %v379
  %v415 = vadd.f32 %v348, %v379
  %v416 = vadd.f32 %v349, %v379
  %v417 = vadd.f32 %v350, %v379
  %v418 = vadd.f32 %v351, %v379
  %v419 = vadd.f32 %v352, %v379
  %v420 = vadd.f32 %v353, %v379
  %v421 = vadd.f32 %v354, %v379
  %v422 = vadd.f32 %v355, %v379
  %v423 = vadd.f32 %v356, %v379
  %v424 = vadd.f32 %v357, %v379
  %v425 = vadd.f32 %v358, %v379
  %v426 = vadd.f32 %v359, %v379
  %v427 = vadd.f32 %v360, %v379
  %v428 = vadd.f32 %v361, %v379
  %v429 = vadd.f32 %v362, %v379
  %v430 = vadd.f32 %v363, %v379
  %v431 = vadd.f32 %v364, %v379
  %v432 = vadd.f32 %v365, %v379
  %v433 = vadd.f32 %v366, %v379
  %v434 = vadd.f32 %v367, %v379
  %v435 = vadd.f32 %v368, %v379
  %v436 = vadd.f32 %v369, %v379
  %v437 = vadd.f32 %v370, %v379
  %v438 = vadd.f32 %v371, %v379
  %v439 = vadd.f32 %v372, %v379
  %v440 = vadd.f32 %v373, %v379
  %v441 = vadd.f32 %v374, %v379
  %v442 = vadd.f32 %v375, %v379
  %v443 = vadd.f32 %v376, %v379
  %v444 = vadd.f32 %v377, %v379
  %v445 = vadd.f32 %v381, %v247
  %v446 = vadd.f32 %v382, %v248
  %v447 = vadd.f32 %v383, %v249
  %v448 = vadd.f32 %v384, %v250
  %v449 = vadd.f32 %v385, %v251
  %v450 = vadd.f32 %v386, %v252
  %v451 = vadd.f32 %v387, %v253
  %v452 = vadd.f32 %v388, %v254
  %v453 = vadd.f32 %v389, %v255
  %v454 = vadd.f32 %v390, %v256
  %v455 = vadd.f32 %v391, %v257
  %v456 = vadd.f32 %v392, %v258
  %v457 = vadd.f32 %v393, %v259
  %v458 = vadd.f32 %v394, %v260
  %v459 = vadd.f32 %v395, %v261
  %v460 = vadd.f32 %v396, %v262
  %v461 = vadd.f32 %v397, %v263
  %v462 = vadd.f32 %v398, %v264
  %v463 = vadd.f32 %v399, %v265
  %v464 = vadd.f32 %v400, %v266
  %v465 = vadd.f32 %v401, %v267
  %v466 = vadd.f32 %v402, %v268
  %v467 = vadd.f32 %v403, %v269
  %v468 = vadd.f32 %v404, %v270
  %v469 = vadd.f32 %v405, %v271
  %v470 = vadd.f32 %v406, %v272
  %v471 = vadd.f32 %v407, %v273
  %v472 = vadd.f32 %v408, %v274
  %v473 = vadd.f32 %v409, %v275
  %v474 = vadd.f32 %v410, %v276
  %v475 = vadd.f32 %v411, %v277
  %v476 = vadd.f32 %v412, %v278
  %v477 = vadd.f32 %v413, %v279
  %v478 = vadd.f32 %v414, %v280
  %v479 = vadd.f32 %v415, %v281
  %v480 = vadd.f32 %v416, %v282
  %v481 = vadd.f32 %v417, %v283
  %v482 = vadd.f32 %v418, %v284
  %v483 = vadd.f32 %v419, %v285
  %v484 = vadd.f32 %v420, %v286
  %v485 = vadd.f32 %v421, %v287
  %v486 = vadd.f32 %v422, %v288
  %v487 = vadd.f32 %v423, %v289
  %v488 = vadd.f32 %v424, %v290
  %v489 = vadd.f32 %v425, %v291
  %v490 = vadd.f32 %v426, %v292
  %v491 = vadd.f32 %v427, %v293
  %v492 = vadd.f32 %v428, %v294
  %v493 = vadd.f32 %v429, %v295
  %v494 = vadd.f32 %v430, %v296
  %v495 = vadd.f32 %v431, %v297
  %v496 = vadd.f32 %v432, %v298
  %v497 = vadd.f32 %v433, %v299
  %v498 = vadd.f32 %v434, %v300
  %v499 = vadd.f32 %v435, %v301
  %v500 = vadd.f32 %v436, %v302
  %v501 = vadd.f32 %v437, %v303
  %v502 = vadd.f32 %v438, %v304
  %v503 = vadd.f32 %v439, %v305
  %v504 = vadd.f32 %v440, %v306
  %v505 = vadd.f32 %v441, %v307
  %v506 = vadd.f32 %v442, %v308
  %v507 = vadd.f32 %v443, %v309
  %v508 = vadd.f32 %v444, %v310
  %v509 = vmax.f32 %v445, 0.0
  %v510 = vmax.f32 %v446, 0.0
  %v511 = vmax.f32 %v447, 0.0
  %v512 = vmax.f32 %v448, 0.0
  %v513 = vmax.f32 %v449, 0.0
  %v514 = vmax.f32 %v450, 0.0
  %v515 = vmax.f32 %v451, 0.0
  %v516 = vmax.f32 %v452, 0.0
  %v517 = vmax.f32 %v453, 0.0
  %v518 = vmax.f32 %v454, 0.0
  %v519 = vmax.f32 %v455, 0.0
  %v520 = vmax.f32 %v456, 0.0
  %v521 = vmax.f32 %v457, 0.0
  %v522 = vmax.f32 %v458, 0.0
  %v523 = vmax.f32 %v459, 0.0
  %v524 = vmax.f32 %v460, 0.0
  %v525 = vmax.f32 %v461, 0.0
  %v526 = vmax.f32 %v462, 0.0
  %v527 = vmax.f32 %v463, 0.0
  %v528 = vmax.f32 %v464, 0.0
  %v529 = vmax.f32 %v465, 0.0
  %v530 = vmax.f32 %v466, 0.0
  %v531 = vmax.f32 %v467, 0.0
  %v532 = vmax.f32 %v468, 0.0
  %v533 = vmax.f32 %v469, 0.0
  %v534 = vmax.f32 %v470, 0.0
  %v535 = vmax.f32 %v471, 0.0
  %v536 = vmax.f32 %v472, 0.0
  %v537 = vmax.f32 %v473, 0.0
  %v538 = vmax.f32 %v474, 0.0
  %v539 = vmax.f32 %v475, 0.0
  %v540 = vmax.f32 %v476, 0.0
  %v541 = vmax.f32 %v477, 0.0
  %v542 = vmax.f32 %v478, 0.0
  %v543 = vmax.f32 %v479, 0.0
  %v544 = vmax.f32 %v480, 0.0
  %v545 = vmax.f32 %v481, 0.0
  %v546 = vmax.f32 %v482, 0.0
  %v547 = vmax.f32 %v483, 0.0
  %v548 = vmax.f32 %v484, 0.0
  %v549 = vmax.f32 %v485, 0.0
  %v550 = vmax.f32 %v486, 0.0
  %v551 = vmax.f32 %v487, 0.0
  %v552 = vmax.f32 %v488, 0.0
  %v553 = vmax.f32 %v489, 0.0
  %v554 = vmax.f32 %v490, 0.0
  %v555 = vmax.f32 %v491, 0.0
  %v556 = vmax.f32 %v492, 0.0
  %v557 = vmax.f32 %v493, 0.0
  %v558 = vmax.f32 %v494, 0.0
  %v559 = vmax.f32 %v495, 0.0
  %v560 = vmax.f32 %v496, 0.0
  %v561 = vmax.f32 %v497, 0.0
  %v562 = vmax.f32 %v498, 0.0
  %v563 = vmax.f32 %v499, 0.0
  %v564 = vmax.f32 %v500, 0.0
  %v565 = vmax.f32 %v501, 0.0
  %v566 = vmax.f32 %v502, 0.0
  %v567 = vmax.f32 %v503, 0.0
  %v568 = vmax.f32 %v504, 0.0
  %v569 = vmax.f32 %v505, 0.0
  %v570 = vmax.f32 %v506, 0.0
  %v571 = vmax.f32 %v507, 0.0
  %v572 = vmax.f32 %v508, 0.0
  %v573 = vpack.c.bf16 %v509, %v509
  %v574 = vpack.c.bf16 %v510, %v510
  %v575 = vpack.c.bf16 %v511, %v511
  %v576 = vpack.c.bf16 %v512, %v512
  %v577 = vpack.c.bf16 %v513, %v513
  %v578 = vpack.c.bf16 %v514, %v514
  %v579 = vpack.c.bf16 %v515, %v515
  %v580 = vpack.c.bf16 %v516, %v516
  %v581 = vpack.c.bf16 %v517, %v517
  %v582 = vpack.c.bf16 %v518, %v518
  %v583 = vpack.c.bf16 %v519, %v519
  %v584 = vpack.c.bf16 %v520, %v520
  %v585 = vpack.c.bf16 %v521, %v521
  %v586 = vpack.c.bf16 %v522, %v522
  %v587 = vpack.c.bf16 %v523, %v523
  %v588 = vpack.c.bf16 %v524, %v524
  %v589 = vpack.c.bf16 %v525, %v525
  %v590 = vpack.c.bf16 %v526, %v526
  %v591 = vpack.c.bf16 %v527, %v527
  %v592 = vpack.c.bf16 %v528, %v528
  %v593 = vpack.c.bf16 %v529, %v529
  %v594 = vpack.c.bf16 %v530, %v530
  %v595 = vpack.c.bf16 %v531, %v531
  %v596 = vpack.c.bf16 %v532, %v532
  %v597 = vpack.c.bf16 %v533, %v533
  %v598 = vpack.c.bf16 %v534, %v534
  %v599 = vpack.c.bf16 %v535, %v535
  %v600 = vpack.c.bf16 %v536, %v536
  %v601 = vpack.c.bf16 %v537, %v537
  %v602 = vpack.c.bf16 %v538, %v538
  %v603 = vpack.c.bf16 %v539, %v539
  %v604 = vpack.c.bf16 %v540, %v540
  %v605 = vpack.c.bf16 %v541, %v541
  %v606 = vpack.c.bf16 %v542, %v542
  %v607 = vpack.c.bf16 %v543, %v543
  %v608 = vpack.c.bf16 %v544, %v544
  %v609 = vpack.c.bf16 %v545, %v545
  %v610 = vpack.c.bf16 %v546, %v546
  %v611 = vpack.c.bf16 %v547, %v547
  %v612 = vpack.c.bf16 %v548, %v548
  %v613 = vpack.c.bf16 %v549, %v549
  %v614 = vpack.c.bf16 %v550, %v550
  %v615 = vpack.c.bf16 %v551, %v551
  %v616 = vpack.c.bf16 %v552, %v552
  %v617 = vpack.c.bf16 %v553, %v553
  %v618 = vpack.c.bf16 %v554, %v554
  %v619 = vpack.c.bf16 %v555, %v555
  %v620 = vpack.c.bf16 %v556, %v556
  %v621 = vpack.c.bf16 %v557, %v557
  %v622 = vpack.c.bf16 %v558, %v558
  %v623 = vpack.c.bf16 %v559, %v559
  %v624 = vpack.c.bf16 %v560, %v560
  %v625 = vpack.c.bf16 %v561, %v561
  %v626 = vpack.c.bf16 %v562, %v562
  %v627 = vpack.c.bf16 %v563, %v563
  %v628 = vpack.c.bf16 %v564, %v564
  %v629 = vpack.c.bf16 %v565, %v565
  %v630 = vpack.c.bf16 %v566, %v566
  %v631 = vpack.c.bf16 %v567, %v567
  %v632 = vpack.c.bf16 %v568, %v568
  %v633 = vpack.c.bf16 %v569, %v569
  %v634 = vpack.c.bf16 %v570, %v570
  %v635 = vpack.c.bf16 %v571, %v571
  %v636 = vpack.c.bf16 %v572, %v572
  %637 = vst [vmem:[%s6] sm:$0xf] %v573
  %638 = vst [vmem:[%s6 + $0x4] sm:$0xf] %v574
  %639 = vst [vmem:[%s6 + $0x8] sm:$0xf] %v575
  %640 = vst [vmem:[%s6 + $0xc] sm:$0xf] %v576
  %641 = vst [vmem:[%s6 + $0x10] sm:$0xf] %v577
  %642 = vst [vmem:[%s6 + $0x14] sm:$0xf] %v578
  %643 = vst [vmem:[%s6 + $0x18] sm:$0xf] %v579
  %644 = vst [vmem:[%s6 + $0x1c] sm:$0xf] %v580
  %645 = vst [vmem:[%s6 + $0x20] sm:$0xf] %v581
  %646 = vst [vmem:[%s6 + $0x24] sm:$0xf] %v582
  %647 = vst [vmem:[%s6 + $0x28] sm:$0xf] %v583
  %648 = vst [vmem:[%s6 + $0x2c] sm:$0xf] %v584
  %649 = vst [vmem:[%s6 + $0x30] sm:$0xf] %v585
  %650 = vst [vmem:[%s6 + $0x34] sm:$0xf] %v586
  %651 = vst [vmem:[%s6 + $0x38] sm:$0xf] %v587
  %652 = vst [vmem:[%s6 + $0x3c] sm:$0xf] %v588
  %653 = vst [vmem:[%s6 + $0x40] sm:$0xf] %v589
  %654 = vst [vmem:[%s6 + $0x44] sm:$0xf] %v590
  %655 = vst [vmem:[%s6 + $0x48] sm:$0xf] %v591
  %656 = vst [vmem:[%s6 + $0x4c] sm:$0xf] %v592
  %657 = vst [vmem:[%s6 + $0x50] sm:$0xf] %v593
  %658 = vst [vmem:[%s6 + $0x54] sm:$0xf] %v594
  %659 = vst [vmem:[%s6 + $0x58] sm:$0xf] %v595
  %660 = vst [vmem:[%s6 + $0x5c] sm:$0xf] %v596
  %661 = vst [vmem:[%s6 + $0x60] sm:$0xf] %v597
  %662 = vst [vmem:[%s6 + $0x64] sm:$0xf] %v598
  %663 = vst [vmem:[%s6 + $0x68] sm:$0xf] %v599
  %664 = vst [vmem:[%s6 + $0x6c] sm:$0xf] %v600
  %665 = vst [vmem:[%s6 + $0x70] sm:$0xf] %v601
  %666 = vst [vmem:[%s6 + $0x74] sm:$0xf] %v602
  %667 = vst [vmem:[%s6 + $0x78] sm:$0xf] %v603
  %668 = vst [vmem:[%s6 + $0x7c] sm:$0xf] %v604
  %669 = vst [vmem:[%s6 + $0x80] sm:$0xf] %v605
  %670 = vst [vmem:[%s6 + $0x84] sm:$0xf] %v606
  %671 = vst [vmem:[%s6 + $0x88] sm:$0xf] %v607
  %672 = vst [vmem:[%s6 + $0x8c] sm:$0xf] %v608
  %673 = vst [vmem:[%s6 + $0x90] sm:$0xf] %v609
  %674 = vst [vmem:[%s6 + $0x94] sm:$0xf] %v610
  %675 = vst [vmem:[%s6 + $0x98] sm:$0xf] %v611
  %676 = vst [vmem:[%s6 + $0x9c] sm:$0xf] %v612
  %677 = vst [vmem:[%s6 + $0xa0] sm:$0xf] %v613
  %678 = vst [vmem:[%s6 + $0xa4] sm:$0xf] %v614
  %679 = vst [vmem:[%s6 + $0xa8] sm:$0xf] %v615
  %680 = vst [vmem:[%s6 + $0xac] sm:$0xf] %v616
  %681 = vst [vmem:[%s6 + $0xb0] sm:$0xf] %v617
  %682 = vst [vmem:[%s6 + $0xb4] sm:$0xf] %v618
  %683 = vst [vmem:[%s6 + $0xb8] sm:$0xf] %v619
  %684 = vst [vmem:[%s6 + $0xbc] sm:$0xf] %v620
  %685 = vst [vmem:[%s6 + $0xc0] sm:$0xf] %v621
  %686 = vst [vmem:[%s6 + $0xc4] sm:$0xf] %v622
  %687 = vst [vmem:[%s6 + $0xc8] sm:$0xf] %v623
  %688 = vst [vmem:[%s6 + $0xcc] sm:$0xf] %v624
  %689 = vst [vmem:[%s6 + $0xd0] sm:$0xf] %v625
  %690 = vst [vmem:[%s6 + $0xd4] sm:$0xf] %v626
  %691 = vst [vmem:[%s6 + $0xd8] sm:$0xf] %v627
  %692 = vst [vmem:[%s6 + $0xdc] sm:$0xf] %v628
  %693 = vst [vmem:[%s6 + $0xe0] sm:$0xf] %v629
  %694 = vst [vmem:[%s6 + $0xe4] sm:$0xf] %v630
  %695 = vst [vmem:[%s6 + $0xe8] sm:$0xf] %v631
  %696 = vst [vmem:[%s6 + $0xec] sm:$0xf] %v632
  %697 = vst [vmem:[%s6 + $0xf0] sm:$0xf] %v633
  %698 = vst [vmem:[%s6 + $0xf4] sm:$0xf] %v634
  %699 = vst [vmem:[%s6 + $0xf8] sm:$0xf] %v635
  %700 = vst [vmem:[%s6 + $0xfc] sm:$0xf] %v636
  // Predicated region
  $region26: #{basic_block_nchw.5} parent=0 // pred_check
    _
  $region27: #{basic_block_nchw.5} parent=0 // pred_check_branch
    %702 = sbr.rel (0) target = $region29
  $region28: #{basic_block_nchw.5} parent=0 // pred_region
    _
  $region29: #{basic_block_nchw.5} parent=0 // pred_fallthru
    _
  // Predicated region
  $region30: #{basic_block_nchw.5} parent=0 // pred_check
    _
  $region31: #{basic_block_nchw.5} parent=0 // pred_check_branch
    %704 = sbr.rel (0) target = $region33
  $region32: #{basic_block_nchw.5} parent=0 // pred_region
    _
  $region33: #{basic_block_nchw.5} parent=0 // pred_fallthru
    _

// kernel: basic_block_nchw.3
$region0: #{basic_block_nchw.3}
  #allocation0 [shape = 'u32[]', space=smem, size = 0x4, offset = 0x4, fixed_abs, tag = 'smem constant byte address 0x4 - core index']
  #allocation1 [shape = 'u32[72,128]{1,0:T(1,128)}', space=vmem, size = 0x9000, scoped, tag = 'internal scratch']
  %s0 = inlined_call_operand.vmem [shape: bf16[864,128], index: 0, kind: input, shape index: {}]
  %s1 = inlined_call_operand.vmem [shape: bf16[128,128], index: 1, kind: input, shape index: {}]
  %s2 = inlined_call_operand.vmem [shape: bf16[864,128], index: 2, kind: output, shape index: {0}]
  %s3 = inlined_call_operand.vmem [shape: f32[1,1,128], index: 3, kind: output, shape index: {1}]
  %s4 = inlined_call_operand.vmem [shape: f32[1,1,128], index: 4, kind: output, shape index: {2}]
  %5 = xla_tuple %s2, %s3, %s4
  %s6 = sld [smem:[#allocation0]]
  $region34: #{basic_block_nchw.3} parent=0
    _
  %s8 = ssub.s32 1, %s6
  %s9 = scalar_select 0, %s8, %s6
  // Predicated region
  $region2: #{basic_block_nchw.3} parent=0 // pred_check
    _
  $region3: #{basic_block_nchw.3} parent=0 // pred_check_branch
    %11 = sbr.rel (0) target = $region5
  $region4: #{basic_block_nchw.3} parent=0 // pred_region
    _
  $region5: #{basic_block_nchw.3} parent=0 // pred_fallthru
    _
  // Predicated region
  $region6: #{basic_block_nchw.3} parent=0 // pred_check
    _
  $region7: #{basic_block_nchw.3} parent=0 // pred_check_branch
    %13 = sbr.rel (0) target = $region9
  $region8: #{basic_block_nchw.3} parent=0 // pred_region
    _
  $region9: #{basic_block_nchw.3} parent=0 // pred_fallthru
    _
  %v14 = vld [vmem:[%s0] sm:$0xf]
  %v15 = vld [vmem:[%s0 + $0x4] sm:$0xf]
  %v16 = vld [vmem:[%s0 + $0x8] sm:$0xf]
  %v17 = vld [vmem:[%s0 + $0xc] sm:$0xf]
  %v18 = vld [vmem:[%s0 + $0x10] sm:$0xf]
  %v19 = vld [vmem:[%s0 + $0x14] sm:$0xf]
  %v20 = vld [vmem:[%s0 + $0x18] sm:$0xf]
  %v21 = vld [vmem:[%s0 + $0x1c] sm:$0xf]
  %v22 = vld [vmem:[%s0 + $0x20] sm:$0xf]
  %v23 = vld [vmem:[%s0 + $0x24] sm:$0xf]
  %v24 = vld [vmem:[%s0 + $0x28] sm:$0xf]
  %v25 = vld [vmem:[%s0 + $0x2c] sm:$0xf]
  %v26 = vld [vmem:[%s0 + $0x30] sm:$0xf]
  %v27 = vld [vmem:[%s0 + $0x34] sm:$0xf]
  %v28 = vld [vmem:[%s0 + $0x38] sm:$0xf]
  %v29 = vld [vmem:[%s0 + $0x3c] sm:$0xf]
  %v30 = vld [vmem:[%s0 + $0x40] sm:$0xf]
  %v31 = vld [vmem:[%s0 + $0x44] sm:$0xf]
  %v32 = vld [vmem:[%s0 + $0x48] sm:$0xf]
  %v33 = vld [vmem:[%s0 + $0x4c] sm:$0xf]
  %v34 = vld [vmem:[%s0 + $0x50] sm:$0xf]
  %v35 = vld [vmem:[%s0 + $0x54] sm:$0xf]
  %v36 = vld [vmem:[%s0 + $0x58] sm:$0xf]
  %v37 = vld [vmem:[%s0 + $0x5c] sm:$0xf]
  %v38 = vld [vmem:[%s0 + $0x60] sm:$0xf]
  %v39 = vld [vmem:[%s0 + $0x64] sm:$0xf]
  %v40 = vld [vmem:[%s0 + $0x68] sm:$0xf]
  %v41 = vld [vmem:[%s0 + $0x6c] sm:$0xf]
  %v42 = vld [vmem:[%s0 + $0x70] sm:$0xf]
  %v43 = vld [vmem:[%s0 + $0x74] sm:$0xf]
  %v44 = vld [vmem:[%s0 + $0x78] sm:$0xf]
  %v45 = vld [vmem:[%s0 + $0x7c] sm:$0xf]
  %v46 = vld [vmem:[%s0 + $0x80] sm:$0xf]
  %v47 = vld [vmem:[%s0 + $0x84] sm:$0xf]
  %v48 = vld [vmem:[%s0 + $0x88] sm:$0xf]
  %v49 = vld [vmem:[%s0 + $0x8c] sm:$0xf]
  %v50 = vld [vmem:[%s0 + $0x90] sm:$0xf]
  %v51 = vld [vmem:[%s0 + $0x94] sm:$0xf]
  %v52 = vld [vmem:[%s0 + $0x98] sm:$0xf]
  %v53 = vld [vmem:[%s0 + $0x9c] sm:$0xf]
  %v54 = vld [vmem:[%s0 + $0xa0] sm:$0xf]
  %v55 = vld [vmem:[%s0 + $0xa4] sm:$0xf]
  %v56 = vld [vmem:[%s0 + $0xa8] sm:$0xf]
  %v57 = vld [vmem:[%s0 + $0xac] sm:$0xf]
  %v58 = vld [vmem:[%s0 + $0xb0] sm:$0xf]
  %v59 = vld [vmem:[%s0 + $0xb4] sm:$0xf]
  %v60 = vld [vmem:[%s0 + $0xb8] sm:$0xf]
  %v61 = vld [vmem:[%s0 + $0xbc] sm:$0xf]
  %v62 = vld [vmem:[%s0 + $0xc0] sm:$0xf]
  %v63 = vld [vmem:[%s0 + $0xc4] sm:$0xf]
  %v64 = vld [vmem:[%s0 + $0xc8] sm:$0xf]
  %v65 = vld [vmem:[%s0 + $0xcc] sm:$0xf]
  %v66 = vld [vmem:[%s0 + $0xd0] sm:$0xf]
  %v67 = vld [vmem:[%s0 + $0xd4] sm:$0xf]
  %v68 = vld [vmem:[%s0 + $0xd8] sm:$0xf]
  %v69 = vld [vmem:[%s0 + $0xdc] sm:$0xf]
  %v70 = vld [vmem:[%s0 + $0xe0] sm:$0xf]
  %v71 = vld [vmem:[%s0 + $0xe4] sm:$0xf]
  %v72 = vld [vmem:[%s0 + $0xe8] sm:$0xf]
  %v73 = vld [vmem:[%s0 + $0xec] sm:$0xf]
  %v74 = vld [vmem:[%s0 + $0xf0] sm:$0xf]
  %v75 = vld [vmem:[%s0 + $0xf4] sm:$0xf]
  %v76 = vld [vmem:[%s0 + $0xf8] sm:$0xf]
  %v77 = vld [vmem:[%s0 + $0xfc] sm:$0xf]
  %v78 = vld [vmem:[%s0 + $0x100] sm:$0xf]
  %v79 = vld [vmem:[%s0 + $0x104] sm:$0xf]
  %v80 = vld [vmem:[%s0 + $0x108] sm:$0xf]
  %v81 = vld [vmem:[%s0 + $0x10c] sm:$0xf]
  %v82 = vld [vmem:[%s0 + $0x110] sm:$0xf]
  %v83 = vld [vmem:[%s0 + $0x114] sm:$0xf]
  %v84 = vld [vmem:[%s0 + $0x118] sm:$0xf]
  %v85 = vld [vmem:[%s0 + $0x11c] sm:$0xf]
  %v86 = vld [vmem:[%s0 + $0x120] sm:$0xf]
  %v87 = vld [vmem:[%s0 + $0x124] sm:$0xf]
  %v88 = vld [vmem:[%s0 + $0x128] sm:$0xf]
  %v89 = vld [vmem:[%s0 + $0x12c] sm:$0xf]
  %v90 = vld [vmem:[%s0 + $0x130] sm:$0xf]
  %v91 = vld [vmem:[%s0 + $0x134] sm:$0xf]
  %v92 = vld [vmem:[%s0 + $0x138] sm:$0xf]
  %v93 = vld [vmem:[%s0 + $0x13c] sm:$0xf]
  %v94 = vld [vmem:[%s0 + $0x140] sm:$0xf]
  %v95 = vld [vmem:[%s0 + $0x144] sm:$0xf]
  %v96 = vld [vmem:[%s0 + $0x148] sm:$0xf]
  %v97 = vld [vmem:[%s0 + $0x14c] sm:$0xf]
  %v98 = vld [vmem:[%s0 + $0x150] sm:$0xf]
  %v99 = vld [vmem:[%s0 + $0x154] sm:$0xf]
  %v100 = vld [vmem:[%s0 + $0x158] sm:$0xf]
  %v101 = vld [vmem:[%s0 + $0x15c] sm:$0xf]
  %v102 = vld [vmem:[%s0 + $0x160] sm:$0xf]
  %v103 = vld [vmem:[%s0 + $0x164] sm:$0xf]
  %v104 = vld [vmem:[%s0 + $0x168] sm:$0xf]
  %v105 = vld [vmem:[%s0 + $0x16c] sm:$0xf]
  %v106 = vld [vmem:[%s0 + $0x170] sm:$0xf]
  %v107 = vld [vmem:[%s0 + $0x174] sm:$0xf]
  %v108 = vld [vmem:[%s0 + $0x178] sm:$0xf]
  %v109 = vld [vmem:[%s0 + $0x17c] sm:$0xf]
  %v110 = vld [vmem:[%s0 + $0x180] sm:$0xf]
  %v111 = vld [vmem:[%s0 + $0x184] sm:$0xf]
  %v112 = vld [vmem:[%s0 + $0x188] sm:$0xf]
  %v113 = vld [vmem:[%s0 + $0x18c] sm:$0xf]
  %v114 = vld [vmem:[%s0 + $0x190] sm:$0xf]
  %v115 = vld [vmem:[%s0 + $0x194] sm:$0xf]
  %v116 = vld [vmem:[%s0 + $0x198] sm:$0xf]
  %v117 = vld [vmem:[%s0 + $0x19c] sm:$0xf]
  %v118 = vld [vmem:[%s0 + $0x1a0] sm:$0xf]
  %v119 = vld [vmem:[%s0 + $0x1a4] sm:$0xf]
  %v120 = vld [vmem:[%s0 + $0x1a8] sm:$0xf]
  %v121 = vld [vmem:[%s0 + $0x1ac] sm:$0xf]
  %v122 = vld [vmem:[%s1] sm:$0xf]
  %v123 = vld [vmem:[%s1 + $0x4] sm:$0xf]
  %v124 = vld [vmem:[%s1 + $0x8] sm:$0xf]
  %v125 = vld [vmem:[%s1 + $0xc] sm:$0xf]
  %v126 = vld [vmem:[%s1 + $0x10] sm:$0xf]
  %v127 = vld [vmem:[%s1 + $0x14] sm:$0xf]
  %v128 = vld [vmem:[%s1 + $0x18] sm:$0xf]
  %v129 = vld [vmem:[%s1 + $0x1c] sm:$0xf]
  %v130 = vld [vmem:[%s1 + $0x20] sm:$0xf]
  %v131 = vld [vmem:[%s1 + $0x24] sm:$0xf]
  %v132 = vld [vmem:[%s1 + $0x28] sm:$0xf]
  %v133 = vld [vmem:[%s1 + $0x2c] sm:$0xf]
  %v134 = vld [vmem:[%s1 + $0x30] sm:$0xf]
  %v135 = vld [vmem:[%s1 + $0x34] sm:$0xf]
  %v136 = vld [vmem:[%s1 + $0x38] sm:$0xf]
  %v137 = vld [vmem:[%s1 + $0x3c] sm:$0xf]
  %v246 = vunpack.c.l.b16 %v14
  %v247 = vunpack.c.l.b16 %v15
  %v248 = vunpack.c.l.b16 %v16
  %v249 = vunpack.c.l.b16 %v17
  %v250 = vunpack.c.l.b16 %v18
  %v251 = vunpack.c.l.b16 %v19
  %v252 = vunpack.c.l.b16 %v20
  %v253 = vunpack.c.l.b16 %v21
  %v254 = vunpack.c.l.b16 %v22
  %v255 = vunpack.c.l.b16 %v23
  %v256 = vunpack.c.l.b16 %v24
  %v257 = vunpack.c.l.b16 %v25
  %v258 = vunpack.c.l.b16 %v26
  %v259 = vunpack.c.l.b16 %v27
  %v260 = vunpack.c.l.b16 %v28
  %v261 = vunpack.c.l.b16 %v29
  %v262 = vunpack.c.l.b16 %v30
  %v263 = vunpack.c.l.b16 %v31
  %v264 = vunpack.c.l.b16 %v32
  %v265 = vunpack.c.l.b16 %v33
  %v266 = vunpack.c.l.b16 %v34
  %v267 = vunpack.c.l.b16 %v35
  %v268 = vunpack.c.l.b16 %v36
  %v269 = vunpack.c.l.b16 %v37
  %v270 = vunpack.c.l.b16 %v38
  %v271 = vunpack.c.l.b16 %v39
  %v272 = vunpack.c.l.b16 %v40
  %v273 = vunpack.c.l.b16 %v41
  %v274 = vunpack.c.l.b16 %v42
  %v275 = vunpack.c.l.b16 %v43
  %v276 = vunpack.c.l.b16 %v44
  %v277 = vunpack.c.l.b16 %v45
  %v278 = vunpack.c.l.b16 %v46
  %v279 = vunpack.c.l.b16 %v47
  %v280 = vunpack.c.l.b16 %v48
  %v281 = vunpack.c.l.b16 %v49
  %v282 = vunpack.c.l.b16 %v50
  %v283 = vunpack.c.l.b16 %v51
  %v284 = vunpack.c.l.b16 %v52
  %v285 = vunpack.c.l.b16 %v53
  %v286 = vunpack.c.l.b16 %v54
  %v287 = vunpack.c.l.b16 %v55
  %v288 = vunpack.c.l.b16 %v56
  %v289 = vunpack.c.l.b16 %v57
  %v290 = vunpack.c.l.b16 %v58
  %v291 = vunpack.c.l.b16 %v59
  %v292 = vunpack.c.l.b16 %v60
  %v293 = vunpack.c.l.b16 %v61
  %v294 = vunpack.c.l.b16 %v62
  %v295 = vunpack.c.l.b16 %v63
  %v296 = vunpack.c.l.b16 %v64
  %v297 = vunpack.c.l.b16 %v65
  %v298 = vunpack.c.l.b16 %v66
  %v299 = vunpack.c.l.b16 %v67
  %v300 = vunpack.c.l.b16 %v68
  %v301 = vunpack.c.l.b16 %v69
  %v302 = vunpack.c.l.b16 %v70
  %v303 = vunpack.c.l.b16 %v71
  %v304 = vunpack.c.l.b16 %v72
  %v305 = vunpack.c.l.b16 %v73
  %v306 = vunpack.c.l.b16 %v74
  %v307 = vunpack.c.l.b16 %v75
  %v308 = vunpack.c.l.b16 %v76
  %v309 = vunpack.c.l.b16 %v77
  %v310 = vunpack.c.l.b16 %v78
  %v311 = vunpack.c.l.b16 %v79
  %v312 = vunpack.c.l.b16 %v80
  %v313 = vunpack.c.l.b16 %v81
  %v314 = vunpack.c.l.b16 %v82
  %v315 = vunpack.c.l.b16 %v83
  %v316 = vunpack.c.l.b16 %v84
  %v317 = vunpack.c.l.b16 %v85
  %v318 = vunpack.c.l.b16 %v86
  %v319 = vunpack.c.l.b16 %v87
  %v320 = vunpack.c.l.b16 %v88
  %v321 = vunpack.c.l.b16 %v89
  %v322 = vunpack.c.l.b16 %v90
  %v323 = vunpack.c.l.b16 %v91
  %v324 = vunpack.c.l.b16 %v92
  %v325 = vunpack.c.l.b16 %v93
  %v326 = vunpack.c.l.b16 %v94
  %v327 = vunpack.c.l.b16 %v95
  %v328 = vunpack.c.l.b16 %v96
  %v329 = vunpack.c.l.b16 %v97
  %v330 = vunpack.c.l.b16 %v98
  %v331 = vunpack.c.l.b16 %v99
  %v332 = vunpack.c.l.b16 %v100
  %v333 = vunpack.c.l.b16 %v101
  %v334 = vunpack.c.l.b16 %v102
  %v335 = vunpack.c.l.b16 %v103
  %v336 = vunpack.c.l.b16 %v104
  %v337 = vunpack.c.l.b16 %v105
  %v338 = vunpack.c.l.b16 %v106
  %v339 = vunpack.c.l.b16 %v107
  %v340 = vunpack.c.l.b16 %v108
  %v341 = vunpack.c.l.b16 %v109
  %v342 = vunpack.c.l.b16 %v110
  %v343 = vunpack.c.l.b16 %v111
  %v344 = vunpack.c.l.b16 %v112
  %v345 = vunpack.c.l.b16 %v113
  %v346 = vunpack.c.l.b16 %v114
  %v347 = vunpack.c.l.b16 %v115
  %v348 = vunpack.c.l.b16 %v116
  %v349 = vunpack.c.l.b16 %v117
  %v350 = vunpack.c.l.b16 %v118
  %v351 = vunpack.c.l.b16 %v119
  %v352 = vunpack.c.l.b16 %v120
  %v353 = vunpack.c.l.b16 %v121
  %v354 = vpack.c.b16 %v247, %v246
  %v355 = vpack.c.b16 %v249, %v248
  %v356 = vpack.c.b16 %v251, %v250
  %v357 = vpack.c.b16 %v253, %v252
  %v358 = vpack.c.b16 %v255, %v254
  %v359 = vpack.c.b16 %v257, %v256
  %v360 = vpack.c.b16 %v259, %v258
  %v361 = vpack.c.b16 %v261, %v260
  %v362 = vpack.c.b16 %v263, %v262
  %v363 = vpack.c.b16 %v265, %v264
  %v364 = vpack.c.b16 %v267, %v266
  %v365 = vpack.c.b16 %v269, %v268
  %v366 = vpack.c.b16 %v271, %v270
  %v367 = vpack.c.b16 %v273, %v272
  %v368 = vpack.c.b16 %v275, %v274
  %v369 = vpack.c.b16 %v277, %v276
  %v370 = vpack.c.b16 %v279, %v278
  %v371 = vpack.c.b16 %v281, %v280
  %v372 = vpack.c.b16 %v283, %v282
  %v373 = vpack.c.b16 %v285, %v284
  %v374 = vpack.c.b16 %v287, %v286
  %v375 = vpack.c.b16 %v289, %v288
  %v376 = vpack.c.b16 %v291, %v290
  %v377 = vpack.c.b16 %v293, %v292
  %v378 = vpack.c.b16 %v295, %v294
  %v379 = vpack.c.b16 %v297, %v296
  %v380 = vpack.c.b16 %v299, %v298
  %v381 = vpack.c.b16 %v301, %v300
  %v382 = vpack.c.b16 %v303, %v302
  %v383 = vpack.c.b16 %v305, %v304
  %v384 = vpack.c.b16 %v307, %v306
  %v385 = vpack.c.b16 %v309, %v308
  %v386 = vpack.c.b16 %v311, %v310
  %v387 = vpack.c.b16 %v313, %v312
  %v388 = vpack.c.b16 %v315, %v314
  %v389 = vpack.c.b16 %v317, %v316
  %v390 = vpack.c.b16 %v319, %v318
  %v391 = vpack.c.b16 %v321, %v320
  %v392 = vpack.c.b16 %v323, %v322
  %v393 = vpack.c.b16 %v325, %v324
  %v394 = vpack.c.b16 %v327, %v326
  %v395 = vpack.c.b16 %v329, %v328
  %v396 = vpack.c.b16 %v331, %v330
  %v397 = vpack.c.b16 %v333, %v332
  %v398 = vpack.c.b16 %v335, %v334
  %v399 = vpack.c.b16 %v337, %v336
  %v400 = vpack.c.b16 %v339, %v338
  %v401 = vpack.c.b16 %v341, %v340
  %v402 = vpack.c.b16 %v343, %v342
  %v403 = vpack.c.b16 %v345, %v344
  %v404 = vpack.c.b16 %v347, %v346
  %v405 = vpack.c.b16 %v349, %v348
  %v406 = vpack.c.b16 %v351, %v350
  %v407 = vpack.c.b16 %v353, %v352
  %v478 = vunpack.c.l.b16 %v122
  %v479 = vunpack.c.l.b16 %v123
  %v480 = vunpack.c.l.b16 %v124
  %v481 = vunpack.c.l.b16 %v125
  %v482 = vunpack.c.l.b16 %v126
  %v483 = vunpack.c.l.b16 %v127
  %v484 = vunpack.c.l.b16 %v128
  %v485 = vunpack.c.l.b16 %v129
  %v486 = vunpack.c.l.b16 %v130
  %v487 = vunpack.c.l.b16 %v131
  %v488 = vunpack.c.l.b16 %v132
  %v489 = vunpack.c.l.b16 %v133
  %v490 = vunpack.c.l.b16 %v134
  %v491 = vunpack.c.l.b16 %v135
  %v492 = vunpack.c.l.b16 %v136
  %v493 = vunpack.c.l.b16 %v137
  %v494 = vpack.c.b16 %v479, %v478
  %v495 = vpack.c.b16 %v481, %v480
  %v496 = vpack.c.b16 %v483, %v482
  %v497 = vpack.c.b16 %v485, %v484
  %v498 = vpack.c.b16 %v487, %v486
  %v499 = vpack.c.b16 %v489, %v488
  %v500 = vpack.c.b16 %v491, %v490
  %v501 = vpack.c.b16 %v493, %v492
  %510 = vmatpush.bf16.msra.mxu0 %v501
  %511 = vmatpush.bf16.msra.mxu0 %v500
  %512 = vmatpush.bf16.msra.mxu0 %v499
  %513 = vmatpush.bf16.msra.mxu0 %v498
  %514 = vmatpush.bf16.msra.mxu0 %v497
  %515 = vmatpush.bf16.msra.mxu0 %v496
  %516 = vmatpush.bf16.msra.mxu0 %v495
  %517 = vmatpush.bf16.msra.mxu0 %v494
  %518 = vmatmul.bf16.gmra.mxu0 %v354
  %v519 = vpop.f32.mrf.mxu0
  %v520 = vadd.f32 0.0, %v519
  %v521 = vpop.f32.mrf.mxu0
  %v522 = vadd.f32 0.0, %v521
  %523 = vmatmul.bf16.gmra.mxu0 %v355
  %v524 = vpop.f32.mrf.mxu0
  %v525 = vadd.f32 0.0, %v524
  %v526 = vpop.f32.mrf.mxu0
  %v527 = vadd.f32 0.0, %v526
  %528 = vmatmul.bf16.gmra.mxu0 %v356
  %v529 = vpop.f32.mrf.mxu0
  %v530 = vadd.f32 0.0, %v529
  %v531 = vpop.f32.mrf.mxu0
  %v532 = vadd.f32 0.0, %v531
  %533 = vmatmul.bf16.gmra.mxu0 %v357
  %v534 = vpop.f32.mrf.mxu0
  %v535 = vadd.f32 0.0, %v534
  %v536 = vpop.f32.mrf.mxu0
  %v537 = vadd.f32 0.0, %v536
  %538 = vmatmul.bf16.gmra.mxu0 %v358
  %v539 = vpop.f32.mrf.mxu0
  %v540 = vadd.f32 0.0, %v539
  %v541 = vpop.f32.mrf.mxu0
  %v542 = vadd.f32 0.0, %v541
  %543 = vmatmul.bf16.gmra.mxu0 %v359
  %v544 = vpop.f32.mrf.mxu0
  %v545 = vadd.f32 0.0, %v544
  %v546 = vpop.f32.mrf.mxu0
  %v547 = vadd.f32 0.0, %v546
  %548 = vmatmul.bf16.gmra.mxu0 %v360
  %v549 = vpop.f32.mrf.mxu0
  %v550 = vadd.f32 0.0, %v549
  %v551 = vpop.f32.mrf.mxu0
  %v552 = vadd.f32 0.0, %v551
  %553 = vmatmul.bf16.gmra.mxu0 %v361
  %v554 = vpop.f32.mrf.mxu0
  %v555 = vadd.f32 0.0, %v554
  %v556 = vpop.f32.mrf.mxu0
  %v557 = vadd.f32 0.0, %v556
  %558 = vmatmul.bf16.gmra.mxu0 %v362
  %v559 = vpop.f32.mrf.mxu0
  %v560 = vadd.f32 0.0, %v559
  %v561 = vpop.f32.mrf.mxu0
  %v562 = vadd.f32 0.0, %v561
  %563 = vmatmul.bf16.gmra.mxu0 %v363
  %v564 = vpop.f32.mrf.mxu0
  %v565 = vadd.f32 0.0, %v564
  %v566 = vpop.f32.mrf.mxu0
  %v567 = vadd.f32 0.0, %v566
  %568 = vmatmul.bf16.gmra.mxu0 %v364
  %v569 = vpop.f32.mrf.mxu0
  %v570 = vadd.f32 0.0, %v569
  %v571 = vpop.f32.mrf.mxu0
  %v572 = vadd.f32 0.0, %v571
  %573 = vmatmul.bf16.gmra.mxu0 %v365
  %v574 = vpop.f32.mrf.mxu0
  %v575 = vadd.f32 0.0, %v574
  %v576 = vpop.f32.mrf.mxu0
  %v577 = vadd.f32 0.0, %v576
  %578 = vmatmul.bf16.gmra.mxu0 %v366
  %v579 = vpop.f32.mrf.mxu0
  %v580 = vadd.f32 0.0, %v579
  %v581 = vpop.f32.mrf.mxu0
  %v582 = vadd.f32 0.0, %v581
  %583 = vmatmul.bf16.gmra.mxu0 %v367
  %v584 = vpop.f32.mrf.mxu0
  %v585 = vadd.f32 0.0, %v584
  %v586 = vpop.f32.mrf.mxu0
  %v587 = vadd.f32 0.0, %v586
  %588 = vmatmul.bf16.gmra.mxu0 %v368
  %v589 = vpop.f32.mrf.mxu0
  %v590 = vadd.f32 0.0, %v589
  %v591 = vpop.f32.mrf.mxu0
  %v592 = vadd.f32 0.0, %v591
  %593 = vmatmul.bf16.gmra.mxu0 %v369
  %v594 = vpop.f32.mrf.mxu0
  %v595 = vadd.f32 0.0, %v594
  %v596 = vpop.f32.mrf.mxu0
  %v597 = vadd.f32 0.0, %v596
  %598 = vmatmul.bf16.gmra.mxu0 %v370
  %v599 = vpop.f32.mrf.mxu0
  %v600 = vadd.f32 0.0, %v599
  %v601 = vpop.f32.mrf.mxu0
  %v602 = vadd.f32 0.0, %v601
  %603 = vmatmul.bf16.gmra.mxu0 %v371
  %v604 = vpop.f32.mrf.mxu0
  %v605 = vadd.f32 0.0, %v604
  %v606 = vpop.f32.mrf.mxu0
  %v607 = vadd.f32 0.0, %v606
  %608 = vmatmul.bf16.gmra.mxu0 %v372
  %v609 = vpop.f32.mrf.mxu0
  %v610 = vadd.f32 0.0, %v609
  %v611 = vpop.f32.mrf.mxu0
  %v612 = vadd.f32 0.0, %v611
  %613 = vmatmul.bf16.gmra.mxu0 %v373
  %v614 = vpop.f32.mrf.mxu0
  %v615 = vadd.f32 0.0, %v614
  %v616 = vpop.f32.mrf.mxu0
  %v617 = vadd.f32 0.0, %v616
  %618 = vmatmul.bf16.gmra.mxu0 %v374
  %v619 = vpop.f32.mrf.mxu0
  %v620 = vadd.f32 0.0, %v619
  %v621 = vpop.f32.mrf.mxu0
  %v622 = vadd.f32 0.0, %v621
  %623 = vmatmul.bf16.gmra.mxu0 %v375
  %v624 = vpop.f32.mrf.mxu0
  %v625 = vadd.f32 0.0, %v624
  %v626 = vpop.f32.mrf.mxu0
  %v627 = vadd.f32 0.0, %v626
  %628 = vmatmul.bf16.gmra.mxu0 %v376
  %v629 = vpop.f32.mrf.mxu0
  %v630 = vadd.f32 0.0, %v629
  %v631 = vpop.f32.mrf.mxu0
  %v632 = vadd.f32 0.0, %v631
  %633 = vmatmul.bf16.gmra.mxu0 %v377
  %v634 = vpop.f32.mrf.mxu0
  %v635 = vadd.f32 0.0, %v634
  %v636 = vpop.f32.mrf.mxu0
  %v637 = vadd.f32 0.0, %v636
  %638 = vmatmul.bf16.gmra.mxu0 %v378
  %v639 = vpop.f32.mrf.mxu0
  %v640 = vadd.f32 0.0, %v639
  %v641 = vpop.f32.mrf.mxu0
  %v642 = vadd.f32 0.0, %v641
  %643 = vmatmul.bf16.gmra.mxu0 %v379
  %v644 = vpop.f32.mrf.mxu0
  %v645 = vadd.f32 0.0, %v644
  %v646 = vpop.f32.mrf.mxu0
  %v647 = vadd.f32 0.0, %v646
  %648 = vmatmul.bf16.gmra.mxu0 %v380
  %v649 = vpop.f32.mrf.mxu0
  %v650 = vadd.f32 0.0, %v649
  %v651 = vpop.f32.mrf.mxu0
  %v652 = vadd.f32 0.0, %v651
  %653 = vmatmul.bf16.gmra.mxu0 %v381
  %v654 = vpop.f32.mrf.mxu0
  %v655 = vadd.f32 0.0, %v654
  %v656 = vpop.f32.mrf.mxu0
  %v657 = vadd.f32 0.0, %v656
  %658 = vmatmul.bf16.gmra.mxu0 %v382
  %v659 = vpop.f32.mrf.mxu0
  %v660 = vadd.f32 0.0, %v659
  %v661 = vpop.f32.mrf.mxu0
  %v662 = vadd.f32 0.0, %v661
  %663 = vmatmul.bf16.gmra.mxu0 %v383
  %v664 = vpop.f32.mrf.mxu0
  %v665 = vadd.f32 0.0, %v664
  %v666 = vpop.f32.mrf.mxu0
  %v667 = vadd.f32 0.0, %v666
  %668 = vmatmul.bf16.gmra.mxu0 %v384
  %v669 = vpop.f32.mrf.mxu0
  %v670 = vadd.f32 0.0, %v669
  %v671 = vpop.f32.mrf.mxu0
  %v672 = vadd.f32 0.0, %v671
  %673 = vmatmul.bf16.gmra.mxu0 %v385
  %v674 = vpop.f32.mrf.mxu0
  %v675 = vadd.f32 0.0, %v674
  %v676 = vpop.f32.mrf.mxu0
  %v677 = vadd.f32 0.0, %v676
  %678 = vmatmul.bf16.gmra.mxu0 %v386
  %v679 = vpop.f32.mrf.mxu0
  %v680 = vadd.f32 0.0, %v679
  %v681 = vpop.f32.mrf.mxu0
  %v682 = vadd.f32 0.0, %v681
  %683 = vmatmul.bf16.gmra.mxu0 %v387
  %v684 = vpop.f32.mrf.mxu0
  %v685 = vadd.f32 0.0, %v684
  %v686 = vpop.f32.mrf.mxu0
  %v687 = vadd.f32 0.0, %v686
  %688 = vmatmul.bf16.gmra.mxu0 %v388
  %v689 = vpop.f32.mrf.mxu0
  %v690 = vadd.f32 0.0, %v689
  %v691 = vpop.f32.mrf.mxu0
  %v692 = vadd.f32 0.0, %v691
  %693 = vmatmul.bf16.gmra.mxu0 %v389
  %v694 = vpop.f32.mrf.mxu0
  %v695 = vadd.f32 0.0, %v694
  %v696 = vpop.f32.mrf.mxu0
  %v697 = vadd.f32 0.0, %v696
  %698 = vmatmul.bf16.gmra.mxu0 %v390
  %v699 = vpop.f32.mrf.mxu0
  %v700 = vadd.f32 0.0, %v699
  %v701 = vpop.f32.mrf.mxu0
  %v702 = vadd.f32 0.0, %v701
  %703 = vmatmul.bf16.gmra.mxu0 %v391
  %v704 = vpop.f32.mrf.mxu0
  %v705 = vadd.f32 0.0, %v704
  %v706 = vpop.f32.mrf.mxu0
  %v707 = vadd.f32 0.0, %v706
  %708 = vmatmul.bf16.gmra.mxu0 %v392
  %v709 = vpop.f32.mrf.mxu0
  %v710 = vadd.f32 0.0, %v709
  %v711 = vpop.f32.mrf.mxu0
  %v712 = vadd.f32 0.0, %v711
  %713 = vmatmul.bf16.gmra.mxu0 %v393
  %v714 = vpop.f32.mrf.mxu0
  %v715 = vadd.f32 0.0, %v714
  %v716 = vpop.f32.mrf.mxu0
  %v717 = vadd.f32 0.0, %v716
  %718 = vmatmul.bf16.gmra.mxu0 %v394
  %v719 = vpop.f32.mrf.mxu0
  %v720 = vadd.f32 0.0, %v719
  %v721 = vpop.f32.mrf.mxu0
  %v722 = vadd.f32 0.0, %v721
  %723 = vmatmul.bf16.gmra.mxu0 %v395
  %v724 = vpop.f32.mrf.mxu0
  %v725 = vadd.f32 0.0, %v724
  %v726 = vpop.f32.mrf.mxu0
  %v727 = vadd.f32 0.0, %v726
  %728 = vmatmul.bf16.gmra.mxu0 %v396
  %v729 = vpop.f32.mrf.mxu0
  %v730 = vadd.f32 0.0, %v729
  %v731 = vpop.f32.mrf.mxu0
  %v732 = vadd.f32 0.0, %v731
  %733 = vmatmul.bf16.gmra.mxu0 %v397
  %v734 = vpop.f32.mrf.mxu0
  %v735 = vadd.f32 0.0, %v734
  %v736 = vpop.f32.mrf.mxu0
  %v737 = vadd.f32 0.0, %v736
  %738 = vmatmul.bf16.gmra.mxu0 %v398
  %v739 = vpop.f32.mrf.mxu0
  %v740 = vadd.f32 0.0, %v739
  %v741 = vpop.f32.mrf.mxu0
  %v742 = vadd.f32 0.0, %v741
  %743 = vmatmul.bf16.gmra.mxu0 %v399
  %v744 = vpop.f32.mrf.mxu0
  %v745 = vadd.f32 0.0, %v744
  %v746 = vpop.f32.mrf.mxu0
  %v747 = vadd.f32 0.0, %v746
  %748 = vmatmul.bf16.gmra.mxu0 %v400
  %v749 = vpop.f32.mrf.mxu0
  %v750 = vadd.f32 0.0, %v749
  %v751 = vpop.f32.mrf.mxu0
  %v752 = vadd.f32 0.0, %v751
  %753 = vmatmul.bf16.gmra.mxu0 %v401
  %v754 = vpop.f32.mrf.mxu0
  %v755 = vadd.f32 0.0, %v754
  %v756 = vpop.f32.mrf.mxu0
  %v757 = vadd.f32 0.0, %v756
  %758 = vmatmul.bf16.gmra.mxu0 %v402
  %v759 = vpop.f32.mrf.mxu0
  %v760 = vadd.f32 0.0, %v759
  %v761 = vpop.f32.mrf.mxu0
  %v762 = vadd.f32 0.0, %v761
  %763 = vmatmul.bf16.gmra.mxu0 %v403
  %v764 = vpop.f32.mrf.mxu0
  %v765 = vadd.f32 0.0, %v764
  %v766 = vpop.f32.mrf.mxu0
  %v767 = vadd.f32 0.0, %v766
  %768 = vmatmul.bf16.gmra.mxu0 %v404
  %v769 = vpop.f32.mrf.mxu0
  %v770 = vadd.f32 0.0, %v769
  %v771 = vpop.f32.mrf.mxu0
  %v772 = vadd.f32 0.0, %v771
  %773 = vmatmul.bf16.gmra.mxu0 %v405
  %v774 = vpop.f32.mrf.mxu0
  %v775 = vadd.f32 0.0, %v774
  %v776 = vpop.f32.mrf.mxu0
  %v777 = vadd.f32 0.0, %v776
  %778 = vmatmul.bf16.gmra.mxu0 %v406
  %v779 = vpop.f32.mrf.mxu0
  %v780 = vadd.f32 0.0, %v779
  %v781 = vpop.f32.mrf.mxu0
  %v782 = vadd.f32 0.0, %v781
  %783 = vmatmul.bf16.gmra.mxu0 %v407
  %v784 = vpop.f32.mrf.mxu0
  %v785 = vadd.f32 0.0, %v784
  %v786 = vpop.f32.mrf.mxu0
  %v787 = vadd.f32 0.0, %v786
  %788 = vdwg.mxu0
  %v789 = vpack.c.bf16 %v520, %v520
  %v790 = vpack.c.bf16 %v522, %v522
  %v791 = vpack.c.bf16 %v525, %v525
  %v792 = vpack.c.bf16 %v527, %v527
  %v793 = vpack.c.bf16 %v530, %v530
  %v794 = vpack.c.bf16 %v532, %v532
  %v795 = vpack.c.bf16 %v535, %v535
  %v796 = vpack.c.bf16 %v537, %v537
  %v797 = vpack.c.bf16 %v540, %v540
  %v798 = vpack.c.bf16 %v542, %v542
  %v799 = vpack.c.bf16 %v545, %v545
  %v800 = vpack.c.bf16 %v547, %v547
  %v801 = vpack.c.bf16 %v550, %v550
  %v802 = vpack.c.bf16 %v552, %v552
  %v803 = vpack.c.bf16 %v555, %v555
  %v804 = vpack.c.bf16 %v557, %v557
  %v805 = vpack.c.bf16 %v560, %v560
  %v806 = vpack.c.bf16 %v562, %v562
  %v807 = vpack.c.bf16 %v565, %v565
  %v808 = vpack.c.bf16 %v567, %v567
  %v809 = vpack.c.bf16 %v570, %v570
  %v810 = vpack.c.bf16 %v572, %v572
  %v811 = vpack.c.bf16 %v575, %v575
  %v812 = vpack.c.bf16 %v577, %v577
  %v813 = vpack.c.bf16 %v580, %v580
  %v814 = vpack.c.bf16 %v582, %v582
  %v815 = vpack.c.bf16 %v585, %v585
  %v816 = vpack.c.bf16 %v587, %v587
  %v817 = vpack.c.bf16 %v590, %v590
  %v818 = vpack.c.bf16 %v592, %v592
  %v819 = vpack.c.bf16 %v595, %v595
  %v820 = vpack.c.bf16 %v597, %v597
  %v821 = vpack.c.bf16 %v600, %v600
  %v822 = vpack.c.bf16 %v602, %v602
  %v823 = vpack.c.bf16 %v605, %v605
  %v824 = vpack.c.bf16 %v607, %v607
  %v825 = vpack.c.bf16 %v610, %v610
  %v826 = vpack.c.bf16 %v612, %v612
  %v827 = vpack.c.bf16 %v615, %v615
  %v828 = vpack.c.bf16 %v617, %v617
  %v829 = vpack.c.bf16 %v620, %v620
  %v830 = vpack.c.bf16 %v622, %v622
  %v831 = vpack.c.bf16 %v625, %v625
  %v832 = vpack.c.bf16 %v627, %v627
  %v833 = vpack.c.bf16 %v630, %v630
  %v834 = vpack.c.bf16 %v632, %v632
  %v835 = vpack.c.bf16 %v635, %v635
  %v836 = vpack.c.bf16 %v637, %v637
  %v837 = vpack.c.bf16 %v640, %v640
  %v838 = vpack.c.bf16 %v642, %v642
  %v839 = vpack.c.bf16 %v645, %v645
  %v840 = vpack.c.bf16 %v647, %v647
  %v841 = vpack.c.bf16 %v650, %v650
  %v842 = vpack.c.bf16 %v652, %v652
  %v843 = vpack.c.bf16 %v655, %v655
  %v844 = vpack.c.bf16 %v657, %v657
  %v845 = vpack.c.bf16 %v660, %v660
  %v846 = vpack.c.bf16 %v662, %v662
  %v847 = vpack.c.bf16 %v665, %v665
  %v848 = vpack.c.bf16 %v667, %v667
  %v849 = vpack.c.bf16 %v670, %v670
  %v850 = vpack.c.bf16 %v672, %v672
  %v851 = vpack.c.bf16 %v675, %v675
  %v852 = vpack.c.bf16 %v677, %v677
  %v853 = vpack.c.bf16 %v680, %v680
  %v854 = vpack.c.bf16 %v682, %v682
  %v855 = vpack.c.bf16 %v685, %v685
  %v856 = vpack.c.bf16 %v687, %v687
  %v857 = vpack.c.bf16 %v690, %v690
  %v858 = vpack.c.bf16 %v692, %v692
  %v859 = vpack.c.bf16 %v695, %v695
  %v860 = vpack.c.bf16 %v697, %v697
  %v861 = vpack.c.bf16 %v700, %v700
  %v862 = vpack.c.bf16 %v702, %v702
  %v863 = vpack.c.bf16 %v705, %v705
  %v864 = vpack.c.bf16 %v707, %v707
  %v865 = vpack.c.bf16 %v710, %v710
  %v866 = vpack.c.bf16 %v712, %v712
  %v867 = vpack.c.bf16 %v715, %v715
  %v868 = vpack.c.bf16 %v717, %v717
  %v869 = vpack.c.bf16 %v720, %v720
  %v870 = vpack.c.bf16 %v722, %v722
  %v871 = vpack.c.bf16 %v725, %v725
  %v872 = vpack.c.bf16 %v727, %v727
  %v873 = vpack.c.bf16 %v730, %v730
  %v874 = vpack.c.bf16 %v732, %v732
  %v875 = vpack.c.bf16 %v735, %v735
  %v876 = vpack.c.bf16 %v737, %v737
  %v877 = vpack.c.bf16 %v740, %v740
  %v878 = vpack.c.bf16 %v742, %v742
  %v879 = vpack.c.bf16 %v745, %v745
  %v880 = vpack.c.bf16 %v747, %v747
  %v881 = vpack.c.bf16 %v750, %v750
  %v882 = vpack.c.bf16 %v752, %v752
  %v883 = vpack.c.bf16 %v755, %v755
  %v884 = vpack.c.bf16 %v757, %v757
  %v885 = vpack.c.bf16 %v760, %v760
  %v886 = vpack.c.bf16 %v762, %v762
  %v887 = vpack.c.bf16 %v765, %v765
  %v888 = vpack.c.bf16 %v767, %v767
  %v889 = vpack.c.bf16 %v770, %v770
  %v890 = vpack.c.bf16 %v772, %v772
  %v891 = vpack.c.bf16 %v775, %v775
  %v892 = vpack.c.bf16 %v777, %v777
  %v893 = vpack.c.bf16 %v780, %v780
  %v894 = vpack.c.bf16 %v782, %v782
  %v895 = vpack.c.bf16 %v785, %v785
  %v896 = vpack.c.bf16 %v787, %v787
  %897 = vst [vmem:[%s2] sm:$0xf] %v789
  %898 = vst [vmem:[%s2 + $0x4] sm:$0xf] %v790
  %899 = vst [vmem:[%s2 + $0x8] sm:$0xf] %v791
  %900 = vst [vmem:[%s2 + $0xc] sm:$0xf] %v792
  %901 = vst [vmem:[%s2 + $0x10] sm:$0xf] %v793
  %902 = vst [vmem:[%s2 + $0x14] sm:$0xf] %v794
  %903 = vst [vmem:[%s2 + $0x18] sm:$0xf] %v795
  %904 = vst [vmem:[%s2 + $0x1c] sm:$0xf] %v796
  %905 = vst [vmem:[%s2 + $0x20] sm:$0xf] %v797
  %906 = vst [vmem:[%s2 + $0x24] sm:$0xf] %v798
  %907 = vst [vmem:[%s2 + $0x28] sm:$0xf] %v799
  %908 = vst [vmem:[%s2 + $0x2c] sm:$0xf] %v800
  %909 = vst [vmem:[%s2 + $0x30] sm:$0xf] %v801
  %910 = vst [vmem:[%s2 + $0x34] sm:$0xf] %v802
  %911 = vst [vmem:[%s2 + $0x38] sm:$0xf] %v803
  %912 = vst [vmem:[%s2 + $0x3c] sm:$0xf] %v804
  %913 = vst [vmem:[%s2 + $0x40] sm:$0xf] %v805
  %914 = vst [vmem:[%s2 + $0x44] sm:$0xf] %v806
  %915 = vst [vmem:[%s2 + $0x48] sm:$0xf] %v807
  %916 = vst [vmem:[%s2 + $0x4c] sm:$0xf] %v808
  %917 = vst [vmem:[%s2 + $0x50] sm:$0xf] %v809
  %918 = vst [vmem:[%s2 + $0x54] sm:$0xf] %v810
  %919 = vst [vmem:[%s2 + $0x58] sm:$0xf] %v811
  %920 = vst [vmem:[%s2 + $0x5c] sm:$0xf] %v812
  %921 = vst [vmem:[%s2 + $0x60] sm:$0xf] %v813
  %922 = vst [vmem:[%s2 + $0x64] sm:$0xf] %v814
  %923 = vst [vmem:[%s2 + $0x68] sm:$0xf] %v815
  %924 = vst [vmem:[%s2 + $0x6c] sm:$0xf] %v816
  %925 = vst [vmem:[%s2 + $0x70] sm:$0xf] %v817
  %926 = vst [vmem:[%s2 + $0x74] sm:$0xf] %v818
  %927 = vst [vmem:[%s2 + $0x78] sm:$0xf] %v819
  %928 = vst [vmem:[%s2 + $0x7c] sm:$0xf] %v820
  %929 = vst [vmem:[%s2 + $0x80] sm:$0xf] %v821
  %930 = vst [vmem:[%s2 + $0x84] sm:$0xf] %v822
  %931 = vst [vmem:[%s2 + $0x88] sm:$0xf] %v823
  %932 = vst [vmem:[%s2 + $0x8c] sm:$0xf] %v824
  %933 = vst [vmem:[%s2 + $0x90] sm:$0xf] %v825
  %934 = vst [vmem:[%s2 + $0x94] sm:$0xf] %v826
  %935 = vst [vmem:[%s2 + $0x98] sm:$0xf] %v827
  %936 = vst [vmem:[%s2 + $0x9c] sm:$0xf] %v828
  %937 = vst [vmem:[%s2 + $0xa0] sm:$0xf] %v829
  %938 = vst [vmem:[%s2 + $0xa4] sm:$0xf] %v830
  %939 = vst [vmem:[%s2 + $0xa8] sm:$0xf] %v831
  %940 = vst [vmem:[%s2 + $0xac] sm:$0xf] %v832
  %941 = vst [vmem:[%s2 + $0xb0] sm:$0xf] %v833
  %942 = vst [vmem:[%s2 + $0xb4] sm:$0xf] %v834
  %943 = vst [vmem:[%s2 + $0xb8] sm:$0xf] %v835
  %944 = vst [vmem:[%s2 + $0xbc] sm:$0xf] %v836
  %945 = vst [vmem:[%s2 + $0xc0] sm:$0xf] %v837
  %946 = vst [vmem:[%s2 + $0xc4] sm:$0xf] %v838
  %947 = vst [vmem:[%s2 + $0xc8] sm:$0xf] %v839
  %948 = vst [vmem:[%s2 + $0xcc] sm:$0xf] %v840
  %949 = vst [vmem:[%s2 + $0xd0] sm:$0xf] %v841
  %950 = vst [vmem:[%s2 + $0xd4] sm:$0xf] %v842
  %951 = vst [vmem:[%s2 + $0xd8] sm:$0xf] %v843
  %952 = vst [vmem:[%s2 + $0xdc] sm:$0xf] %v844
  %953 = vst [vmem:[%s2 + $0xe0] sm:$0xf] %v845
  %954 = vst [vmem:[%s2 + $0xe4] sm:$0xf] %v846
  %955 = vst [vmem:[%s2 + $0xe8] sm:$0xf] %v847
  %956 = vst [vmem:[%s2 + $0xec] sm:$0xf] %v848
  %957 = vst [vmem:[%s2 + $0xf0] sm:$0xf] %v849
  %958 = vst [vmem:[%s2 + $0xf4] sm:$0xf] %v850
  %959 = vst [vmem:[%s2 + $0xf8] sm:$0xf] %v851
  %960 = vst [vmem:[%s2 + $0xfc] sm:$0xf] %v852
  %961 = vst [vmem:[%s2 + $0x100] sm:$0xf] %v853
  %962 = vst [vmem:[%s2 + $0x104] sm:$0xf] %v854
  %963 = vst [vmem:[%s2 + $0x108] sm:$0xf] %v855
  %964 = vst [vmem:[%s2 + $0x10c] sm:$0xf] %v856
  %965 = vst [vmem:[%s2 + $0x110] sm:$0xf] %v857
  %966 = vst [vmem:[%s2 + $0x114] sm:$0xf] %v858
  %967 = vst [vmem:[%s2 + $0x118] sm:$0xf] %v859
  %968 = vst [vmem:[%s2 + $0x11c] sm:$0xf] %v860
  %969 = vst [vmem:[%s2 + $0x120] sm:$0xf] %v861
  %970 = vst [vmem:[%s2 + $0x124] sm:$0xf] %v862
  %971 = vst [vmem:[%s2 + $0x128] sm:$0xf] %v863
  %972 = vst [vmem:[%s2 + $0x12c] sm:$0xf] %v864
  %973 = vst [vmem:[%s2 + $0x130] sm:$0xf] %v865
  %974 = vst [vmem:[%s2 + $0x134] sm:$0xf] %v866
  %975 = vst [vmem:[%s2 + $0x138] sm:$0xf] %v867
  %976 = vst [vmem:[%s2 + $0x13c] sm:$0xf] %v868
  %977 = vst [vmem:[%s2 + $0x140] sm:$0xf] %v869
  %978 = vst [vmem:[%s2 + $0x144] sm:$0xf] %v870
  %979 = vst [vmem:[%s2 + $0x148] sm:$0xf] %v871
  %980 = vst [vmem:[%s2 + $0x14c] sm:$0xf] %v872
  %981 = vst [vmem:[%s2 + $0x150] sm:$0xf] %v873
  %982 = vst [vmem:[%s2 + $0x154] sm:$0xf] %v874
  %983 = vst [vmem:[%s2 + $0x158] sm:$0xf] %v875
  %984 = vst [vmem:[%s2 + $0x15c] sm:$0xf] %v876
  %985 = vst [vmem:[%s2 + $0x160] sm:$0xf] %v877
  %986 = vst [vmem:[%s2 + $0x164] sm:$0xf] %v878
  %987 = vst [vmem:[%s2 + $0x168] sm:$0xf] %v879
  %988 = vst [vmem:[%s2 + $0x16c] sm:$0xf] %v880
  %989 = vst [vmem:[%s2 + $0x170] sm:$0xf] %v881
  %990 = vst [vmem:[%s2 + $0x174] sm:$0xf] %v882
  %991 = vst [vmem:[%s2 + $0x178] sm:$0xf] %v883
  %992 = vst [vmem:[%s2 + $0x17c] sm:$0xf] %v884
  %993 = vst [vmem:[%s2 + $0x180] sm:$0xf] %v885
  %994 = vst [vmem:[%s2 + $0x184] sm:$0xf] %v886
  %995 = vst [vmem:[%s2 + $0x188] sm:$0xf] %v887
  %996 = vst [vmem:[%s2 + $0x18c] sm:$0xf] %v888
  %997 = vst [vmem:[%s2 + $0x190] sm:$0xf] %v889
  %998 = vst [vmem:[%s2 + $0x194] sm:$0xf] %v890
  %999 = vst [vmem:[%s2 + $0x198] sm:$0xf] %v891
  %1000 = vst [vmem:[%s2 + $0x19c] sm:$0xf] %v892
  %1001 = vst [vmem:[%s2 + $0x1a0] sm:$0xf] %v893
  %1002 = vst [vmem:[%s2 + $0x1a4] sm:$0xf] %v894
  %1003 = vst [vmem:[%s2 + $0x1a8] sm:$0xf] %v895
  %1004 = vst [vmem:[%s2 + $0x1ac] sm:$0xf] %v896
  %v1005 = vadd.f32 %v520, %v522
  %v1006 = vadd.f32 %v1005, %v525
  %v1007 = vadd.f32 %v1006, %v527
  %v1008 = vadd.f32 %v1007, %v530
  %v1009 = vadd.f32 %v1008, %v532
  %v1010 = vadd.f32 %v1009, %v535
  %v1011 = vadd.f32 %v1010, %v537
  %v1012 = vadd.f32 %v1011, %v540
  %v1013 = vadd.f32 %v1012, %v542
  %v1014 = vadd.f32 %v1013, %v545
  %v1015 = vadd.f32 %v1014, %v547
  %v1016 = vadd.f32 %v1015, %v550
  %v1017 = vadd.f32 %v1016, %v552
  %v1018 = vadd.f32 %v1017, %v555
  %v1019 = vadd.f32 %v1018, %v557
  %v1020 = vadd.f32 %v1019, %v560
  %v1021 = vadd.f32 %v1020, %v562
  %v1022 = vadd.f32 %v1021, %v565
  %v1023 = vadd.f32 %v1022, %v567
  %v1024 = vadd.f32 %v1023, %v570
  %v1025 = vadd.f32 %v1024, %v572
  %v1026 = vadd.f32 %v1025, %v575
  %v1027 = vadd.f32 %v1026, %v577
  %v1028 = vadd.f32 %v1027, %v580
  %v1029 = vadd.f32 %v1028, %v582
  %v1030 = vadd.f32 %v1029, %v585
  %v1031 = vadd.f32 %v1030, %v587
  %v1032 = vadd.f32 %v1031, %v590
  %v1033 = vadd.f32 %v1032, %v592
  %v1034 = vadd.f32 %v1033, %v595
  %v1035 = vadd.f32 %v1034, %v597
  %v1036 = vadd.f32 %v1035, %v600
  %v1037 = vadd.f32 %v1036, %v602
  %v1038 = vadd.f32 %v1037, %v605
  %v1039 = vadd.f32 %v1038, %v607
  %v1040 = vadd.f32 %v1039, %v610
  %v1041 = vadd.f32 %v1040, %v612
  %v1042 = vadd.f32 %v1041, %v615
  %v1043 = vadd.f32 %v1042, %v617
  %v1044 = vadd.f32 %v1043, %v620
  %v1045 = vadd.f32 %v1044, %v622
  %v1046 = vadd.f32 %v1045, %v625
  %v1047 = vadd.f32 %v1046, %v627
  %v1048 = vadd.f32 %v1047, %v630
  %v1049 = vadd.f32 %v1048, %v632
  %v1050 = vadd.f32 %v1049, %v635
  %v1051 = vadd.f32 %v1050, %v637
  %v1052 = vadd.f32 %v1051, %v640
  %v1053 = vadd.f32 %v1052, %v642
  %v1054 = vadd.f32 %v1053, %v645
  %v1055 = vadd.f32 %v1054, %v647
  %v1056 = vadd.f32 %v1055, %v650
  %v1057 = vadd.f32 %v1056, %v652
  %v1058 = vadd.f32 %v1057, %v655
  %v1059 = vadd.f32 %v1058, %v657
  %v1060 = vadd.f32 %v1059, %v660
  %v1061 = vadd.f32 %v1060, %v662
  %v1062 = vadd.f32 %v1061, %v665
  %v1063 = vadd.f32 %v1062, %v667
  %v1064 = vadd.f32 %v1063, %v670
  %v1065 = vadd.f32 %v1064, %v672
  %v1066 = vadd.f32 %v1065, %v675
  %v1067 = vadd.f32 %v1066, %v677
  %v1068 = vadd.f32 %v1067, %v680
  %v1069 = vadd.f32 %v1068, %v682
  %v1070 = vadd.f32 %v1069, %v685
  %v1071 = vadd.f32 %v1070, %v687
  %v1072 = vadd.f32 %v1071, %v690
  %v1073 = vadd.f32 %v1072, %v692
  %v1074 = vadd.f32 %v1073, %v695
  %v1075 = vadd.f32 %v1074, %v697
  %v1076 = vadd.f32 %v1075, %v700
  %v1077 = vadd.f32 %v1076, %v702
  %v1078 = vadd.f32 %v1077, %v705
  %v1079 = vadd.f32 %v1078, %v707
  %v1080 = vadd.f32 %v1079, %v710
  %v1081 = vadd.f32 %v1080, %v712
  %v1082 = vadd.f32 %v1081, %v715
  %v1083 = vadd.f32 %v1082, %v717
  %v1084 = vadd.f32 %v1083, %v720
  %v1085 = vadd.f32 %v1084, %v722
  %v1086 = vadd.f32 %v1085, %v725
  %v1087 = vadd.f32 %v1086, %v727
  %v1088 = vadd.f32 %v1087, %v730
  %v1089 = vadd.f32 %v1088, %v732
  %v1090 = vadd.f32 %v1089, %v735
  %v1091 = vadd.f32 %v1090, %v737
  %v1092 = vadd.f32 %v1091, %v740
  %v1093 = vadd.f32 %v1092, %v742
  %v1094 = vadd.f32 %v1093, %v745
  %v1095 = vadd.f32 %v1094, %v747
  %v1096 = vadd.f32 %v1095, %v750
  %v1097 = vadd.f32 %v1096, %v752
  %v1098 = vadd.f32 %v1097, %v755
  %v1099 = vadd.f32 %v1098, %v757
  %v1100 = vadd.f32 %v1099, %v760
  %v1101 = vadd.f32 %v1100, %v762
  %v1102 = vadd.f32 %v1101, %v765
  %v1103 = vadd.f32 %v1102, %v767
  %v1104 = vadd.f32 %v1103, %v770
  %v1105 = vadd.f32 %v1104, %v772
  %v1106 = vadd.f32 %v1105, %v775
  %v1107 = vadd.f32 %v1106, %v777
  %v1108 = vadd.f32 %v1107, %v780
  %v1109 = vadd.f32 %v1108, %v782
  %v1110 = vadd.f32 %v1109, %v785
  %v1111 = vadd.f32 %v1110, %v787
  %v1112 = vrot.slane %v1111, 4
  %v1113 = vadd.f32 %v1111, %v1112
  %v1114 = vrot.slane %v1113, 2
  %v1115 = vadd.f32 %v1113, %v1114
  %v1116 = vrot.slane %v1115, 1
  %v1117 = vadd.f32 %v1115, %v1116
  %1118 = vst [vmem:[%s3] sm:$0x1] %v1117
  %v1119 = vmul.f32 %v520, %v520
  %v1120 = vmul.f32 %v522, %v522
  %v1121 = vmul.f32 %v525, %v525
  %v1122 = vmul.f32 %v527, %v527
  %v1123 = vmul.f32 %v530, %v530
  %v1124 = vmul.f32 %v532, %v532
  %v1125 = vmul.f32 %v535, %v535
  %v1126 = vmul.f32 %v537, %v537
  %v1127 = vmul.f32 %v540, %v540
  %v1128 = vmul.f32 %v542, %v542
  %v1129 = vmul.f32 %v545, %v545
  %v1130 = vmul.f32 %v547, %v547
  %v1131 = vmul.f32 %v550, %v550
  %v1132 = vmul.f32 %v552, %v552
  %v1133 = vmul.f32 %v555, %v555
  %v1134 = vmul.f32 %v557, %v557
  %v1135 = vmul.f32 %v560, %v560
  %v1136 = vmul.f32 %v562, %v562
  %v1137 = vmul.f32 %v565, %v565
  %v1138 = vmul.f32 %v567, %v567
  %v1139 = vmul.f32 %v570, %v570
  %v1140 = vmul.f32 %v572, %v572
  %v1141 = vmul.f32 %v575, %v575
  %v1142 = vmul.f32 %v577, %v577
  %v1143 = vmul.f32 %v580, %v580
  %v1144 = vmul.f32 %v582, %v582
  %v1145 = vmul.f32 %v585, %v585
  %v1146 = vmul.f32 %v587, %v587
  %v1147 = vmul.f32 %v590, %v590
  %v1148 = vmul.f32 %v592, %v592
  %v1149 = vmul.f32 %v595, %v595
  %v1150 = vmul.f32 %v597, %v597
  %v1151 = vmul.f32 %v600, %v600
  %v1152 = vmul.f32 %v602, %v602
  %v1153 = vmul.f32 %v605, %v605
  %v1154 = vmul.f32 %v607, %v607
  %v1155 = vmul.f32 %v610, %v610
  %v1156 = vmul.f32 %v612, %v612
  %v1157 = vmul.f32 %v615, %v615
  %v1158 = vmul.f32 %v617, %v617
  %v1159 = vmul.f32 %v620, %v620
  %v1160 = vmul.f32 %v622, %v622
  %v1161 = vmul.f32 %v625, %v625
  %v1162 = vmul.f32 %v627, %v627
  %v1163 = vmul.f32 %v630, %v630
  %v1164 = vmul.f32 %v632, %v632
  %v1165 = vmul.f32 %v635, %v635
  %v1166 = vmul.f32 %v637, %v637
  %v1167 = vmul.f32 %v640, %v640
  %v1168 = vmul.f32 %v642, %v642
  %v1169 = vmul.f32 %v645, %v645
  %v1170 = vmul.f32 %v647, %v647
  %v1171 = vmul.f32 %v650, %v650
  %v1172 = vmul.f32 %v652, %v652
  %v1173 = vmul.f32 %v655, %v655
  %v1174 = vmul.f32 %v657, %v657
  %v1175 = vmul.f32 %v660, %v660
  %v1176 = vmul.f32 %v662, %v662
  %v1177 = vmul.f32 %v665, %v665
  %v1178 = vmul.f32 %v667, %v667
  %v1179 = vmul.f32 %v670, %v670
  %v1180 = vmul.f32 %v672, %v672
  %v1181 = vmul.f32 %v675, %v675
  %v1182 = vmul.f32 %v677, %v677
  %v1183 = vmul.f32 %v680, %v680
  %v1184 = vmul.f32 %v682, %v682
  %v1185 = vmul.f32 %v685, %v685
  %v1186 = vmul.f32 %v687, %v687
  %v1187 = vmul.f32 %v690, %v690
  %v1188 = vmul.f32 %v692, %v692
  %v1189 = vmul.f32 %v695, %v695
  %v1190 = vmul.f32 %v697, %v697
  %v1191 = vmul.f32 %v700, %v700
  %v1192 = vmul.f32 %v702, %v702
  %v1193 = vmul.f32 %v705, %v705
  %v1194 = vmul.f32 %v707, %v707
  %v1195 = vmul.f32 %v710, %v710
  %v1196 = vmul.f32 %v712, %v712
  %v1197 = vmul.f32 %v715, %v715
  %v1198 = vmul.f32 %v717, %v717
  %v1199 = vmul.f32 %v720, %v720
  %v1200 = vmul.f32 %v722, %v722
  %v1201 = vmul.f32 %v725, %v725
  %v1202 = vmul.f32 %v727, %v727
  %v1203 = vmul.f32 %v730, %v730
  %v1204 = vmul.f32 %v732, %v732
  %v1205 = vmul.f32 %v735, %v735
  %v1206 = vmul.f32 %v737, %v737
  %v1207 = vmul.f32 %v740, %v740
  %v1208 = vmul.f32 %v742, %v742
  %v1209 = vmul.f32 %v745, %v745
  %v1210 = vmul.f32 %v747, %v747
  %v1211 = vmul.f32 %v750, %v750
  %v1212 = vmul.f32 %v752, %v752
  %v1213 = vmul.f32 %v755, %v755
  %v1214 = vmul.f32 %v757, %v757
  %v1215 = vmul.f32 %v760, %v760
  %v1216 = vmul.f32 %v762, %v762
  %v1217 = vmul.f32 %v765, %v765
  %v1218 = vmul.f32 %v767, %v767
  %v1219 = vmul.f32 %v770, %v770
  %v1220 = vmul.f32 %v772, %v772
  %v1221 = vmul.f32 %v775, %v775
  %v1222 = vmul.f32 %v777, %v777
  %v1223 = vmul.f32 %v780, %v780
  %v1224 = vmul.f32 %v782, %v782
  %v1225 = vmul.f32 %v785, %v785
  %v1226 = vmul.f32 %v787, %v787
  %v1227 = vadd.f32 %v1119, %v1120
  %v1228 = vadd.f32 %v1227, %v1121
  %v1229 = vadd.f32 %v1228, %v1122
  %v1230 = vadd.f32 %v1229, %v1123
  %v1231 = vadd.f32 %v1230, %v1124
  %v1232 = vadd.f32 %v1231, %v1125
  %v1233 = vadd.f32 %v1232, %v1126
  %v1234 = vadd.f32 %v1233, %v1127
  %v1235 = vadd.f32 %v1234, %v1128
  %v1236 = vadd.f32 %v1235, %v1129
  %v1237 = vadd.f32 %v1236, %v1130
  %v1238 = vadd.f32 %v1237, %v1131
  %v1239 = vadd.f32 %v1238, %v1132
  %v1240 = vadd.f32 %v1239, %v1133
  %v1241 = vadd.f32 %v1240, %v1134
  %v1242 = vadd.f32 %v1241, %v1135
  %v1243 = vadd.f32 %v1242, %v1136
  %v1244 = vadd.f32 %v1243, %v1137
  %v1245 = vadd.f32 %v1244, %v1138
  %v1246 = vadd.f32 %v1245, %v1139
  %v1247 = vadd.f32 %v1246, %v1140
  %v1248 = vadd.f32 %v1247, %v1141
  %v1249 = vadd.f32 %v1248, %v1142
  %v1250 = vadd.f32 %v1249, %v1143
  %v1251 = vadd.f32 %v1250, %v1144
  %v1252 = vadd.f32 %v1251, %v1145
  %v1253 = vadd.f32 %v1252, %v1146
  %v1254 = vadd.f32 %v1253, %v1147
  %v1255 = vadd.f32 %v1254, %v1148
  %v1256 = vadd.f32 %v1255, %v1149
  %v1257 = vadd.f32 %v1256, %v1150
  %v1258 = vadd.f32 %v1257, %v1151
  %v1259 = vadd.f32 %v1258, %v1152
  %v1260 = vadd.f32 %v1259, %v1153
  %v1261 = vadd.f32 %v1260, %v1154
  %v1262 = vadd.f32 %v1261, %v1155
  %v1263 = vadd.f32 %v1262, %v1156
  %v1264 = vadd.f32 %v1263, %v1157
  %v1265 = vadd.f32 %v1264, %v1158
  %v1266 = vadd.f32 %v1265, %v1159
  %v1267 = vadd.f32 %v1266, %v1160
  %v1268 = vadd.f32 %v1267, %v1161
  %v1269 = vadd.f32 %v1268, %v1162
  %v1270 = vadd.f32 %v1269, %v1163
  %v1271 = vadd.f32 %v1270, %v1164
  %v1272 = vadd.f32 %v1271, %v1165
  %v1273 = vadd.f32 %v1272, %v1166
  %v1274 = vadd.f32 %v1273, %v1167
  %v1275 = vadd.f32 %v1274, %v1168
  %v1276 = vadd.f32 %v1275, %v1169
  %v1277 = vadd.f32 %v1276, %v1170
  %v1278 = vadd.f32 %v1277, %v1171
  %v1279 = vadd.f32 %v1278, %v1172
  %v1280 = vadd.f32 %v1279, %v1173
  %v1281 = vadd.f32 %v1280, %v1174
  %v1282 = vadd.f32 %v1281, %v1175
  %v1283 = vadd.f32 %v1282, %v1176
  %v1284 = vadd.f32 %v1283, %v1177
  %v1285 = vadd.f32 %v1284, %v1178
  %v1286 = vadd.f32 %v1285, %v1179
  %v1287 = vadd.f32 %v1286, %v1180
  %v1288 = vadd.f32 %v1287, %v1181
  %v1289 = vadd.f32 %v1288, %v1182
  %v1290 = vadd.f32 %v1289, %v1183
  %v1291 = vadd.f32 %v1290, %v1184
  %v1292 = vadd.f32 %v1291, %v1185
  %v1293 = vadd.f32 %v1292, %v1186
  %v1294 = vadd.f32 %v1293, %v1187
  %v1295 = vadd.f32 %v1294, %v1188
  %v1296 = vadd.f32 %v1295, %v1189
  %v1297 = vadd.f32 %v1296, %v1190
  %v1298 = vadd.f32 %v1297, %v1191
  %v1299 = vadd.f32 %v1298, %v1192
  %v1300 = vadd.f32 %v1299, %v1193
  %v1301 = vadd.f32 %v1300, %v1194
  %v1302 = vadd.f32 %v1301, %v1195
  %v1303 = vadd.f32 %v1302, %v1196
  %v1304 = vadd.f32 %v1303, %v1197
  %v1305 = vadd.f32 %v1304, %v1198
  %v1306 = vadd.f32 %v1305, %v1199
  %v1307 = vadd.f32 %v1306, %v1200
  %v1308 = vadd.f32 %v1307, %v1201
  %v1309 = vadd.f32 %v1308, %v1202
  %v1310 = vadd.f32 %v1309, %v1203
  %v1311 = vadd.f32 %v1310, %v1204
  %v1312 = vadd.f32 %v1311, %v1205
  %v1313 = vadd.f32 %v1312, %v1206
  %v1314 = vadd.f32 %v1313, %v1207
  %v1315 = vadd.f32 %v1314, %v1208
  %v1316 = vadd.f32 %v1315, %v1209
  %v1317 = vadd.f32 %v1316, %v1210
  %v1318 = vadd.f32 %v1317, %v1211
  %v1319 = vadd.f32 %v1318, %v1212
  %v1320 = vadd.f32 %v1319, %v1213
  %v1321 = vadd.f32 %v1320, %v1214
  %v1322 = vadd.f32 %v1321, %v1215
  %v1323 = vadd.f32 %v1322, %v1216
  %v1324 = vadd.f32 %v1323, %v1217
  %v1325 = vadd.f32 %v1324, %v1218
  %v1326 = vadd.f32 %v1325, %v1219
  %v1327 = vadd.f32 %v1326, %v1220
  %v1328 = vadd.f32 %v1327, %v1221
  %v1329 = vadd.f32 %v1328, %v1222
  %v1330 = vadd.f32 %v1329, %v1223
  %v1331 = vadd.f32 %v1330, %v1224
  %v1332 = vadd.f32 %v1331, %v1225
  %v1333 = vadd.f32 %v1332, %v1226
  %v1334 = vrot.slane %v1333, 4
  %v1335 = vadd.f32 %v1333, %v1334
  %v1336 = vrot.slane %v1335, 2
  %v1337 = vadd.f32 %v1335, %v1336
  %v1338 = vrot.slane %v1337, 1
  %v1339 = vadd.f32 %v1337, %v1338
  %1340 = vst [vmem:[%s4] sm:$0x1] %v1339
  // Predicated region
  $region10: #{basic_block_nchw.3} parent=0 // pred_check
    _
  $region11: #{basic_block_nchw.3} parent=0 // pred_check_branch
    %1342 = sbr.rel (0) target = $region13
  $region12: #{basic_block_nchw.3} parent=0 // pred_region
    _
  $region13: #{basic_block_nchw.3} parent=0 // pred_fallthru
    _
  // Predicated region
  $region14: #{basic_block_nchw.3} parent=0 // pred_check
    _
  $region15: #{basic_block_nchw.3} parent=0 // pred_check_branch
    %1344 = sbr.rel (0) target = $region17
  $region16: #{basic_block_nchw.3} parent=0 // pred_region
    _
  $region17: #{basic_block_nchw.3} parent=0 // pred_fallthru
    _
  // Predicated region
  $region18: #{basic_block_nchw.3} parent=0 // pred_check
    _
  $region19: #{basic_block_nchw.3} parent=0 // pred_check_branch
    %1346 = sbr.rel (0) target = $region21
  $region20: #{basic_block_nchw.3} parent=0 // pred_region
    _
  $region21: #{basic_block_nchw.3} parent=0 // pred_fallthru
    _
  // Predicated region
  $region22: #{basic_block_nchw.3} parent=0 // pred_check
    _
  $region23: #{basic_block_nchw.3} parent=0 // pred_check_branch
    %1348 = sbr.rel (0) target = $region25
  $region24: #{basic_block_nchw.3} parent=0 // pred_region
    _
  $region25: #{basic_block_nchw.3} parent=0 // pred_fallthru
    _
  // Predicated region
  $region26: #{basic_block_nchw.3} parent=0 // pred_check
    _
  $region27: #{basic_block_nchw.3} parent=0 // pred_check_branch
    %1350 = sbr.rel (0) target = $region29
  $region28: #{basic_block_nchw.3} parent=0 // pred_region
    _
  $region29: #{basic_block_nchw.3} parent=0 // pred_fallthru
    _
  // Predicated region
  $region30: #{basic_block_nchw.3} parent=0 // pred_check
    _
  $region31: #{basic_block_nchw.3} parent=0 // pred_check_branch
    %1352 = sbr.rel (0) target = $region33
  $region32: #{basic_block_nchw.3} parent=0 // pred_region
    _
  $region33: #{basic_block_nchw.3} parent=0 // pred_fallthru
    _

// kernel: basic_block_nchw.4
$region0: #{basic_block_nchw.4}
  #allocation0 [shape = 'u32[]', space=smem, size = 0x4, offset = 0x4, fixed_abs, tag = 'smem constant byte address 0x4 - core index']
  #allocation1 [shape = 'u32[72,128]{1,0:T(1,128)}', space=vmem, size = 0x9000, scoped, tag = 'internal scratch']
  %s0 = inlined_call_operand.vmem [shape: bf16[864,128], index: 0, kind: input, shape index: {}]
  %s1 = inlined_call_operand.vmem [shape: bf16[3,3,128,128], index: 1, kind: input, shape index: {}]
  %s2 = inlined_call_operand.vmem [shape: f32[1,1,128], index: 2, kind: input, shape index: {}]
  %s3 = inlined_call_operand.vmem [shape: f32[1,1,128], index: 3, kind: input, shape index: {}]
  %s4 = inlined_call_operand.vmem [shape: f32[1,128], index: 4, kind: input, shape index: {}]
  %s5 = inlined_call_operand.vmem [shape: f32[1,128], index: 5, kind: input, shape index: {}]
  %s6 = inlined_call_operand.vmem [shape: bf16[2,16,16,128], index: 6, kind: output, shape index: {0}]
  %s7 = inlined_call_operand.vmem [shape: f32[2,1,128], index: 7, kind: output, shape index: {1}]
  %s8 = inlined_call_operand.vmem [shape: f32[2,1,128], index: 8, kind: output, shape index: {2}]
  %9 = xla_tuple %s6, %s7, %s8
  %s10 = sld [smem:[#allocation0]]
  $region73: #{basic_block_nchw.4} parent=0
    _
  %s12 = ssub.s32 1, %s10
  %s13 = scalar_select 0, %s12, %s10
  loop: start=0, step=1, limit=4
  $region2: #{basic_block_nchw.4} parent=0 // loop_pre_header
    _
  $region3: #{basic_block_nchw.4} parent=0 // loop_header
    %s15 = sphi 0, %s19
    %p16 = scmp.ge.s32.totalorder %s15, 4
    %s25 = sphi 0, %s27
    %s28 = sphi 0, %s25
    %s29 = sphi 0, %s28
    %s45 = sphi 0, %s29
    %s49 = sphi 0, %s49
    %s51 = sphi 0, %s49
    %s52 = sphi 0, %s51
    %s66 = sphi 0, %s52
    %s70 = sphi 0, %s70
    %s72 = sphi 0, %s70
    %s73 = sphi 0, %s72
    %s87 = sphi 0, %s73
    %s91 = sphi 0, %s91
    %s93 = sphi 0, %s91
    %s94 = sphi 0, %s93
    %s108 = sphi 0, %s94
    %s112 = sphi 0, %s112
    %s114 = sphi 0, %s112
    %s115 = sphi 0, %s114
    %s129 = sphi 0, %s115
    %s133 = sphi 0, %s133
    %s135 = sphi 0, %s133
    %s136 = sphi 0, %s135
    %s150 = sphi 0, %s136
    %s156 = sphi 0, %s158
    %s159 = sphi 0, %s156
    %s160 = sphi 0, %s159
    %s176 = sphi 0, %s160
    %s182 = sphi 0, %s184
    %s185 = sphi 0, %s182
    %s186 = sphi 0, %s185
    %s202 = sphi 0, %s186
    %s208 = sphi 0, %s210
    %s211 = sphi 0, %s208
    %s212 = sphi 0, %s211
    %s228 = sphi 0, %s212
  $region4: #{basic_block_nchw.4} parent=0 // loop_header_branch
    %18 = sbr.rel (%p16) target = $region8
  $region5: #{basic_block_nchw.4} parent=0 // loop_body
    %s20 = ssub.s32 %s15, 1
    %s21 = ssub.s32 %s15, 2
    %s22 = sadd.s32 %s15, 1
    %s23 = ssub.s32 %s15, %s22
    %p24 = scmp.eq.s32.totalorder %s23, 0
    %s26 = sadd.s32 %s25, 1
    %s27 = scalar_select %p24, %s25, %s26
    %p30 = pneg %p24
    %p31 = scmp.eq.s32.totalorder %s15, 1
    %p32 = por %p30, %p31
    %p33 = scmp.ne.s32.totalorder %s25, %s28
    %p34 = scmp.eq.s32.totalorder %s15, 0
    %p35 = por %p33, %p34
    %p36 = scmp.ne.s32.totalorder %s25, %s28
    %p37 = scmp.eq.s32.totalorder %s20, 1
    %p38 = por %p36, %p37
    %p39 = scmp.ne.s32.totalorder %s28, %s29
    %p40 = scmp.eq.s32.totalorder %s20, 0
    %p41 = por %p39, %p40
    %p42 = scmp.ne.s32.totalorder %s28, %s29
    %p43 = scmp.eq.s32.totalorder %s21, 1
    %p44 = por %p42, %p43
    %p46 = scmp.ne.s32.totalorder %s29, %s45
    %p47 = scmp.eq.s32.totalorder %s21, 0
    %p48 = por %p46, %p47
    %s50 = sadd.s32 %s49, 1
    %p53 = scmp.eq.s32.totalorder %s15, 1
    %p54 = scmp.ne.s32.totalorder %s49, %s51
    %p55 = scmp.eq.s32.totalorder %s15, 0
    %p56 = por %p54, %p55
    %p57 = scmp.ne.s32.totalorder %s49, %s51
    %p58 = scmp.eq.s32.totalorder %s20, 1
    %p59 = por %p57, %p58
    %p60 = scmp.ne.s32.totalorder %s51, %s52
    %p61 = scmp.eq.s32.totalorder %s20, 0
    %p62 = por %p60, %p61
    %p63 = scmp.ne.s32.totalorder %s51, %s52
    %p64 = scmp.eq.s32.totalorder %s21, 1
    %p65 = por %p63, %p64
    %p67 = scmp.ne.s32.totalorder %s52, %s66
    %p68 = scmp.eq.s32.totalorder %s21, 0
    %p69 = por %p67, %p68
    %s71 = sadd.s32 %s70, 1
    %p74 = scmp.eq.s32.totalorder %s15, 1
    %p75 = scmp.ne.s32.totalorder %s70, %s72
    %p76 = scmp.eq.s32.totalorder %s15, 0
    %p77 = por %p75, %p76
    %p78 = scmp.ne.s32.totalorder %s70, %s72
    %p79 = scmp.eq.s32.totalorder %s20, 1
    %p80 = por %p78, %p79
    %p81 = scmp.ne.s32.totalorder %s72, %s73
    %p82 = scmp.eq.s32.totalorder %s20, 0
    %p83 = por %p81, %p82
    %p84 = scmp.ne.s32.totalorder %s72, %s73
    %p85 = scmp.eq.s32.totalorder %s21, 1
    %p86 = por %p84, %p85
    %p88 = scmp.ne.s32.totalorder %s73, %s87
    %p89 = scmp.eq.s32.totalorder %s21, 0
    %p90 = por %p88, %p89
    %s92 = sadd.s32 %s91, 1
    %p95 = scmp.eq.s32.totalorder %s15, 1
    %p96 = scmp.ne.s32.totalorder %s91, %s93
    %p97 = scmp.eq.s32.totalorder %s15, 0
    %p98 = por %p96, %p97
    %p99 = scmp.ne.s32.totalorder %s91, %s93
    %p100 = scmp.eq.s32.totalorder %s20, 1
    %p101 = por %p99, %p100
    %p102 = scmp.ne.s32.totalorder %s93, %s94
    %p103 = scmp.eq.s32.totalorder %s20, 0
    %p104 = por %p102, %p103
    %p105 = scmp.ne.s32.totalorder %s93, %s94
    %p106 = scmp.eq.s32.totalorder %s21, 1
    %p107 = por %p105, %p106
    %p109 = scmp.ne.s32.totalorder %s94, %s108
    %p110 = scmp.eq.s32.totalorder %s21, 0
    %p111 = por %p109, %p110
    %s113 = sadd.s32 %s112, 1
    %p116 = scmp.eq.s32.totalorder %s15, 1
    %p117 = scmp.ne.s32.totalorder %s112, %s114
    %p118 = scmp.eq.s32.totalorder %s15, 0
    %p119 = por %p117, %p118
    %p120 = scmp.ne.s32.totalorder %s112, %s114
    %p121 = scmp.eq.s32.totalorder %s20, 1
    %p122 = por %p120, %p121
    %p123 = scmp.ne.s32.totalorder %s114, %s115
    %p124 = scmp.eq.s32.totalorder %s20, 0
    %p125 = por %p123, %p124
    %p126 = scmp.ne.s32.totalorder %s114, %s115
    %p127 = scmp.eq.s32.totalorder %s21, 1
    %p128 = por %p126, %p127
    %p130 = scmp.ne.s32.totalorder %s115, %s129
    %p131 = scmp.eq.s32.totalorder %s21, 0
    %p132 = por %p130, %p131
    %s134 = sadd.s32 %s133, 1
    %p137 = scmp.eq.s32.totalorder %s15, 1
    %p138 = scmp.ne.s32.totalorder %s133, %s135
    %p139 = scmp.eq.s32.totalorder %s15, 0
    %p140 = por %p138, %p139
    %p141 = scmp.ne.s32.totalorder %s133, %s135
    %p142 = scmp.eq.s32.totalorder %s20, 1
    %p143 = por %p141, %p142
    %p144 = scmp.ne.s32.totalorder %s135, %s136
    %p145 = scmp.eq.s32.totalorder %s20, 0
    %p146 = por %p144, %p145
    %p147 = scmp.ne.s32.totalorder %s135, %s136
    %p148 = scmp.eq.s32.totalorder %s21, 1
    %p149 = por %p147, %p148
    %p151 = scmp.ne.s32.totalorder %s136, %s150
    %p152 = scmp.eq.s32.totalorder %s21, 0
    %p153 = por %p151, %p152
    %s154 = ssub.s32 %s15, %s22
    %p155 = scmp.eq.s32.totalorder %s154, 0
    %s157 = sadd.s32 %s156, 1
    %s158 = scalar_select %p155, %s156, %s157
    %p161 = pneg %p155
    %p162 = scmp.eq.s32.totalorder %s15, 1
    %p163 = por %p161, %p162
    %p164 = scmp.ne.s32.totalorder %s156, %s159
    %p165 = scmp.eq.s32.totalorder %s15, 0
    %p166 = por %p164, %p165
    %p167 = scmp.ne.s32.totalorder %s156, %s159
    %p168 = scmp.eq.s32.totalorder %s20, 1
    %p169 = por %p167, %p168
    %p170 = scmp.ne.s32.totalorder %s159, %s160
    %p171 = scmp.eq.s32.totalorder %s20, 0
    %p172 = por %p170, %p171
    %p173 = scmp.ne.s32.totalorder %s159, %s160
    %p174 = scmp.eq.s32.totalorder %s21, 1
    %p175 = por %p173, %p174
    %p177 = scmp.ne.s32.totalorder %s160, %s176
    %p178 = scmp.eq.s32.totalorder %s21, 0
    %p179 = por %p177, %p178
    %s180 = ssub.s32 %s15, %s22
    %p181 = scmp.eq.s32.totalorder %s180, 0
    %s183 = sadd.s32 %s182, 1
    %s184 = scalar_select %p181, %s182, %s183
    %p187 = pneg %p181
    %p188 = scmp.eq.s32.totalorder %s15, 1
    %p189 = por %p187, %p188
    %p190 = scmp.ne.s32.totalorder %s182, %s185
    %p191 = scmp.eq.s32.totalorder %s15, 0
    %p192 = por %p190, %p191
    %p193 = scmp.ne.s32.totalorder %s182, %s185
    %p194 = scmp.eq.s32.totalorder %s20, 1
    %p195 = por %p193, %p194
    %p196 = scmp.ne.s32.totalorder %s185, %s186
    %p197 = scmp.eq.s32.totalorder %s20, 0
    %p198 = por %p196, %p197
    %p199 = scmp.ne.s32.totalorder %s185, %s186
    %p200 = scmp.eq.s32.totalorder %s21, 1
    %p201 = por %p199, %p200
    %p203 = scmp.ne.s32.totalorder %s186, %s202
    %p204 = scmp.eq.s32.totalorder %s21, 0
    %p205 = por %p203, %p204
    %s206 = ssub.s32 %s15, %s22
    %p207 = scmp.eq.s32.totalorder %s206, 0
    %s209 = sadd.s32 %s208, 1
    %s210 = scalar_select %p207, %s208, %s209
    %p213 = pneg %p207
    %p214 = scmp.eq.s32.totalorder %s15, 1
    %p215 = por %p213, %p214
    %p216 = scmp.ne.s32.totalorder %s208, %s211
    %p217 = scmp.eq.s32.totalorder %s15, 0
    %p218 = por %p216, %p217
    %p219 = scmp.ne.s32.totalorder %s208, %s211
    %p220 = scmp.eq.s32.totalorder %s20, 1
    %p221 = por %p219, %p220
    %p222 = scmp.ne.s32.totalorder %s211, %s212
    %p223 = scmp.eq.s32.totalorder %s20, 0
    %p224 = por %p222, %p223
    %p225 = scmp.ne.s32.totalorder %s211, %s212
    %p226 = scmp.eq.s32.totalorder %s21, 1
    %p227 = por %p225, %p226
    %p229 = scmp.ne.s32.totalorder %s212, %s228
    %p230 = scmp.eq.s32.totalorder %s21, 0
    %p231 = por %p229, %p230
    %p232 = scmp.le.s32.totalorder 1, %s15
    %p233 = scmp.lt.s32.totalorder %s15, 3
    %p234 = pnand %p232, %p233
    %p235 = pneg %p234
    // Predicated region
    $region9: #{basic_block_nchw.4} parent=5 // pred_check
      _
    $region10: #{basic_block_nchw.4} parent=5 // pred_check_branch
      %237 = sbr.rel (%p234) target = $region12
    $region11: #{basic_block_nchw.4} parent=5 // pred_region
      %s238 = ssub.s32 %s15, 1
      // Predicated region
      $region13: #{basic_block_nchw.4} parent=11 // pred_check
        %p239 = pneg %p62
      $region14: #{basic_block_nchw.4} parent=11 // pred_check_branch
        %241 = sbr.rel (%p239) target = $region16
      $region15: #{basic_block_nchw.4} parent=11 // pred_region
        _
      $region16: #{basic_block_nchw.4} parent=11 // pred_fallthru
        _
      // Predicated region
      $region17: #{basic_block_nchw.4} parent=11 // pred_check
        %p242 = pneg %p83
      $region18: #{basic_block_nchw.4} parent=11 // pred_check_branch
        %244 = sbr.rel (%p242) target = $region20
      $region19: #{basic_block_nchw.4} parent=11 // pred_region
        _
      $region20: #{basic_block_nchw.4} parent=11 // pred_fallthru
        _
      // Predicated region
      $region21: #{basic_block_nchw.4} parent=11 // pred_check
        %p245 = pneg %p104
      $region22: #{basic_block_nchw.4} parent=11 // pred_check_branch
        %247 = sbr.rel (%p245) target = $region24
      $region23: #{basic_block_nchw.4} parent=11 // pred_region
        _
      $region24: #{basic_block_nchw.4} parent=11 // pred_fallthru
        _
      // Predicated region
      $region25: #{basic_block_nchw.4} parent=11 // pred_check
        %p248 = pneg %p125
      $region26: #{basic_block_nchw.4} parent=11 // pred_check_branch
        %250 = sbr.rel (%p248) target = $region28
      $region27: #{basic_block_nchw.4} parent=11 // pred_region
        _
      $region28: #{basic_block_nchw.4} parent=11 // pred_fallthru
        _
      // Predicated region
      $region29: #{basic_block_nchw.4} parent=11 // pred_check
        %p251 = pneg %p146
      $region30: #{basic_block_nchw.4} parent=11 // pred_check_branch
        %253 = sbr.rel (%p251) target = $region32
      $region31: #{basic_block_nchw.4} parent=11 // pred_region
        _
      $region32: #{basic_block_nchw.4} parent=11 // pred_fallthru
        _
    $region12: #{basic_block_nchw.4} parent=5 // pred_fallthru
      _
    %p254 = scmp.lt.s32.totalorder %s15, 2
    // Predicated region
    $region33: #{basic_block_nchw.4} parent=5 // pred_check
      %p255 = pneg %p254
    $region34: #{basic_block_nchw.4} parent=5 // pred_check_branch
      %257 = sbr.rel (%p255) target = $region36
    $region35: #{basic_block_nchw.4} parent=5 // pred_region
      // Predicated region
      $region37: #{basic_block_nchw.4} parent=35 // pred_check
        %p258 = pneg %p35
      $region38: #{basic_block_nchw.4} parent=35 // pred_check_branch
        %260 = sbr.rel (%p258) target = $region40
      $region39: #{basic_block_nchw.4} parent=35 // pred_region
        %s261 = smul.u32 54, %s15
        %p262 = scmp.lt.s32.totalorder %s261, 107
        %s263 = scalar_select %p262, %s261, 107
        %s264 = smul.addr %s263, 4
        %s265 = scalar_lea.vmem %s0, %s264
        %s266 = smul.u32 54, %s15
      $region40: #{basic_block_nchw.4} parent=35 // pred_fallthru
        _
    $region36: #{basic_block_nchw.4} parent=5 // pred_fallthru
      _
    %p267 = scmp.le.s32.totalorder 1, %s15
    %p268 = scmp.lt.s32.totalorder %s15, 3
    %p269 = pnand %p267, %p268
    %p270 = pneg %p269
    // Predicated region
    $region41: #{basic_block_nchw.4} parent=5 // pred_check
      _
    $region42: #{basic_block_nchw.4} parent=5 // pred_check_branch
      %272 = sbr.rel (%p269) target = $region44
    $region43: #{basic_block_nchw.4} parent=5 // pred_region
      %s273 = ssub.s32 %s15, 1
      %s274 = smul.u32 54, %s20
      %p275 = scmp.lt.s32.totalorder %s274, 107
      %s276 = scalar_select %p275, %s274, 107
      %s277 = smul.addr %s276, 4
      %s278 = scalar_lea.vmem %s0, %s277
      %p279 = pneg %p41
      %p280 = pneg %p38
      %p281 = pneg %p62
      %p282 = pneg %p59
      %p283 = pneg %p83
      %p284 = pneg %p80
      %p285 = pneg %p104
      %p286 = pneg %p101
      %p287 = pneg %p125
      %p288 = pneg %p122
      %p289 = pneg %p146
      %p290 = pneg %p143
      %p291 = pneg %p172
      %p292 = pneg %p169
      %p293 = scmp.lt.s32.totalorder %s20, 1
      %s294 = scalar_select %p293, %s20, 1
      %s295 = smul.addr %s294, 32
      %s296 = smul.addr %s295, 4
      %s297 = scalar_lea.vmem %s6, %s296
      %p298 = pneg %p198
      %p299 = pneg %p195
      %p300 = scmp.lt.s32.totalorder %s20, 1
      %s301 = scalar_select %p300, %s20, 1
      %s302 = scalar_lea.vmem %s7, %s301
      %p303 = pneg %p224
      %p304 = pneg %p221
      %p305 = scmp.lt.s32.totalorder %s20, 1
      %s306 = scalar_select %p305, %s20, 1
      %s307 = scalar_lea.vmem %s8, %s306
      %s308 = smul.u32 54, %s20
      %p309 = scmp.lt.s32.totalorder %s308, 107
      %s310 = scalar_select %p309, %s308, 107
      %s311 = smul.addr %s310, 4
      %s312 = scalar_lea.vmem %s0, %s311
      %s313 = smul.u32 54, %s20
      %p314 = scmp.lt.s32.totalorder %s20, 1
      %s315 = scalar_select %p314, %s20, 1
      %s316 = smul.addr %s315, 32
      %s317 = smul.addr %s316, 4
      %s318 = scalar_lea.vmem %s6, %s317
      %p319 = scmp.lt.s32.totalorder %s20, 1
      %s320 = scalar_select %p319, %s20, 1
      %s321 = scalar_lea.vmem %s7, %s320
      %p322 = scmp.lt.s32.totalorder %s20, 1
      %s323 = scalar_select %p322, %s20, 1
      %s324 = scalar_lea.vmem %s8, %s323
      %v325 = vld [vmem:[%s2] sm:$0x1]
      %v326 = vadd.f32 %v325, 0.0
      %v327 = vmul.f32 %v326, 0.001953125
      %v328 = vld [vmem:[%s3] sm:$0x1]
      %v329 = vadd.f32 %v328, 0.0
      %v330 = vmul.f32 %v329, 0.001953125
      %v331 = vmul.f32 %v327, %v327
      %v332 = vsub.f32 %v330, %v331
      %v333 = vmax.f32 %v332, 0.0
      %v334 = vld [vmem:[%s4] sm:$0x1]
      %v335 = vadd.f32 %v333, 1e-05
      %v336 = vrsqrt.pop %v335
      %v337 = vmul.f32 %v336, %v335
      %v338 = vmul.f32 %v337, %v336
      %v339 = vmul.f32 0.5, %v338
      %v340 = vsub.f32 1.5, %v339
      %v341 = vmul.f32 %v336, %v340
      %vm342 = vweird.f32 %v335
      %vm343 = vweird.f32 %v336
      %vm344 = vmor %vm342, %vm343
      %v345 = vsel %vm344, %v336, %v341
      %v346 = vmul.f32 %v334, %v345
      %v347 = vld [vmem:[%s5] sm:$0x1]
      %v348 = vmul.f32 %v327, %v346
      %v349 = vsub.f32 %v347, %v348
      %v350 = vld [vmem:[%s312] sm:$0xf]
      %v351 = vld [vmem:[%s312 + $0x4] sm:$0xf]
      %v352 = vld [vmem:[%s312 + $0x8] sm:$0xf]
      %v353 = vld [vmem:[%s312 + $0xc] sm:$0xf]
      %v354 = vld [vmem:[%s312 + $0x10] sm:$0xf]
      %v355 = vld [vmem:[%s312 + $0x14] sm:$0xf]
      %v356 = vld [vmem:[%s312 + $0x18] sm:$0xf]
      %v357 = vld [vmem:[%s312 + $0x1c] sm:$0xf]
      %v358 = vld [vmem:[%s312 + $0x20] sm:$0xf]
      %v359 = vld [vmem:[%s312 + $0x24] sm:$0xf]
      %v360 = vld [vmem:[%s312 + $0x28] sm:$0xf]
      %v361 = vld [vmem:[%s312 + $0x2c] sm:$0xf]
      %v362 = vld [vmem:[%s312 + $0x30] sm:$0xf]
      %v363 = vld [vmem:[%s312 + $0x34] sm:$0xf]
      %v364 = vld [vmem:[%s312 + $0x38] sm:$0xf]
      %v365 = vld [vmem:[%s312 + $0x3c] sm:$0xf]
      %v366 = vld [vmem:[%s312 + $0x40] sm:$0xf]
      %v367 = vld [vmem:[%s312 + $0x44] sm:$0xf]
      %v368 = vld [vmem:[%s312 + $0x48] sm:$0xf]
      %v369 = vld [vmem:[%s312 + $0x4c] sm:$0xf]
      %v370 = vld [vmem:[%s312 + $0x50] sm:$0xf]
      %v371 = vld [vmem:[%s312 + $0x54] sm:$0xf]
      %v372 = vld [vmem:[%s312 + $0x58] sm:$0xf]
      %v373 = vld [vmem:[%s312 + $0x5c] sm:$0xf]
      %v374 = vld [vmem:[%s312 + $0x60] sm:$0xf]
      %v375 = vld [vmem:[%s312 + $0x64] sm:$0xf]
      %v376 = vld [vmem:[%s312 + $0x68] sm:$0xf]
      %v377 = vld [vmem:[%s312 + $0x6c] sm:$0xf]
      %v378 = vld [vmem:[%s312 + $0x70] sm:$0xf]
      %v379 = vld [vmem:[%s312 + $0x74] sm:$0xf]
      %v380 = vld [vmem:[%s312 + $0x78] sm:$0xf]
      %v381 = vld [vmem:[%s312 + $0x7c] sm:$0xf]
      %v382 = vld [vmem:[%s312 + $0x80] sm:$0xf]
      %v383 = vld [vmem:[%s312 + $0x84] sm:$0xf]
      %v384 = vld [vmem:[%s312 + $0x88] sm:$0xf]
      %v385 = vld [vmem:[%s312 + $0x8c] sm:$0xf]
      %v386 = vld [vmem:[%s312 + $0x90] sm:$0xf]
      %v387 = vld [vmem:[%s312 + $0x94] sm:$0xf]
      %v388 = vld [vmem:[%s312 + $0x98] sm:$0xf]
      %v389 = vld [vmem:[%s312 + $0x9c] sm:$0xf]
      %v390 = vld [vmem:[%s312 + $0xa0] sm:$0xf]
      %v391 = vld [vmem:[%s312 + $0xa4] sm:$0xf]
      %v392 = vld [vmem:[%s312 + $0xa8] sm:$0xf]
      %v393 = vld [vmem:[%s312 + $0xac] sm:$0xf]
      %v394 = vld [vmem:[%s312 + $0xb0] sm:$0xf]
      %v395 = vld [vmem:[%s312 + $0xb4] sm:$0xf]
      %v396 = vld [vmem:[%s312 + $0xb8] sm:$0xf]
      %v397 = vld [vmem:[%s312 + $0xbc] sm:$0xf]
      %v398 = vld [vmem:[%s312 + $0xc0] sm:$0xf]
      %v399 = vld [vmem:[%s312 + $0xc4] sm:$0xf]
      %v400 = vld [vmem:[%s312 + $0xc8] sm:$0xf]
      %v401 = vld [vmem:[%s312 + $0xcc] sm:$0xf]
      %v402 = vld [vmem:[%s312 + $0xd0] sm:$0xf]
      %v403 = vld [vmem:[%s312 + $0xd4] sm:$0xf]
      %v404 = vunpack.c.l.bf16 %v350
      %v405 = vunpack.c.l.bf16 %v351
      %v406 = vunpack.c.l.bf16 %v352
      %v407 = vunpack.c.l.bf16 %v353
      %v408 = vunpack.c.l.bf16 %v354
      %v409 = vunpack.c.l.bf16 %v355
      %v410 = vunpack.c.l.bf16 %v356
      %v411 = vunpack.c.l.bf16 %v357
      %v412 = vunpack.c.l.bf16 %v358
      %v413 = vunpack.c.l.bf16 %v359
      %v414 = vunpack.c.l.bf16 %v360
      %v415 = vunpack.c.l.bf16 %v361
      %v416 = vunpack.c.l.bf16 %v362
      %v417 = vunpack.c.l.bf16 %v363
      %v418 = vunpack.c.l.bf16 %v364
      %v419 = vunpack.c.l.bf16 %v365
      %v420 = vunpack.c.l.bf16 %v366
      %v421 = vunpack.c.l.bf16 %v367
      %v422 = vunpack.c.l.bf16 %v368
      %v423 = vunpack.c.l.bf16 %v369
      %v424 = vunpack.c.l.bf16 %v370
      %v425 = vunpack.c.l.bf16 %v371
      %v426 = vunpack.c.l.bf16 %v372
      %v427 = vunpack.c.l.bf16 %v373
      %v428 = vunpack.c.l.bf16 %v374
      %v429 = vunpack.c.l.bf16 %v375
      %v430 = vunpack.c.l.bf16 %v376
      %v431 = vunpack.c.l.bf16 %v377
      %v432 = vunpack.c.l.bf16 %v378
      %v433 = vunpack.c.l.bf16 %v379
      %v434 = vunpack.c.l.bf16 %v380
      %v435 = vunpack.c.l.bf16 %v381
      %v436 = vunpack.c.l.bf16 %v382
      %v437 = vunpack.c.l.bf16 %v383
      %v438 = vunpack.c.l.bf16 %v384
      %v439 = vunpack.c.l.bf16 %v385
      %v440 = vunpack.c.l.bf16 %v386
      %v441 = vunpack.c.l.bf16 %v387
      %v442 = vunpack.c.l.bf16 %v388
      %v443 = vunpack.c.l.bf16 %v389
      %v444 = vunpack.c.l.bf16 %v390
      %v445 = vunpack.c.l.bf16 %v391
      %v446 = vunpack.c.l.bf16 %v392
      %v447 = vunpack.c.l.bf16 %v393
      %v448 = vunpack.c.l.bf16 %v394
      %v449 = vunpack.c.l.bf16 %v395
      %v450 = vunpack.c.l.bf16 %v396
      %v451 = vunpack.c.l.bf16 %v397
      %v452 = vunpack.c.l.bf16 %v398
      %v453 = vunpack.c.l.bf16 %v399
      %v454 = vunpack.c.l.bf16 %v400
      %v455 = vunpack.c.l.bf16 %v401
      %v456 = vunpack.c.l.bf16 %v402
      %v457 = vunpack.c.l.bf16 %v403
      %v459 = vperm.slane %v346, 0
      %v461 = vmul.f32 %v404, %v459
      %v462 = vmul.f32 %v405, %v459
      %v463 = vmul.f32 %v406, %v459
      %v464 = vmul.f32 %v407, %v459
      %v465 = vmul.f32 %v408, %v459
      %v466 = vmul.f32 %v409, %v459
      %v467 = vmul.f32 %v410, %v459
      %v468 = vmul.f32 %v411, %v459
      %v469 = vmul.f32 %v412, %v459
      %v470 = vmul.f32 %v413, %v459
      %v471 = vmul.f32 %v414, %v459
      %v472 = vmul.f32 %v415, %v459
      %v473 = vmul.f32 %v416, %v459
      %v474 = vmul.f32 %v417, %v459
      %v475 = vmul.f32 %v418, %v459
      %v476 = vmul.f32 %v419, %v459
      %v477 = vmul.f32 %v420, %v459
      %v478 = vmul.f32 %v421, %v459
      %v479 = vmul.f32 %v422, %v459
      %v480 = vmul.f32 %v423, %v459
      %v481 = vmul.f32 %v424, %v459
      %v482 = vmul.f32 %v425, %v459
      %v483 = vmul.f32 %v426, %v459
      %v484 = vmul.f32 %v427, %v459
      %v485 = vmul.f32 %v428, %v459
      %v486 = vmul.f32 %v429, %v459
      %v487 = vmul.f32 %v430, %v459
      %v488 = vmul.f32 %v431, %v459
      %v489 = vmul.f32 %v432, %v459
      %v490 = vmul.f32 %v433, %v459
      %v491 = vmul.f32 %v434, %v459
      %v492 = vmul.f32 %v435, %v459
      %v493 = vmul.f32 %v436, %v459
      %v494 = vmul.f32 %v437, %v459
      %v495 = vmul.f32 %v438, %v459
      %v496 = vmul.f32 %v439, %v459
      %v497 = vmul.f32 %v440, %v459
      %v498 = vmul.f32 %v441, %v459
      %v499 = vmul.f32 %v442, %v459
      %v500 = vmul.f32 %v443, %v459
      %v501 = vmul.f32 %v444, %v459
      %v502 = vmul.f32 %v445, %v459
      %v503 = vmul.f32 %v446, %v459
      %v504 = vmul.f32 %v447, %v459
      %v505 = vmul.f32 %v448, %v459
      %v506 = vmul.f32 %v449, %v459
      %v507 = vmul.f32 %v450, %v459
      %v508 = vmul.f32 %v451, %v459
      %v509 = vmul.f32 %v452, %v459
      %v510 = vmul.f32 %v453, %v459
      %v511 = vmul.f32 %v454, %v459
      %v512 = vmul.f32 %v455, %v459
      %v513 = vmul.f32 %v456, %v459
      %v514 = vmul.f32 %v457, %v459
      %v516 = vperm.slane %v349, 0
      %v518 = vadd.f32 %v461, %v516
      %v519 = vadd.f32 %v462, %v516
      %v520 = vadd.f32 %v463, %v516
      %v521 = vadd.f32 %v464, %v516
      %v522 = vadd.f32 %v465, %v516
      %v523 = vadd.f32 %v466, %v516
      %v524 = vadd.f32 %v467, %v516
      %v525 = vadd.f32 %v468, %v516
      %v526 = vadd.f32 %v469, %v516
      %v527 = vadd.f32 %v470, %v516
      %v528 = vadd.f32 %v471, %v516
      %v529 = vadd.f32 %v472, %v516
      %v530 = vadd.f32 %v473, %v516
      %v531 = vadd.f32 %v474, %v516
      %v532 = vadd.f32 %v475, %v516
      %v533 = vadd.f32 %v476, %v516
      %v534 = vadd.f32 %v477, %v516
      %v535 = vadd.f32 %v478, %v516
      %v536 = vadd.f32 %v479, %v516
      %v537 = vadd.f32 %v480, %v516
      %v538 = vadd.f32 %v481, %v516
      %v539 = vadd.f32 %v482, %v516
      %v540 = vadd.f32 %v483, %v516
      %v541 = vadd.f32 %v484, %v516
      %v542 = vadd.f32 %v485, %v516
      %v543 = vadd.f32 %v486, %v516
      %v544 = vadd.f32 %v487, %v516
      %v545 = vadd.f32 %v488, %v516
      %v546 = vadd.f32 %v489, %v516
      %v547 = vadd.f32 %v490, %v516
      %v548 = vadd.f32 %v491, %v516
      %v549 = vadd.f32 %v492, %v516
      %v550 = vadd.f32 %v493, %v516
      %v551 = vadd.f32 %v494, %v516
      %v552 = vadd.f32 %v495, %v516
      %v553 = vadd.f32 %v496, %v516
      %v554 = vadd.f32 %v497, %v516
      %v555 = vadd.f32 %v498, %v516
      %v556 = vadd.f32 %v499, %v516
      %v557 = vadd.f32 %v500, %v516
      %v558 = vadd.f32 %v501, %v516
      %v559 = vadd.f32 %v502, %v516
      %v560 = vadd.f32 %v503, %v516
      %v561 = vadd.f32 %v504, %v516
      %v562 = vadd.f32 %v505, %v516
      %v563 = vadd.f32 %v506, %v516
      %v564 = vadd.f32 %v507, %v516
      %v565 = vadd.f32 %v508, %v516
      %v566 = vadd.f32 %v509, %v516
      %v567 = vadd.f32 %v510, %v516
      %v568 = vadd.f32 %v511, %v516
      %v569 = vadd.f32 %v512, %v516
      %v570 = vadd.f32 %v513, %v516
      %v571 = vadd.f32 %v514, %v516
      %v572 = vmax.f32 %v518, 0.0
      %v573 = vmax.f32 %v519, 0.0
      %v574 = vmax.f32 %v520, 0.0
      %v575 = vmax.f32 %v521, 0.0
      %v576 = vmax.f32 %v522, 0.0
      %v577 = vmax.f32 %v523, 0.0
      %v578 = vmax.f32 %v524, 0.0
      %v579 = vmax.f32 %v525, 0.0
      %v580 = vmax.f32 %v526, 0.0
      %v581 = vmax.f32 %v527, 0.0
      %v582 = vmax.f32 %v528, 0.0
      %v583 = vmax.f32 %v529, 0.0
      %v584 = vmax.f32 %v530, 0.0
      %v585 = vmax.f32 %v531, 0.0
      %v586 = vmax.f32 %v532, 0.0
      %v587 = vmax.f32 %v533, 0.0
      %v588 = vmax.f32 %v534, 0.0
      %v589 = vmax.f32 %v535, 0.0
      %v590 = vmax.f32 %v536, 0.0
      %v591 = vmax.f32 %v537, 0.0
      %v592 = vmax.f32 %v538, 0.0
      %v593 = vmax.f32 %v539, 0.0
      %v594 = vmax.f32 %v540, 0.0
      %v595 = vmax.f32 %v541, 0.0
      %v596 = vmax.f32 %v542, 0.0
      %v597 = vmax.f32 %v543, 0.0
      %v598 = vmax.f32 %v544, 0.0
      %v599 = vmax.f32 %v545, 0.0
      %v600 = vmax.f32 %v546, 0.0
      %v601 = vmax.f32 %v547, 0.0
      %v602 = vmax.f32 %v548, 0.0
      %v603 = vmax.f32 %v549, 0.0
      %v604 = vmax.f32 %v550, 0.0
      %v605 = vmax.f32 %v551, 0.0
      %v606 = vmax.f32 %v552, 0.0
      %v607 = vmax.f32 %v553, 0.0
      %v608 = vmax.f32 %v554, 0.0
      %v609 = vmax.f32 %v555, 0.0
      %v610 = vmax.f32 %v556, 0.0
      %v611 = vmax.f32 %v557, 0.0
      %v612 = vmax.f32 %v558, 0.0
      %v613 = vmax.f32 %v559, 0.0
      %v614 = vmax.f32 %v560, 0.0
      %v615 = vmax.f32 %v561, 0.0
      %v616 = vmax.f32 %v562, 0.0
      %v617 = vmax.f32 %v563, 0.0
      %v618 = vmax.f32 %v564, 0.0
      %v619 = vmax.f32 %v565, 0.0
      %v620 = vmax.f32 %v566, 0.0
      %v621 = vmax.f32 %v567, 0.0
      %v622 = vmax.f32 %v568, 0.0
      %v623 = vmax.f32 %v569, 0.0
      %v624 = vmax.f32 %v570, 0.0
      %v625 = vmax.f32 %v571, 0.0
      %v626 = vlaneseq
      %v627 = vshrl.u32 %v626, 7
      %v628 = vadd.s32 %v627, 8
      %v629 = vadd.s32 %v627, 16
      %vm630 = vcmp.ge.s32.totalorder %v627, 1
      %vm631 = vcmp.ge.s32.totalorder %v628, 1
      %vm632 = vcmp.ge.s32.totalorder %v629, 1
      %vm633 = vmand 0, %vm630
      %vm634 = vmand 0, %vm631
      %vm635 = vmand 0, %vm632
      %vm636 = vmand 1, %vm630
      %vm637 = vmand 1, %vm631
      %vm638 = vmand 1, %vm632
      %vm639 = vcmp.le.s32.totalorder %v627, 16
      %vm640 = vcmp.le.s32.totalorder %v628, 16
      %vm641 = vcmp.le.s32.totalorder %v629, 16
      %vm642 = vmand %vm633, %vm639
      %vm643 = vmand %vm634, %vm640
      %vm644 = vmand %vm635, %vm641
      %vm645 = vmand %vm636, %vm639
      %vm646 = vmand %vm637, %vm640
      %vm647 = vmand %vm638, %vm641
      %v648 = vsel %vm642, 1, 0
      %v649 = vsel %vm643, 1, 0
      %v650 = vsel %vm644, 1, 0
      %v651 = vsel %vm645, 1, 0
      %v652 = vsel %vm646, 1, 0
      %v653 = vsel %vm647, 1, 0
      %vm654 = vcmp.eq.s32.totalorder %v648, 1
      %vm655 = vcmp.eq.s32.totalorder %v649, 1
      %vm656 = vcmp.eq.s32.totalorder %v650, 1
      %vm657 = vcmp.eq.s32.totalorder %v651, 1
      %vm658 = vcmp.eq.s32.totalorder %v652, 1
      %vm659 = vcmp.eq.s32.totalorder %v653, 1
      %v660 = vsel %vm654, %v572, 0.0
      %v661 = vsel %vm655, %v573, 0.0
      %v662 = vsel %vm656, %v574, 0.0
      %v663 = vsel %vm657, %v575, 0.0
      %v664 = vsel %vm658, %v576, 0.0
      %v665 = vsel %vm659, %v577, 0.0
      %v666 = vsel %vm657, %v578, 0.0
      %v667 = vsel %vm658, %v579, 0.0
      %v668 = vsel %vm659, %v580, 0.0
      %v669 = vsel %vm657, %v581, 0.0
      %v670 = vsel %vm658, %v582, 0.0
      %v671 = vsel %vm659, %v583, 0.0
      %v672 = vsel %vm657, %v584, 0.0
      %v673 = vsel %vm658, %v585, 0.0
      %v674 = vsel %vm659, %v586, 0.0
      %v675 = vsel %vm657, %v587, 0.0
      %v676 = vsel %vm658, %v588, 0.0
      %v677 = vsel %vm659, %v589, 0.0
      %v678 = vsel %vm657, %v590, 0.0
      %v679 = vsel %vm658, %v591, 0.0
      %v680 = vsel %vm659, %v592, 0.0
      %v681 = vsel %vm657, %v593, 0.0
      %v682 = vsel %vm658, %v594, 0.0
      %v683 = vsel %vm659, %v595, 0.0
      %v684 = vsel %vm657, %v596, 0.0
      %v685 = vsel %vm658, %v597, 0.0
      %v686 = vsel %vm659, %v598, 0.0
      %v687 = vsel %vm657, %v599, 0.0
      %v688 = vsel %vm658, %v600, 0.0
      %v689 = vsel %vm659, %v601, 0.0
      %v690 = vsel %vm657, %v602, 0.0
      %v691 = vsel %vm658, %v603, 0.0
      %v692 = vsel %vm659, %v604, 0.0
      %v693 = vsel %vm657, %v605, 0.0
      %v694 = vsel %vm658, %v606, 0.0
      %v695 = vsel %vm659, %v607, 0.0
      %v696 = vsel %vm657, %v608, 0.0
      %v697 = vsel %vm658, %v609, 0.0
      %v698 = vsel %vm659, %v610, 0.0
      %v699 = vsel %vm657, %v611, 0.0
      %v700 = vsel %vm658, %v612, 0.0
      %v701 = vsel %vm659, %v613, 0.0
      %v702 = vsel %vm657, %v614, 0.0
      %v703 = vsel %vm658, %v615, 0.0
      %v704 = vsel %vm659, %v616, 0.0
      %v705 = vsel %vm657, %v617, 0.0
      %v706 = vsel %vm658, %v618, 0.0
      %v707 = vsel %vm659, %v619, 0.0
      %v708 = vsel %vm657, %v620, 0.0
      %v709 = vsel %vm658, %v621, 0.0
      %v710 = vsel %vm659, %v622, 0.0
      %v711 = vsel %vm654, %v623, 0.0
      %v712 = vsel %vm655, %v624, 0.0
      %v713 = vsel %vm656, %v625, 0.0
      %v714 = vpack.c.bf16 %v660, %v660
      %v715 = vpack.c.bf16 %v661, %v661
      %v716 = vpack.c.bf16 %v662, %v662
      %v717 = vpack.c.bf16 %v663, %v663
      %v718 = vpack.c.bf16 %v664, %v664
      %v719 = vpack.c.bf16 %v665, %v665
      %v720 = vpack.c.bf16 %v666, %v666
      %v721 = vpack.c.bf16 %v667, %v667
      %v722 = vpack.c.bf16 %v668, %v668
      %v723 = vpack.c.bf16 %v669, %v669
      %v724 = vpack.c.bf16 %v670, %v670
      %v725 = vpack.c.bf16 %v671, %v671
      %v726 = vpack.c.bf16 %v672, %v672
      %v727 = vpack.c.bf16 %v673, %v673
      %v728 = vpack.c.bf16 %v674, %v674
      %v729 = vpack.c.bf16 %v675, %v675
      %v730 = vpack.c.bf16 %v676, %v676
      %v731 = vpack.c.bf16 %v677, %v677
      %v732 = vpack.c.bf16 %v678, %v678
      %v733 = vpack.c.bf16 %v679, %v679
      %v734 = vpack.c.bf16 %v680, %v680
      %v735 = vpack.c.bf16 %v681, %v681
      %v736 = vpack.c.bf16 %v682, %v682
      %v737 = vpack.c.bf16 %v683, %v683
      %v738 = vpack.c.bf16 %v684, %v684
      %v739 = vpack.c.bf16 %v685, %v685
      %v740 = vpack.c.bf16 %v686, %v686
      %v741 = vpack.c.bf16 %v687, %v687
      %v742 = vpack.c.bf16 %v688, %v688
      %v743 = vpack.c.bf16 %v689, %v689
      %v744 = vpack.c.bf16 %v690, %v690
      %v745 = vpack.c.bf16 %v691, %v691
      %v746 = vpack.c.bf16 %v692, %v692
      %v747 = vpack.c.bf16 %v693, %v693
      %v748 = vpack.c.bf16 %v694, %v694
      %v749 = vpack.c.bf16 %v695, %v695
      %v750 = vpack.c.bf16 %v696, %v696
      %v751 = vpack.c.bf16 %v697, %v697
      %v752 = vpack.c.bf16 %v698, %v698
      %v753 = vpack.c.bf16 %v699, %v699
      %v754 = vpack.c.bf16 %v700, %v700
      %v755 = vpack.c.bf16 %v701, %v701
      %v756 = vpack.c.bf16 %v702, %v702
      %v757 = vpack.c.bf16 %v703, %v703
      %v758 = vpack.c.bf16 %v704, %v704
      %v759 = vpack.c.bf16 %v705, %v705
      %v760 = vpack.c.bf16 %v706, %v706
      %v761 = vpack.c.bf16 %v707, %v707
      %v762 = vpack.c.bf16 %v708, %v708
      %v763 = vpack.c.bf16 %v709, %v709
      %v764 = vpack.c.bf16 %v710, %v710
      %v765 = vpack.c.bf16 %v711, %v711
      %v766 = vpack.c.bf16 %v712, %v712
      %v767 = vpack.c.bf16 %v713, %v713
      %v768 = vld [vmem:[%s1] sm:$0xf]
      %v769 = vld [vmem:[%s1 + $0x4] sm:$0xf]
      %v770 = vld [vmem:[%s1 + $0x8] sm:$0xf]
      %v771 = vld [vmem:[%s1 + $0xc] sm:$0xf]
      %v772 = vld [vmem:[%s1 + $0x10] sm:$0xf]
      %v773 = vld [vmem:[%s1 + $0x14] sm:$0xf]
      %v774 = vld [vmem:[%s1 + $0x18] sm:$0xf]
      %v775 = vld [vmem:[%s1 + $0x1c] sm:$0xf]
      %v776 = vld [vmem:[%s1 + $0x20] sm:$0xf]
      %v777 = vld [vmem:[%s1 + $0x24] sm:$0xf]
      %v778 = vld [vmem:[%s1 + $0x28] sm:$0xf]
      %v779 = vld [vmem:[%s1 + $0x2c] sm:$0xf]
      %v780 = vld [vmem:[%s1 + $0x30] sm:$0xf]
      %v781 = vld [vmem:[%s1 + $0x34] sm:$0xf]
      %v782 = vld [vmem:[%s1 + $0x38] sm:$0xf]
      %v783 = vld [vmem:[%s1 + $0x3c] sm:$0xf]
      %s784 = scalar_lea.vmem %s1, 192
      %v785 = vld [vmem:[%s784] sm:$0xf]
      %v786 = vld [vmem:[%s784 + $0x4] sm:$0xf]
      %v787 = vld [vmem:[%s784 + $0x8] sm:$0xf]
      %v788 = vld [vmem:[%s784 + $0xc] sm:$0xf]
      %v789 = vld [vmem:[%s784 + $0x10] sm:$0xf]
      %v790 = vld [vmem:[%s784 + $0x14] sm:$0xf]
      %v791 = vld [vmem:[%s784 + $0x18] sm:$0xf]
      %v792 = vld [vmem:[%s784 + $0x1c] sm:$0xf]
      %v793 = vld [vmem:[%s784 + $0x20] sm:$0xf]
      %v794 = vld [vmem:[%s784 + $0x24] sm:$0xf]
      %v795 = vld [vmem:[%s784 + $0x28] sm:$0xf]
      %v796 = vld [vmem:[%s784 + $0x2c] sm:$0xf]
      %v797 = vld [vmem:[%s784 + $0x30] sm:$0xf]
      %v798 = vld [vmem:[%s784 + $0x34] sm:$0xf]
      %v799 = vld [vmem:[%s784 + $0x38] sm:$0xf]
      %v800 = vld [vmem:[%s784 + $0x3c] sm:$0xf]
      %v849 = vunpack.c.l.b16 %v717
      %v850 = vunpack.c.l.b16 %v718
      %v851 = vunpack.c.l.b16 %v719
      %v852 = vunpack.c.l.b16 %v720
      %v853 = vunpack.c.l.b16 %v721
      %v854 = vunpack.c.l.b16 %v722
      %v855 = vunpack.c.l.b16 %v723
      %v856 = vunpack.c.l.b16 %v724
      %v857 = vunpack.c.l.b16 %v725
      %v858 = vunpack.c.l.b16 %v726
      %v859 = vunpack.c.l.b16 %v727
      %v860 = vunpack.c.l.b16 %v728
      %v861 = vunpack.c.l.b16 %v729
      %v862 = vunpack.c.l.b16 %v730
      %v863 = vunpack.c.l.b16 %v731
      %v864 = vunpack.c.l.b16 %v732
      %v865 = vunpack.c.l.b16 %v733
      %v866 = vunpack.c.l.b16 %v734
      %v867 = vunpack.c.l.b16 %v735
      %v868 = vunpack.c.l.b16 %v736
      %v869 = vunpack.c.l.b16 %v737
      %v870 = vunpack.c.l.b16 %v738
      %v871 = vunpack.c.l.b16 %v739
      %v872 = vunpack.c.l.b16 %v740
      %v873 = vunpack.c.l.b16 %v741
      %v874 = vunpack.c.l.b16 %v742
      %v875 = vunpack.c.l.b16 %v743
      %v876 = vunpack.c.l.b16 %v744
      %v877 = vunpack.c.l.b16 %v745
      %v878 = vunpack.c.l.b16 %v746
      %v879 = vunpack.c.l.b16 %v747
      %v880 = vunpack.c.l.b16 %v748
      %v881 = vunpack.c.l.b16 %v749
      %v882 = vunpack.c.l.b16 %v750
      %v883 = vunpack.c.l.b16 %v751
      %v884 = vunpack.c.l.b16 %v752
      %v885 = vunpack.c.l.b16 %v753
      %v886 = vunpack.c.l.b16 %v754
      %v887 = vunpack.c.l.b16 %v755
      %v888 = vunpack.c.l.b16 %v756
      %v889 = vunpack.c.l.b16 %v757
      %v890 = vunpack.c.l.b16 %v758
      %v891 = vunpack.c.l.b16 %v759
      %v892 = vunpack.c.l.b16 %v760
      %v893 = vunpack.c.l.b16 %v761
      %v894 = vunpack.c.l.b16 %v762
      %v895 = vunpack.c.l.b16 %v763
      %v896 = vunpack.c.l.b16 %v764
      %v897 = vpack.c.b16 %v850, %v849
      %v898 = vpack.c.b16 %v852, %v851
      %v899 = vpack.c.b16 %v854, %v853
      %v900 = vpack.c.b16 %v856, %v855
      %v901 = vpack.c.b16 %v858, %v857
      %v902 = vpack.c.b16 %v860, %v859
      %v903 = vpack.c.b16 %v862, %v861
      %v904 = vpack.c.b16 %v864, %v863
      %v905 = vpack.c.b16 %v866, %v865
      %v906 = vpack.c.b16 %v868, %v867
      %v907 = vpack.c.b16 %v870, %v869
      %v908 = vpack.c.b16 %v872, %v871
      %v909 = vpack.c.b16 %v874, %v873
      %v910 = vpack.c.b16 %v876, %v875
      %v911 = vpack.c.b16 %v878, %v877
      %v912 = vpack.c.b16 %v880, %v879
      %v913 = vpack.c.b16 %v882, %v881
      %v914 = vpack.c.b16 %v884, %v883
      %v915 = vpack.c.b16 %v886, %v885
      %v916 = vpack.c.b16 %v888, %v887
      %v917 = vpack.c.b16 %v890, %v889
      %v918 = vpack.c.b16 %v892, %v891
      %v919 = vpack.c.b16 %v894, %v893
      %v920 = vpack.c.b16 %v896, %v895
      %v961 = vunpack.c.l.b16 %v785
      %v962 = vunpack.c.l.b16 %v786
      %v963 = vunpack.c.l.b16 %v787
      %v964 = vunpack.c.l.b16 %v788
      %v965 = vunpack.c.l.b16 %v789
      %v966 = vunpack.c.l.b16 %v790
      %v967 = vunpack.c.l.b16 %v791
      %v968 = vunpack.c.l.b16 %v792
      %v969 = vunpack.c.l.b16 %v793
      %v970 = vunpack.c.l.b16 %v794
      %v971 = vunpack.c.l.b16 %v795
      %v972 = vunpack.c.l.b16 %v796
      %v973 = vunpack.c.l.b16 %v797
      %v974 = vunpack.c.l.b16 %v798
      %v975 = vunpack.c.l.b16 %v799
      %v976 = vunpack.c.l.b16 %v800
      %v977 = vpack.c.b16 %v962, %v961
      %v978 = vpack.c.b16 %v964, %v963
      %v979 = vpack.c.b16 %v966, %v965
      %v980 = vpack.c.b16 %v968, %v967
      %v981 = vpack.c.b16 %v970, %v969
      %v982 = vpack.c.b16 %v972, %v971
      %v983 = vpack.c.b16 %v974, %v973
      %v984 = vpack.c.b16 %v976, %v975
      %993 = vmatpush.bf16.msra.mxu0 %v984
      %994 = vmatpush.bf16.msra.mxu0 %v983
      %995 = vmatpush.bf16.msra.mxu0 %v982
      %996 = vmatpush.bf16.msra.mxu0 %v981
      %997 = vmatpush.bf16.msra.mxu0 %v980
      %998 = vmatpush.bf16.msra.mxu0 %v979
      %999 = vmatpush.bf16.msra.mxu0 %v978
      %1000 = vmatpush.bf16.msra.mxu0 %v977
      %1001 = vmatmul.bf16.gmra.mxu0 %v897
      %v1002 = vpop.f32.mrf.mxu0
      %v1003 = vadd.f32 0.0, %v1002
      %v1004 = vpop.f32.mrf.mxu0
      %v1005 = vadd.f32 0.0, %v1004
      %1006 = vmatmul.bf16.gmra.mxu0 %v898
      %v1007 = vpop.f32.mrf.mxu0
      %v1008 = vadd.f32 0.0, %v1007
      %v1009 = vpop.f32.mrf.mxu0
      %v1010 = vadd.f32 0.0, %v1009
      %1011 = vmatmul.bf16.gmra.mxu0 %v899
      %v1012 = vpop.f32.mrf.mxu0
      %v1013 = vadd.f32 0.0, %v1012
      %v1014 = vpop.f32.mrf.mxu0
      %v1015 = vadd.f32 0.0, %v1014
      %1016 = vmatmul.bf16.gmra.mxu0 %v900
      %v1017 = vpop.f32.mrf.mxu0
      %v1018 = vadd.f32 0.0, %v1017
      %v1019 = vpop.f32.mrf.mxu0
      %v1020 = vadd.f32 0.0, %v1019
      %1021 = vmatmul.bf16.gmra.mxu0 %v901
      %v1022 = vpop.f32.mrf.mxu0
      %v1023 = vadd.f32 0.0, %v1022
      %v1024 = vpop.f32.mrf.mxu0
      %v1025 = vadd.f32 0.0, %v1024
      %1026 = vmatmul.bf16.gmra.mxu0 %v902
      %v1027 = vpop.f32.mrf.mxu0
      %v1028 = vadd.f32 0.0, %v1027
      %v1029 = vpop.f32.mrf.mxu0
      %v1030 = vadd.f32 0.0, %v1029
      %1031 = vmatmul.bf16.gmra.mxu0 %v903
      %v1032 = vpop.f32.mrf.mxu0
      %v1033 = vadd.f32 0.0, %v1032
      %v1034 = vpop.f32.mrf.mxu0
      %v1035 = vadd.f32 0.0, %v1034
      %1036 = vmatmul.bf16.gmra.mxu0 %v904
      %v1037 = vpop.f32.mrf.mxu0
      %v1038 = vadd.f32 0.0, %v1037
      %v1039 = vpop.f32.mrf.mxu0
      %v1040 = vadd.f32 0.0, %v1039
      %1041 = vmatmul.bf16.gmra.mxu0 %v905
      %v1042 = vpop.f32.mrf.mxu0
      %v1043 = vadd.f32 0.0, %v1042
      %v1044 = vpop.f32.mrf.mxu0
      %v1045 = vadd.f32 0.0, %v1044
      %1046 = vmatmul.bf16.gmra.mxu0 %v906
      %v1047 = vpop.f32.mrf.mxu0
      %v1048 = vadd.f32 0.0, %v1047
      %v1049 = vpop.f32.mrf.mxu0
      %v1050 = vadd.f32 0.0, %v1049
      %1051 = vmatmul.bf16.gmra.mxu0 %v907
      %v1052 = vpop.f32.mrf.mxu0
      %v1053 = vadd.f32 0.0, %v1052
      %v1054 = vpop.f32.mrf.mxu0
      %v1055 = vadd.f32 0.0, %v1054
      %1056 = vmatmul.bf16.gmra.mxu0 %v908
      %v1057 = vpop.f32.mrf.mxu0
      %v1058 = vadd.f32 0.0, %v1057
      %v1059 = vpop.f32.mrf.mxu0
      %v1060 = vadd.f32 0.0, %v1059
      %1061 = vmatmul.bf16.gmra.mxu0 %v909
      %v1062 = vpop.f32.mrf.mxu0
      %v1063 = vadd.f32 0.0, %v1062
      %v1064 = vpop.f32.mrf.mxu0
      %v1065 = vadd.f32 0.0, %v1064
      %1066 = vmatmul.bf16.gmra.mxu0 %v910
      %v1067 = vpop.f32.mrf.mxu0
      %v1068 = vadd.f32 0.0, %v1067
      %v1069 = vpop.f32.mrf.mxu0
      %v1070 = vadd.f32 0.0, %v1069
      %1071 = vmatmul.bf16.gmra.mxu0 %v911
      %v1072 = vpop.f32.mrf.mxu0
      %v1073 = vadd.f32 0.0, %v1072
      %v1074 = vpop.f32.mrf.mxu0
      %v1075 = vadd.f32 0.0, %v1074
      %1076 = vmatmul.bf16.gmra.mxu0 %v912
      %v1077 = vpop.f32.mrf.mxu0
      %v1078 = vadd.f32 0.0, %v1077
      %v1079 = vpop.f32.mrf.mxu0
      %v1080 = vadd.f32 0.0, %v1079
      %1081 = vmatmul.bf16.gmra.mxu0 %v913
      %v1082 = vpop.f32.mrf.mxu0
      %v1083 = vadd.f32 0.0, %v1082
      %v1084 = vpop.f32.mrf.mxu0
      %v1085 = vadd.f32 0.0, %v1084
      %1086 = vmatmul.bf16.gmra.mxu0 %v914
      %v1087 = vpop.f32.mrf.mxu0
      %v1088 = vadd.f32 0.0, %v1087
      %v1089 = vpop.f32.mrf.mxu0
      %v1090 = vadd.f32 0.0, %v1089
      %1091 = vmatmul.bf16.gmra.mxu0 %v915
      %v1092 = vpop.f32.mrf.mxu0
      %v1093 = vadd.f32 0.0, %v1092
      %v1094 = vpop.f32.mrf.mxu0
      %v1095 = vadd.f32 0.0, %v1094
      %1096 = vmatmul.bf16.gmra.mxu0 %v916
      %v1097 = vpop.f32.mrf.mxu0
      %v1098 = vadd.f32 0.0, %v1097
      %v1099 = vpop.f32.mrf.mxu0
      %v1100 = vadd.f32 0.0, %v1099
      %1101 = vmatmul.bf16.gmra.mxu0 %v917
      %v1102 = vpop.f32.mrf.mxu0
      %v1103 = vadd.f32 0.0, %v1102
      %v1104 = vpop.f32.mrf.mxu0
      %v1105 = vadd.f32 0.0, %v1104
      %1106 = vmatmul.bf16.gmra.mxu0 %v918
      %v1107 = vpop.f32.mrf.mxu0
      %v1108 = vadd.f32 0.0, %v1107
      %v1109 = vpop.f32.mrf.mxu0
      %v1110 = vadd.f32 0.0, %v1109
      %1111 = vmatmul.bf16.gmra.mxu0 %v919
      %v1112 = vpop.f32.mrf.mxu0
      %v1113 = vadd.f32 0.0, %v1112
      %v1114 = vpop.f32.mrf.mxu0
      %v1115 = vadd.f32 0.0, %v1114
      %1116 = vmatmul.bf16.gmra.mxu0 %v920
      %v1117 = vpop.f32.mrf.mxu0
      %v1118 = vadd.f32 0.0, %v1117
      %v1119 = vpop.f32.mrf.mxu0
      %v1120 = vadd.f32 0.0, %v1119
      %1121 = vdwg.mxu0
      %v1125 = vunpack.c.l.b16 %v714
      %v1126 = vunpack.c.l.b16 %v715
      %v1127 = vunpack.c.l.b16 %v716
      %v1128 = vpack.c.b16 %v1126, %v1125
      %v1129 = vpack.c.b16 %v849, %v1127
      %v1130 = vpack.c.b16 %v851, %v850
      %v1131 = vpack.c.b16 %v853, %v852
      %v1132 = vpack.c.b16 %v855, %v854
      %v1133 = vpack.c.b16 %v857, %v856
      %v1134 = vpack.c.b16 %v859, %v858
      %v1135 = vpack.c.b16 %v861, %v860
      %v1136 = vpack.c.b16 %v863, %v862
      %v1137 = vpack.c.b16 %v865, %v864
      %v1138 = vpack.c.b16 %v867, %v866
      %v1139 = vpack.c.b16 %v869, %v868
      %v1140 = vpack.c.b16 %v871, %v870
      %v1141 = vpack.c.b16 %v873, %v872
      %v1142 = vpack.c.b16 %v875, %v874
      %v1143 = vpack.c.b16 %v877, %v876
      %v1144 = vpack.c.b16 %v879, %v878
      %v1145 = vpack.c.b16 %v881, %v880
      %v1146 = vpack.c.b16 %v883, %v882
      %v1147 = vpack.c.b16 %v885, %v884
      %v1148 = vpack.c.b16 %v887, %v886
      %v1149 = vpack.c.b16 %v889, %v888
      %v1150 = vpack.c.b16 %v891, %v890
      %v1151 = vpack.c.b16 %v893, %v892
      %v1192 = vunpack.c.l.b16 %v768
      %v1193 = vunpack.c.l.b16 %v769
      %v1194 = vunpack.c.l.b16 %v770
      %v1195 = vunpack.c.l.b16 %v771
      %v1196 = vunpack.c.l.b16 %v772
      %v1197 = vunpack.c.l.b16 %v773
      %v1198 = vunpack.c.l.b16 %v774
      %v1199 = vunpack.c.l.b16 %v775
      %v1200 = vunpack.c.l.b16 %v776
      %v1201 = vunpack.c.l.b16 %v777
      %v1202 = vunpack.c.l.b16 %v778
      %v1203 = vunpack.c.l.b16 %v779
      %v1204 = vunpack.c.l.b16 %v780
      %v1205 = vunpack.c.l.b16 %v781
      %v1206 = vunpack.c.l.b16 %v782
      %v1207 = vunpack.c.l.b16 %v783
      %v1208 = vpack.c.b16 %v1193, %v1192
      %v1209 = vpack.c.b16 %v1195, %v1194
      %v1210 = vpack.c.b16 %v1197, %v1196
      %v1211 = vpack.c.b16 %v1199, %v1198
      %v1212 = vpack.c.b16 %v1201, %v1200
      %v1213 = vpack.c.b16 %v1203, %v1202
      %v1214 = vpack.c.b16 %v1205, %v1204
      %v1215 = vpack.c.b16 %v1207, %v1206
      %1224 = vmatpush.bf16.msra.mxu0 %v1215
      %1225 = vmatpush.bf16.msra.mxu0 %v1214
      %1226 = vmatpush.bf16.msra.mxu0 %v1213
      %1227 = vmatpush.bf16.msra.mxu0 %v1212
      %1228 = vmatpush.bf16.msra.mxu0 %v1211
      %1229 = vmatpush.bf16.msra.mxu0 %v1210
      %1230 = vmatpush.bf16.msra.mxu0 %v1209
      %1231 = vmatpush.bf16.msra.mxu0 %v1208
      %1232 = vmatmul.bf16.gmra.mxu0 %v1128
      %v1233 = vpop.f32.mrf.mxu0
      %v1234 = vadd.f32 %v1003, %v1233
      %v1235 = vpop.f32.mrf.mxu0
      %v1236 = vadd.f32 %v1005, %v1235
      %1237 = vmatmul.bf16.gmra.mxu0 %v1129
      %v1238 = vpop.f32.mrf.mxu0
      %v1239 = vadd.f32 %v1008, %v1238
      %v1240 = vpop.f32.mrf.mxu0
      %v1241 = vadd.f32 %v1010, %v1240
      %1242 = vmatmul.bf16.gmra.mxu0 %v1130
      %v1243 = vpop.f32.mrf.mxu0
      %v1244 = vadd.f32 %v1013, %v1243
      %v1245 = vpop.f32.mrf.mxu0
      %v1246 = vadd.f32 %v1015, %v1245
      %1247 = vmatmul.bf16.gmra.mxu0 %v1131
      %v1248 = vpop.f32.mrf.mxu0
      %v1249 = vadd.f32 %v1018, %v1248
      %v1250 = vpop.f32.mrf.mxu0
      %v1251 = vadd.f32 %v1020, %v1250
      %1252 = vmatmul.bf16.gmra.mxu0 %v1132
      %v1253 = vpop.f32.mrf.mxu0
      %v1254 = vadd.f32 %v1023, %v1253
      %v1255 = vpop.f32.mrf.mxu0
      %v1256 = vadd.f32 %v1025, %v1255
      %1257 = vmatmul.bf16.gmra.mxu0 %v1133
      %v1258 = vpop.f32.mrf.mxu0
      %v1259 = vadd.f32 %v1028, %v1258
      %v1260 = vpop.f32.mrf.mxu0
      %v1261 = vadd.f32 %v1030, %v1260
      %1262 = vmatmul.bf16.gmra.mxu0 %v1134
      %v1263 = vpop.f32.mrf.mxu0
      %v1264 = vadd.f32 %v1033, %v1263
      %v1265 = vpop.f32.mrf.mxu0
      %v1266 = vadd.f32 %v1035, %v1265
      %1267 = vmatmul.bf16.gmra.mxu0 %v1135
      %v1268 = vpop.f32.mrf.mxu0
      %v1269 = vadd.f32 %v1038, %v1268
      %v1270 = vpop.f32.mrf.mxu0
      %v1271 = vadd.f32 %v1040, %v1270
      %1272 = vmatmul.bf16.gmra.mxu0 %v1136
      %v1273 = vpop.f32.mrf.mxu0
      %v1274 = vadd.f32 %v1043, %v1273
      %v1275 = vpop.f32.mrf.mxu0
      %v1276 = vadd.f32 %v1045, %v1275
      %1277 = vmatmul.bf16.gmra.mxu0 %v1137
      %v1278 = vpop.f32.mrf.mxu0
      %v1279 = vadd.f32 %v1048, %v1278
      %v1280 = vpop.f32.mrf.mxu0
      %v1281 = vadd.f32 %v1050, %v1280
      %1282 = vmatmul.bf16.gmra.mxu0 %v1138
      %v1283 = vpop.f32.mrf.mxu0
      %v1284 = vadd.f32 %v1053, %v1283
      %v1285 = vpop.f32.mrf.mxu0
      %v1286 = vadd.f32 %v1055, %v1285
      %1287 = vmatmul.bf16.gmra.mxu0 %v1139
      %v1288 = vpop.f32.mrf.mxu0
      %v1289 = vadd.f32 %v1058, %v1288
      %v1290 = vpop.f32.mrf.mxu0
      %v1291 = vadd.f32 %v1060, %v1290
      %1292 = vmatmul.bf16.gmra.mxu0 %v1140
      %v1293 = vpop.f32.mrf.mxu0
      %v1294 = vadd.f32 %v1063, %v1293
      %v1295 = vpop.f32.mrf.mxu0
      %v1296 = vadd.f32 %v1065, %v1295
      %1297 = vmatmul.bf16.gmra.mxu0 %v1141
      %v1298 = vpop.f32.mrf.mxu0
      %v1299 = vadd.f32 %v1068, %v1298
      %v1300 = vpop.f32.mrf.mxu0
      %v1301 = vadd.f32 %v1070, %v1300
      %1302 = vmatmul.bf16.gmra.mxu0 %v1142
      %v1303 = vpop.f32.mrf.mxu0
      %v1304 = vadd.f32 %v1073, %v1303
      %v1305 = vpop.f32.mrf.mxu0
      %v1306 = vadd.f32 %v1075, %v1305
      %1307 = vmatmul.bf16.gmra.mxu0 %v1143
      %v1308 = vpop.f32.mrf.mxu0
      %v1309 = vadd.f32 %v1078, %v1308
      %v1310 = vpop.f32.mrf.mxu0
      %v1311 = vadd.f32 %v1080, %v1310
      %1312 = vmatmul.bf16.gmra.mxu0 %v1144
      %v1313 = vpop.f32.mrf.mxu0
      %v1314 = vadd.f32 %v1083, %v1313
      %v1315 = vpop.f32.mrf.mxu0
      %v1316 = vadd.f32 %v1085, %v1315
      %1317 = vmatmul.bf16.gmra.mxu0 %v1145
      %v1318 = vpop.f32.mrf.mxu0
      %v1319 = vadd.f32 %v1088, %v1318
      %v1320 = vpop.f32.mrf.mxu0
      %v1321 = vadd.f32 %v1090, %v1320
      %1322 = vmatmul.bf16.gmra.mxu0 %v1146
      %v1323 = vpop.f32.mrf.mxu0
      %v1324 = vadd.f32 %v1093, %v1323
      %v1325 = vpop.f32.mrf.mxu0
      %v1326 = vadd.f32 %v1095, %v1325
      %1327 = vmatmul.bf16.gmra.mxu0 %v1147
      %v1328 = vpop.f32.mrf.mxu0
      %v1329 = vadd.f32 %v1098, %v1328
      %v1330 = vpop.f32.mrf.mxu0
      %v1331 = vadd.f32 %v1100, %v1330
      %1332 = vmatmul.bf16.gmra.mxu0 %v1148
      %v1333 = vpop.f32.mrf.mxu0
      %v1334 = vadd.f32 %v1103, %v1333
      %v1335 = vpop.f32.mrf.mxu0
      %v1336 = vadd.f32 %v1105, %v1335
      %1337 = vmatmul.bf16.gmra.mxu0 %v1149
      %v1338 = vpop.f32.mrf.mxu0
      %v1339 = vadd.f32 %v1108, %v1338
      %v1340 = vpop.f32.mrf.mxu0
      %v1341 = vadd.f32 %v1110, %v1340
      %1342 = vmatmul.bf16.gmra.mxu0 %v1150
      %v1343 = vpop.f32.mrf.mxu0
      %v1344 = vadd.f32 %v1113, %v1343
      %v1345 = vpop.f32.mrf.mxu0
      %v1346 = vadd.f32 %v1115, %v1345
      %1347 = vmatmul.bf16.gmra.mxu0 %v1151
      %v1348 = vpop.f32.mrf.mxu0
      %v1349 = vadd.f32 %v1118, %v1348
      %v1350 = vpop.f32.mrf.mxu0
      %v1351 = vadd.f32 %v1120, %v1350
      %1352 = vdwg.mxu0
      %s1353 = scalar_lea.vmem %s1, 384
      %v1354 = vld [vmem:[%s1353] sm:$0xf]
      %v1355 = vld [vmem:[%s1353 + $0x4] sm:$0xf]
      %v1356 = vld [vmem:[%s1353 + $0x8] sm:$0xf]
      %v1357 = vld [vmem:[%s1353 + $0xc] sm:$0xf]
      %v1358 = vld [vmem:[%s1353 + $0x10] sm:$0xf]
      %v1359 = vld [vmem:[%s1353 + $0x14] sm:$0xf]
      %v1360 = vld [vmem:[%s1353 + $0x18] sm:$0xf]
      %v1361 = vld [vmem:[%s1353 + $0x1c] sm:$0xf]
      %v1362 = vld [vmem:[%s1353 + $0x20] sm:$0xf]
      %v1363 = vld [vmem:[%s1353 + $0x24] sm:$0xf]
      %v1364 = vld [vmem:[%s1353 + $0x28] sm:$0xf]
      %v1365 = vld [vmem:[%s1353 + $0x2c] sm:$0xf]
      %v1366 = vld [vmem:[%s1353 + $0x30] sm:$0xf]
      %v1367 = vld [vmem:[%s1353 + $0x34] sm:$0xf]
      %v1368 = vld [vmem:[%s1353 + $0x38] sm:$0xf]
      %v1369 = vld [vmem:[%s1353 + $0x3c] sm:$0xf]
      %v1373 = vunpack.c.l.b16 %v765
      %v1374 = vunpack.c.l.b16 %v766
      %v1375 = vunpack.c.l.b16 %v767
      %v1376 = vpack.c.b16 %v895, %v894
      %v1377 = vpack.c.b16 %v1373, %v896
      %v1378 = vpack.c.b16 %v1375, %v1374
      %v1398 = vunpack.c.l.b16 %v1354
      %v1399 = vunpack.c.l.b16 %v1355
      %v1400 = vunpack.c.l.b16 %v1356
      %v1401 = vunpack.c.l.b16 %v1357
      %v1402 = vunpack.c.l.b16 %v1358
      %v1403 = vunpack.c.l.b16 %v1359
      %v1404 = vunpack.c.l.b16 %v1360
      %v1405 = vunpack.c.l.b16 %v1361
      %v1406 = vunpack.c.l.b16 %v1362
      %v1407 = vunpack.c.l.b16 %v1363
      %v1408 = vunpack.c.l.b16 %v1364
      %v1409 = vunpack.c.l.b16 %v1365
      %v1410 = vunpack.c.l.b16 %v1366
      %v1411 = vunpack.c.l.b16 %v1367
      %v1412 = vunpack.c.l.b16 %v1368
      %v1413 = vunpack.c.l.b16 %v1369
      %v1414 = vpack.c.b16 %v1399, %v1398
      %v1415 = vpack.c.b16 %v1401, %v1400
      %v1416 = vpack.c.b16 %v1403, %v1402
      %v1417 = vpack.c.b16 %v1405, %v1404
      %v1418 = vpack.c.b16 %v1407, %v1406
      %v1419 = vpack.c.b16 %v1409, %v1408
      %v1420 = vpack.c.b16 %v1411, %v1410
      %v1421 = vpack.c.b16 %v1413, %v1412
      %1430 = vmatpush.bf16.msra.mxu0 %v1421
      %1431 = vmatpush.bf16.msra.mxu0 %v1420
      %1432 = vmatpush.bf16.msra.mxu0 %v1419
      %1433 = vmatpush.bf16.msra.mxu0 %v1418
      %1434 = vmatpush.bf16.msra.mxu0 %v1417
      %1435 = vmatpush.bf16.msra.mxu0 %v1416
      %1436 = vmatpush.bf16.msra.mxu0 %v1415
      %1437 = vmatpush.bf16.msra.mxu0 %v1414
      %1438 = vmatmul.bf16.gmra.mxu0 %v1131
      %v1439 = vpop.f32.mrf.mxu0
      %v1440 = vadd.f32 0.0, %v1439
      %v1441 = vpop.f32.mrf.mxu0
      %v1442 = vadd.f32 0.0, %v1441
      %1443 = vmatmul.bf16.gmra.mxu0 %v1132
      %v1444 = vpop.f32.mrf.mxu0
      %v1445 = vadd.f32 0.0, %v1444
      %v1446 = vpop.f32.mrf.mxu0
      %v1447 = vadd.f32 0.0, %v1446
      %1448 = vmatmul.bf16.gmra.mxu0 %v1133
      %v1449 = vpop.f32.mrf.mxu0
      %v1450 = vadd.f32 0.0, %v1449
      %v1451 = vpop.f32.mrf.mxu0
      %v1452 = vadd.f32 0.0, %v1451
      %1453 = vmatmul.bf16.gmra.mxu0 %v1134
      %v1454 = vpop.f32.mrf.mxu0
      %v1455 = vadd.f32 0.0, %v1454
      %v1456 = vpop.f32.mrf.mxu0
      %v1457 = vadd.f32 0.0, %v1456
      %1458 = vmatmul.bf16.gmra.mxu0 %v1135
      %v1459 = vpop.f32.mrf.mxu0
      %v1460 = vadd.f32 0.0, %v1459
      %v1461 = vpop.f32.mrf.mxu0
      %v1462 = vadd.f32 0.0, %v1461
      %1463 = vmatmul.bf16.gmra.mxu0 %v1136
      %v1464 = vpop.f32.mrf.mxu0
      %v1465 = vadd.f32 0.0, %v1464
      %v1466 = vpop.f32.mrf.mxu0
      %v1467 = vadd.f32 0.0, %v1466
      %1468 = vmatmul.bf16.gmra.mxu0 %v1137
      %v1469 = vpop.f32.mrf.mxu0
      %v1470 = vadd.f32 0.0, %v1469
      %v1471 = vpop.f32.mrf.mxu0
      %v1472 = vadd.f32 0.0, %v1471
      %1473 = vmatmul.bf16.gmra.mxu0 %v1138
      %v1474 = vpop.f32.mrf.mxu0
      %v1475 = vadd.f32 0.0, %v1474
      %v1476 = vpop.f32.mrf.mxu0
      %v1477 = vadd.f32 0.0, %v1476
      %1478 = vmatmul.bf16.gmra.mxu0 %v1139
      %v1479 = vpop.f32.mrf.mxu0
      %v1480 = vadd.f32 0.0, %v1479
      %v1481 = vpop.f32.mrf.mxu0
      %v1482 = vadd.f32 0.0, %v1481
      %1483 = vmatmul.bf16.gmra.mxu0 %v1140
      %v1484 = vpop.f32.mrf.mxu0
      %v1485 = vadd.f32 0.0, %v1484
      %v1486 = vpop.f32.mrf.mxu0
      %v1487 = vadd.f32 0.0, %v1486
      %1488 = vmatmul.bf16.gmra.mxu0 %v1141
      %v1489 = vpop.f32.mrf.mxu0
      %v1490 = vadd.f32 0.0, %v1489
      %v1491 = vpop.f32.mrf.mxu0
      %v1492 = vadd.f32 0.0, %v1491
      %1493 = vmatmul.bf16.gmra.mxu0 %v1142
      %v1494 = vpop.f32.mrf.mxu0
      %v1495 = vadd.f32 0.0, %v1494
      %v1496 = vpop.f32.mrf.mxu0
      %v1497 = vadd.f32 0.0, %v1496
      %1498 = vmatmul.bf16.gmra.mxu0 %v1143
      %v1499 = vpop.f32.mrf.mxu0
      %v1500 = vadd.f32 0.0, %v1499
      %v1501 = vpop.f32.mrf.mxu0
      %v1502 = vadd.f32 0.0, %v1501
      %1503 = vmatmul.bf16.gmra.mxu0 %v1144
      %v1504 = vpop.f32.mrf.mxu0
      %v1505 = vadd.f32 0.0, %v1504
      %v1506 = vpop.f32.mrf.mxu0
      %v1507 = vadd.f32 0.0, %v1506
      %1508 = vmatmul.bf16.gmra.mxu0 %v1145
      %v1509 = vpop.f32.mrf.mxu0
      %v1510 = vadd.f32 0.0, %v1509
      %v1511 = vpop.f32.mrf.mxu0
      %v1512 = vadd.f32 0.0, %v1511
      %1513 = vmatmul.bf16.gmra.mxu0 %v1146
      %v1514 = vpop.f32.mrf.mxu0
      %v1515 = vadd.f32 0.0, %v1514
      %v1516 = vpop.f32.mrf.mxu0
      %v1517 = vadd.f32 0.0, %v1516
      %1518 = vmatmul.bf16.gmra.mxu0 %v1147
      %v1519 = vpop.f32.mrf.mxu0
      %v1520 = vadd.f32 0.0, %v1519
      %v1521 = vpop.f32.mrf.mxu0
      %v1522 = vadd.f32 0.0, %v1521
      %1523 = vmatmul.bf16.gmra.mxu0 %v1148
      %v1524 = vpop.f32.mrf.mxu0
      %v1525 = vadd.f32 0.0, %v1524
      %v1526 = vpop.f32.mrf.mxu0
      %v1527 = vadd.f32 0.0, %v1526
      %1528 = vmatmul.bf16.gmra.mxu0 %v1149
      %v1529 = vpop.f32.mrf.mxu0
      %v1530 = vadd.f32 0.0, %v1529
      %v1531 = vpop.f32.mrf.mxu0
      %v1532 = vadd.f32 0.0, %v1531
      %1533 = vmatmul.bf16.gmra.mxu0 %v1150
      %v1534 = vpop.f32.mrf.mxu0
      %v1535 = vadd.f32 0.0, %v1534
      %v1536 = vpop.f32.mrf.mxu0
      %v1537 = vadd.f32 0.0, %v1536
      %1538 = vmatmul.bf16.gmra.mxu0 %v1151
      %v1539 = vpop.f32.mrf.mxu0
      %v1540 = vadd.f32 0.0, %v1539
      %v1541 = vpop.f32.mrf.mxu0
      %v1542 = vadd.f32 0.0, %v1541
      %1543 = vmatmul.bf16.gmra.mxu0 %v1376
      %v1544 = vpop.f32.mrf.mxu0
      %v1545 = vadd.f32 0.0, %v1544
      %v1546 = vpop.f32.mrf.mxu0
      %v1547 = vadd.f32 0.0, %v1546
      %1548 = vmatmul.bf16.gmra.mxu0 %v1377
      %v1549 = vpop.f32.mrf.mxu0
      %v1550 = vadd.f32 0.0, %v1549
      %v1551 = vpop.f32.mrf.mxu0
      %v1552 = vadd.f32 0.0, %v1551
      %1553 = vmatmul.bf16.gmra.mxu0 %v1378
      %v1554 = vpop.f32.mrf.mxu0
      %v1555 = vadd.f32 0.0, %v1554
      %v1556 = vpop.f32.mrf.mxu0
      %v1557 = vadd.f32 0.0, %v1556
      %1558 = vdwg.mxu0
      %v1559 = vadd.f32 %v1234, %v1440
      %v1560 = vadd.f32 %v1236, %v1442
      %v1561 = vadd.f32 %v1239, %v1445
      %v1562 = vadd.f32 %v1241, %v1447
      %v1563 = vadd.f32 %v1244, %v1450
      %v1564 = vadd.f32 %v1246, %v1452
      %v1565 = vadd.f32 %v1249, %v1455
      %v1566 = vadd.f32 %v1251, %v1457
      %v1567 = vadd.f32 %v1254, %v1460
      %v1568 = vadd.f32 %v1256, %v1462
      %v1569 = vadd.f32 %v1259, %v1465
      %v1570 = vadd.f32 %v1261, %v1467
      %v1571 = vadd.f32 %v1264, %v1470
      %v1572 = vadd.f32 %v1266, %v1472
      %v1573 = vadd.f32 %v1269, %v1475
      %v1574 = vadd.f32 %v1271, %v1477
      %v1575 = vadd.f32 %v1274, %v1480
      %v1576 = vadd.f32 %v1276, %v1482
      %v1577 = vadd.f32 %v1279, %v1485
      %v1578 = vadd.f32 %v1281, %v1487
      %v1579 = vadd.f32 %v1284, %v1490
      %v1580 = vadd.f32 %v1286, %v1492
      %v1581 = vadd.f32 %v1289, %v1495
      %v1582 = vadd.f32 %v1291, %v1497
      %v1583 = vadd.f32 %v1294, %v1500
      %v1584 = vadd.f32 %v1296, %v1502
      %v1585 = vadd.f32 %v1299, %v1505
      %v1586 = vadd.f32 %v1301, %v1507
      %v1587 = vadd.f32 %v1304, %v1510
      %v1588 = vadd.f32 %v1306, %v1512
      %v1589 = vadd.f32 %v1309, %v1515
      %v1590 = vadd.f32 %v1311, %v1517
      %v1591 = vadd.f32 %v1314, %v1520
      %v1592 = vadd.f32 %v1316, %v1522
      %v1593 = vadd.f32 %v1319, %v1525
      %v1594 = vadd.f32 %v1321, %v1527
      %v1595 = vadd.f32 %v1324, %v1530
      %v1596 = vadd.f32 %v1326, %v1532
      %v1597 = vadd.f32 %v1329, %v1535
      %v1598 = vadd.f32 %v1331, %v1537
      %v1599 = vadd.f32 %v1334, %v1540
      %v1600 = vadd.f32 %v1336, %v1542
      %v1601 = vadd.f32 %v1339, %v1545
      %v1602 = vadd.f32 %v1341, %v1547
      %v1603 = vadd.f32 %v1344, %v1550
      %v1604 = vadd.f32 %v1346, %v1552
      %v1605 = vadd.f32 %v1349, %v1555
      %v1606 = vadd.f32 %v1351, %v1557
      %vm1607 = vsmask.f32 7424
      %v1609 = vshrl.u32 %v1128, 16
      %v1611 = vshll.u32 %v1128, 16
      %v1613 = vrot.slane %v1611, 1
      %v1614 = vor.u32 %v1609, %v1613
      %v1616 = vshll.u32 %v1129, 16
      %v1618 = vrot.slane %v1616, 1
      %v1619 = vsel %vm1607, %v1614, %v1618
      %v1620 = vshrl.u32 %v1129, 16
      %v1622 = vor.u32 %v1620, %v1618
      %v1624 = vshll.u32 %v1130, 16
      %v1626 = vrot.slane %v1624, 1
      %v1627 = vsel %vm1607, %v1622, %v1626
      %v1628 = vshrl.u32 %v1130, 16
      %v1630 = vor.u32 %v1628, %v1626
      %v1632 = vshll.u32 %v1131, 16
      %v1634 = vrot.slane %v1632, 1
      %v1635 = vsel %vm1607, %v1630, %v1634
      %v1636 = vshrl.u32 %v1131, 16
      %v1638 = vor.u32 %v1636, %v1634
      %v1640 = vshll.u32 %v1132, 16
      %v1642 = vrot.slane %v1640, 1
      %v1643 = vsel %vm1607, %v1638, %v1642
      %v1644 = vshrl.u32 %v1132, 16
      %v1646 = vor.u32 %v1644, %v1642
      %v1648 = vshll.u32 %v1133, 16
      %v1650 = vrot.slane %v1648, 1
      %v1651 = vsel %vm1607, %v1646, %v1650
      %v1652 = vshrl.u32 %v1133, 16
      %v1654 = vor.u32 %v1652, %v1650
      %v1656 = vshll.u32 %v1134, 16
      %v1658 = vrot.slane %v1656, 1
      %v1659 = vsel %vm1607, %v1654, %v1658
      %v1660 = vshrl.u32 %v1134, 16
      %v1662 = vor.u32 %v1660, %v1658
      %v1664 = vshll.u32 %v1135, 16
      %v1666 = vrot.slane %v1664, 1
      %v1667 = vsel %vm1607, %v1662, %v1666
      %v1668 = vshrl.u32 %v1135, 16
      %v1670 = vor.u32 %v1668, %v1666
      %v1672 = vshll.u32 %v1136, 16
      %v1674 = vrot.slane %v1672, 1
      %v1675 = vsel %vm1607, %v1670, %v1674
      %v1676 = vshrl.u32 %v1136, 16
      %v1678 = vor.u32 %v1676, %v1674
      %v1680 = vshll.u32 %v1137, 16
      %v1682 = vrot.slane %v1680, 1
      %v1683 = vsel %vm1607, %v1678, %v1682
      %v1684 = vshrl.u32 %v1137, 16
      %v1686 = vor.u32 %v1684, %v1682
      %v1688 = vshll.u32 %v1138, 16
      %v1690 = vrot.slane %v1688, 1
      %v1691 = vsel %vm1607, %v1686, %v1690
      %v1692 = vshrl.u32 %v1138, 16
      %v1694 = vor.u32 %v1692, %v1690
      %v1696 = vshll.u32 %v1139, 16
      %v1698 = vrot.slane %v1696, 1
      %v1699 = vsel %vm1607, %v1694, %v1698
      %v1700 = vshrl.u32 %v1139, 16
      %v1702 = vor.u32 %v1700, %v1698
      %v1704 = vshll.u32 %v1140, 16
      %v1706 = vrot.slane %v1704, 1
      %v1707 = vsel %vm1607, %v1702, %v1706
      %v1708 = vshrl.u32 %v1140, 16
      %v1710 = vor.u32 %v1708, %v1706
      %v1712 = vshll.u32 %v1141, 16
      %v1714 = vrot.slane %v1712, 1
      %v1715 = vsel %vm1607, %v1710, %v1714
      %v1716 = vshrl.u32 %v1141, 16
      %v1718 = vor.u32 %v1716, %v1714
      %v1720 = vshll.u32 %v1142, 16
      %v1722 = vrot.slane %v1720, 1
      %v1723 = vsel %vm1607, %v1718, %v1722
      %v1724 = vshrl.u32 %v1142, 16
      %v1726 = vor.u32 %v1724, %v1722
      %v1728 = vshll.u32 %v1143, 16
      %v1730 = vrot.slane %v1728, 1
      %v1731 = vsel %vm1607, %v1726, %v1730
      %v1732 = vshrl.u32 %v1143, 16
      %v1734 = vor.u32 %v1732, %v1730
      %v1736 = vshll.u32 %v1144, 16
      %v1738 = vrot.slane %v1736, 1
      %v1739 = vsel %vm1607, %v1734, %v1738
      %v1740 = vshrl.u32 %v1144, 16
      %v1742 = vor.u32 %v1740, %v1738
      %v1744 = vshll.u32 %v1145, 16
      %v1746 = vrot.slane %v1744, 1
      %v1747 = vsel %vm1607, %v1742, %v1746
      %v1748 = vshrl.u32 %v1145, 16
      %v1750 = vor.u32 %v1748, %v1746
      %v1752 = vshll.u32 %v1146, 16
      %v1754 = vrot.slane %v1752, 1
      %v1755 = vsel %vm1607, %v1750, %v1754
      %v1756 = vshrl.u32 %v1146, 16
      %v1758 = vor.u32 %v1756, %v1754
      %v1760 = vshll.u32 %v1147, 16
      %v1762 = vrot.slane %v1760, 1
      %v1763 = vsel %vm1607, %v1758, %v1762
      %v1764 = vshrl.u32 %v1147, 16
      %v1766 = vor.u32 %v1764, %v1762
      %v1768 = vshll.u32 %v1148, 16
      %v1770 = vrot.slane %v1768, 1
      %v1771 = vsel %vm1607, %v1766, %v1770
      %v1772 = vshrl.u32 %v1148, 16
      %v1774 = vor.u32 %v1772, %v1770
      %v1776 = vshll.u32 %v1149, 16
      %v1778 = vrot.slane %v1776, 1
      %v1779 = vsel %vm1607, %v1774, %v1778
      %v1780 = vshrl.u32 %v1149, 16
      %v1782 = vor.u32 %v1780, %v1778
      %v1784 = vshll.u32 %v1150, 16
      %v1786 = vrot.slane %v1784, 1
      %v1787 = vsel %vm1607, %v1782, %v1786
      %v1788 = vshrl.u32 %v1150, 16
      %v1790 = vor.u32 %v1788, %v1786
      %v1792 = vshll.u32 %v1151, 16
      %v1794 = vrot.slane %v1792, 1
      %v1795 = vsel %vm1607, %v1790, %v1794
      %v1796 = vshrl.u32 %v1151, 16
      %v1798 = vor.u32 %v1796, %v1794
      %v1800 = vshll.u32 %v1376, 16
      %v1802 = vrot.slane %v1800, 1
      %v1803 = vsel %vm1607, %v1798, %v1802
      %v1804 = vshrl.u32 %v1376, 16
      %v1806 = vor.u32 %v1804, %v1802
      %v1808 = vshll.u32 %v1377, 16
      %v1810 = vrot.slane %v1808, 1
      %v1811 = vsel %vm1607, %v1806, %v1810
      %v1812 = vshrl.u32 %v1377, 16
      %v1814 = vor.u32 %v1812, %v1810
      %v1816 = vshll.u32 %v1378, 16
      %v1818 = vrot.slane %v1816, 1
      %v1819 = vsel %vm1607, %v1814, %v1818
      %v1820 = vshrl.u32 %v1378, 16
      %v1822 = vor.u32 %v1820, %v1818
      %v1850 = vpack.c.b16 %v1125, %v1125
      %v1852 = vshll.u32 %v1850, 16
      %v1854 = vrot.slane %v1852, 1
      %vm1856 = vcmask 1047552
      %vm1857 = vmand %vm1856, %vm1607
      %v1858 = vsel %vm1857, %v1822, %v1854
      %s1859 = scalar_lea.vmem %s1, 64
      %v1860 = vld [vmem:[%s1859] sm:$0xf]
      %v1861 = vld [vmem:[%s1859 + $0x4] sm:$0xf]
      %v1862 = vld [vmem:[%s1859 + $0x8] sm:$0xf]
      %v1863 = vld [vmem:[%s1859 + $0xc] sm:$0xf]
      %v1864 = vld [vmem:[%s1859 + $0x10] sm:$0xf]
      %v1865 = vld [vmem:[%s1859 + $0x14] sm:$0xf]
      %v1866 = vld [vmem:[%s1859 + $0x18] sm:$0xf]
      %v1867 = vld [vmem:[%s1859 + $0x1c] sm:$0xf]
      %v1868 = vld [vmem:[%s1859 + $0x20] sm:$0xf]
      %v1869 = vld [vmem:[%s1859 + $0x24] sm:$0xf]
      %v1870 = vld [vmem:[%s1859 + $0x28] sm:$0xf]
      %v1871 = vld [vmem:[%s1859 + $0x2c] sm:$0xf]
      %v1872 = vld [vmem:[%s1859 + $0x30] sm:$0xf]
      %v1873 = vld [vmem:[%s1859 + $0x34] sm:$0xf]
      %v1874 = vld [vmem:[%s1859 + $0x38] sm:$0xf]
      %v1875 = vld [vmem:[%s1859 + $0x3c] sm:$0xf]
      %v1892 = vunpack.c.l.b16 %v1860
      %v1893 = vunpack.c.l.b16 %v1861
      %v1894 = vunpack.c.l.b16 %v1862
      %v1895 = vunpack.c.l.b16 %v1863
      %v1896 = vunpack.c.l.b16 %v1864
      %v1897 = vunpack.c.l.b16 %v1865
      %v1898 = vunpack.c.l.b16 %v1866
      %v1899 = vunpack.c.l.b16 %v1867
      %v1900 = vunpack.c.l.b16 %v1868
      %v1901 = vunpack.c.l.b16 %v1869
      %v1902 = vunpack.c.l.b16 %v1870
      %v1903 = vunpack.c.l.b16 %v1871
      %v1904 = vunpack.c.l.b16 %v1872
      %v1905 = vunpack.c.l.b16 %v1873
      %v1906 = vunpack.c.l.b16 %v1874
      %v1907 = vunpack.c.l.b16 %v1875
      %v1908 = vpack.c.b16 %v1893, %v1892
      %v1909 = vpack.c.b16 %v1895, %v1894
      %v1910 = vpack.c.b16 %v1897, %v1896
      %v1911 = vpack.c.b16 %v1899, %v1898
      %v1912 = vpack.c.b16 %v1901, %v1900
      %v1913 = vpack.c.b16 %v1903, %v1902
      %v1914 = vpack.c.b16 %v1905, %v1904
      %v1915 = vpack.c.b16 %v1907, %v1906
      %1924 = vmatpush.bf16.msra.mxu0 %v1915
      %1925 = vmatpush.bf16.msra.mxu0 %v1914
      %1926 = vmatpush.bf16.msra.mxu0 %v1913
      %1927 = vmatpush.bf16.msra.mxu0 %v1912
      %1928 = vmatpush.bf16.msra.mxu0 %v1911
      %1929 = vmatpush.bf16.msra.mxu0 %v1910
      %1930 = vmatpush.bf16.msra.mxu0 %v1909
      %1931 = vmatpush.bf16.msra.mxu0 %v1908
      %1932 = vmatmul.bf16.gmra.mxu0 %v1619
      %v1933 = vpop.f32.mrf.mxu0
      %v1934 = vadd.f32 0.0, %v1933
      %v1935 = vpop.f32.mrf.mxu0
      %v1936 = vadd.f32 0.0, %v1935
      %1937 = vmatmul.bf16.gmra.mxu0 %v1627
      %v1938 = vpop.f32.mrf.mxu0
      %v1939 = vadd.f32 0.0, %v1938
      %v1940 = vpop.f32.mrf.mxu0
      %v1941 = vadd.f32 0.0, %v1940
      %1942 = vmatmul.bf16.gmra.mxu0 %v1635
      %v1943 = vpop.f32.mrf.mxu0
      %v1944 = vadd.f32 0.0, %v1943
      %v1945 = vpop.f32.mrf.mxu0
      %v1946 = vadd.f32 0.0, %v1945
      %1947 = vmatmul.bf16.gmra.mxu0 %v1643
      %v1948 = vpop.f32.mrf.mxu0
      %v1949 = vadd.f32 0.0, %v1948
      %v1950 = vpop.f32.mrf.mxu0
      %v1951 = vadd.f32 0.0, %v1950
      %1952 = vmatmul.bf16.gmra.mxu0 %v1651
      %v1953 = vpop.f32.mrf.mxu0
      %v1954 = vadd.f32 0.0, %v1953
      %v1955 = vpop.f32.mrf.mxu0
      %v1956 = vadd.f32 0.0, %v1955
      %1957 = vmatmul.bf16.gmra.mxu0 %v1659
      %v1958 = vpop.f32.mrf.mxu0
      %v1959 = vadd.f32 0.0, %v1958
      %v1960 = vpop.f32.mrf.mxu0
      %v1961 = vadd.f32 0.0, %v1960
      %1962 = vmatmul.bf16.gmra.mxu0 %v1667
      %v1963 = vpop.f32.mrf.mxu0
      %v1964 = vadd.f32 0.0, %v1963
      %v1965 = vpop.f32.mrf.mxu0
      %v1966 = vadd.f32 0.0, %v1965
      %1967 = vmatmul.bf16.gmra.mxu0 %v1675
      %v1968 = vpop.f32.mrf.mxu0
      %v1969 = vadd.f32 0.0, %v1968
      %v1970 = vpop.f32.mrf.mxu0
      %v1971 = vadd.f32 0.0, %v1970
      %1972 = vmatmul.bf16.gmra.mxu0 %v1683
      %v1973 = vpop.f32.mrf.mxu0
      %v1974 = vadd.f32 0.0, %v1973
      %v1975 = vpop.f32.mrf.mxu0
      %v1976 = vadd.f32 0.0, %v1975
      %1977 = vmatmul.bf16.gmra.mxu0 %v1691
      %v1978 = vpop.f32.mrf.mxu0
      %v1979 = vadd.f32 0.0, %v1978
      %v1980 = vpop.f32.mrf.mxu0
      %v1981 = vadd.f32 0.0, %v1980
      %1982 = vmatmul.bf16.gmra.mxu0 %v1699
      %v1983 = vpop.f32.mrf.mxu0
      %v1984 = vadd.f32 0.0, %v1983
      %v1985 = vpop.f32.mrf.mxu0
      %v1986 = vadd.f32 0.0, %v1985
      %1987 = vmatmul.bf16.gmra.mxu0 %v1707
      %v1988 = vpop.f32.mrf.mxu0
      %v1989 = vadd.f32 0.0, %v1988
      %v1990 = vpop.f32.mrf.mxu0
      %v1991 = vadd.f32 0.0, %v1990
      %1992 = vmatmul.bf16.gmra.mxu0 %v1715
      %v1993 = vpop.f32.mrf.mxu0
      %v1994 = vadd.f32 0.0, %v1993
      %v1995 = vpop.f32.mrf.mxu0
      %v1996 = vadd.f32 0.0, %v1995
      %1997 = vmatmul.bf16.gmra.mxu0 %v1723
      %v1998 = vpop.f32.mrf.mxu0
      %v1999 = vadd.f32 0.0, %v1998
      %v2000 = vpop.f32.mrf.mxu0
      %v2001 = vadd.f32 0.0, %v2000
      %2002 = vmatmul.bf16.gmra.mxu0 %v1731
      %v2003 = vpop.f32.mrf.mxu0
      %v2004 = vadd.f32 0.0, %v2003
      %v2005 = vpop.f32.mrf.mxu0
      %v2006 = vadd.f32 0.0, %v2005
      %2007 = vmatmul.bf16.gmra.mxu0 %v1739
      %v2008 = vpop.f32.mrf.mxu0
      %v2009 = vadd.f32 0.0, %v2008
      %v2010 = vpop.f32.mrf.mxu0
      %v2011 = vadd.f32 0.0, %v2010
      %2012 = vmatmul.bf16.gmra.mxu0 %v1747
      %v2013 = vpop.f32.mrf.mxu0
      %v2014 = vadd.f32 0.0, %v2013
      %v2015 = vpop.f32.mrf.mxu0
      %v2016 = vadd.f32 0.0, %v2015
      %2017 = vmatmul.bf16.gmra.mxu0 %v1755
      %v2018 = vpop.f32.mrf.mxu0
      %v2019 = vadd.f32 0.0, %v2018
      %v2020 = vpop.f32.mrf.mxu0
      %v2021 = vadd.f32 0.0, %v2020
      %2022 = vmatmul.bf16.gmra.mxu0 %v1763
      %v2023 = vpop.f32.mrf.mxu0
      %v2024 = vadd.f32 0.0, %v2023
      %v2025 = vpop.f32.mrf.mxu0
      %v2026 = vadd.f32 0.0, %v2025
      %2027 = vmatmul.bf16.gmra.mxu0 %v1771
      %v2028 = vpop.f32.mrf.mxu0
      %v2029 = vadd.f32 0.0, %v2028
      %v2030 = vpop.f32.mrf.mxu0
      %v2031 = vadd.f32 0.0, %v2030
      %2032 = vmatmul.bf16.gmra.mxu0 %v1779
      %v2033 = vpop.f32.mrf.mxu0
      %v2034 = vadd.f32 0.0, %v2033
      %v2035 = vpop.f32.mrf.mxu0
      %v2036 = vadd.f32 0.0, %v2035
      %2037 = vmatmul.bf16.gmra.mxu0 %v1787
      %v2038 = vpop.f32.mrf.mxu0
      %v2039 = vadd.f32 0.0, %v2038
      %v2040 = vpop.f32.mrf.mxu0
      %v2041 = vadd.f32 0.0, %v2040
      %2042 = vmatmul.bf16.gmra.mxu0 %v1795
      %v2043 = vpop.f32.mrf.mxu0
      %v2044 = vadd.f32 0.0, %v2043
      %v2045 = vpop.f32.mrf.mxu0
      %v2046 = vadd.f32 0.0, %v2045
      %2047 = vmatmul.bf16.gmra.mxu0 %v1803
      %v2048 = vpop.f32.mrf.mxu0
      %v2049 = vadd.f32 0.0, %v2048
      %v2050 = vpop.f32.mrf.mxu0
      %v2051 = vadd.f32 0.0, %v2050
      %2052 = vdwg.mxu0
      %v2053 = vadd.f32 %v1559, %v1934
      %v2054 = vadd.f32 %v1560, %v1936
      %v2055 = vadd.f32 %v1561, %v1939
      %v2056 = vadd.f32 %v1562, %v1941
      %v2057 = vadd.f32 %v1563, %v1944
      %v2058 = vadd.f32 %v1564, %v1946
      %v2059 = vadd.f32 %v1565, %v1949
      %v2060 = vadd.f32 %v1566, %v1951
      %v2061 = vadd.f32 %v1567, %v1954
      %v2062 = vadd.f32 %v1568, %v1956
      %v2063 = vadd.f32 %v1569, %v1959
      %v2064 = vadd.f32 %v1570, %v1961
      %v2065 = vadd.f32 %v1571, %v1964
      %v2066 = vadd.f32 %v1572, %v1966
      %v2067 = vadd.f32 %v1573, %v1969
      %v2068 = vadd.f32 %v1574, %v1971
      %v2069 = vadd.f32 %v1575, %v1974
      %v2070 = vadd.f32 %v1576, %v1976
      %v2071 = vadd.f32 %v1577, %v1979
      %v2072 = vadd.f32 %v1578, %v1981
      %v2073 = vadd.f32 %v1579, %v1984
      %v2074 = vadd.f32 %v1580, %v1986
      %v2075 = vadd.f32 %v1581, %v1989
      %v2076 = vadd.f32 %v1582, %v1991
      %v2077 = vadd.f32 %v1583, %v1994
      %v2078 = vadd.f32 %v1584, %v1996
      %v2079 = vadd.f32 %v1585, %v1999
      %v2080 = vadd.f32 %v1586, %v2001
      %v2081 = vadd.f32 %v1587, %v2004
      %v2082 = vadd.f32 %v1588, %v2006
      %v2083 = vadd.f32 %v1589, %v2009
      %v2084 = vadd.f32 %v1590, %v2011
      %v2085 = vadd.f32 %v1591, %v2014
      %v2086 = vadd.f32 %v1592, %v2016
      %v2087 = vadd.f32 %v1593, %v2019
      %v2088 = vadd.f32 %v1594, %v2021
      %v2089 = vadd.f32 %v1595, %v2024
      %v2090 = vadd.f32 %v1596, %v2026
      %v2091 = vadd.f32 %v1597, %v2029
      %v2092 = vadd.f32 %v1598, %v2031
      %v2093 = vadd.f32 %v1599, %v2034
      %v2094 = vadd.f32 %v1600, %v2036
      %v2095 = vadd.f32 %v1601, %v2039
      %v2096 = vadd.f32 %v1602, %v2041
      %v2097 = vadd.f32 %v1603, %v2044
      %v2098 = vadd.f32 %v1604, %v2046
      %v2099 = vadd.f32 %v1605, %v2049
      %v2100 = vadd.f32 %v1606, %v2051
      %s2101 = scalar_lea.vmem %s1, 256
      %v2102 = vld [vmem:[%s2101] sm:$0xf]
      %v2103 = vld [vmem:[%s2101 + $0x4] sm:$0xf]
      %v2104 = vld [vmem:[%s2101 + $0x8] sm:$0xf]
      %v2105 = vld [vmem:[%s2101 + $0xc] sm:$0xf]
      %v2106 = vld [vmem:[%s2101 + $0x10] sm:$0xf]
      %v2107 = vld [vmem:[%s2101 + $0x14] sm:$0xf]
      %v2108 = vld [vmem:[%s2101 + $0x18] sm:$0xf]
      %v2109 = vld [vmem:[%s2101 + $0x1c] sm:$0xf]
      %v2110 = vld [vmem:[%s2101 + $0x20] sm:$0xf]
      %v2111 = vld [vmem:[%s2101 + $0x24] sm:$0xf]
      %v2112 = vld [vmem:[%s2101 + $0x28] sm:$0xf]
      %v2113 = vld [vmem:[%s2101 + $0x2c] sm:$0xf]
      %v2114 = vld [vmem:[%s2101 + $0x30] sm:$0xf]
      %v2115 = vld [vmem:[%s2101 + $0x34] sm:$0xf]
      %v2116 = vld [vmem:[%s2101 + $0x38] sm:$0xf]
      %v2117 = vld [vmem:[%s2101 + $0x3c] sm:$0xf]
      %vm2118 = vcmask 1043456
      %v2119 = vrot.slane %v1627, 4
      %v2120 = vrot.slane %v1635, 4
      %v2121 = vsel %vm2118, %v2119, %v2120
      %v2122 = vrot.slane %v1643, 4
      %v2123 = vsel %vm2118, %v2120, %v2122
      %v2124 = vrot.slane %v1651, 4
      %v2125 = vsel %vm2118, %v2122, %v2124
      %v2126 = vrot.slane %v1659, 4
      %v2127 = vsel %vm2118, %v2124, %v2126
      %v2128 = vrot.slane %v1667, 4
      %v2129 = vsel %vm2118, %v2126, %v2128
      %v2130 = vrot.slane %v1675, 4
      %v2131 = vsel %vm2118, %v2128, %v2130
      %v2132 = vrot.slane %v1683, 4
      %v2133 = vsel %vm2118, %v2130, %v2132
      %v2134 = vrot.slane %v1691, 4
      %v2135 = vsel %vm2118, %v2132, %v2134
      %v2136 = vrot.slane %v1699, 4
      %v2137 = vsel %vm2118, %v2134, %v2136
      %v2138 = vrot.slane %v1707, 4
      %v2139 = vsel %vm2118, %v2136, %v2138
      %v2140 = vrot.slane %v1715, 4
      %v2141 = vsel %vm2118, %v2138, %v2140
      %v2142 = vrot.slane %v1723, 4
      %v2143 = vsel %vm2118, %v2140, %v2142
      %v2144 = vrot.slane %v1731, 4
      %v2145 = vsel %vm2118, %v2142, %v2144
      %v2146 = vrot.slane %v1739, 4
      %v2147 = vsel %vm2118, %v2144, %v2146
      %v2148 = vrot.slane %v1747, 4
      %v2149 = vsel %vm2118, %v2146, %v2148
      %v2150 = vrot.slane %v1755, 4
      %v2151 = vsel %vm2118, %v2148, %v2150
      %v2152 = vrot.slane %v1763, 4
      %v2153 = vsel %vm2118, %v2150, %v2152
      %v2154 = vrot.slane %v1771, 4
      %v2155 = vsel %vm2118, %v2152, %v2154
      %v2156 = vrot.slane %v1779, 4
      %v2157 = vsel %vm2118, %v2154, %v2156
      %v2158 = vrot.slane %v1787, 4
      %v2159 = vsel %vm2118, %v2156, %v2158
      %v2160 = vrot.slane %v1795, 4
      %v2161 = vsel %vm2118, %v2158, %v2160
      %v2162 = vrot.slane %v1803, 4
      %v2163 = vsel %vm2118, %v2160, %v2162
      %v2164 = vrot.slane %v1811, 4
      %v2165 = vsel %vm2118, %v2162, %v2164
      %v2166 = vrot.slane %v1819, 4
      %v2167 = vsel %vm2118, %v2164, %v2166
      %v2208 = vunpack.c.l.b16 %v2102
      %v2209 = vunpack.c.l.b16 %v2103
      %v2210 = vunpack.c.l.b16 %v2104
      %v2211 = vunpack.c.l.b16 %v2105
      %v2212 = vunpack.c.l.b16 %v2106
      %v2213 = vunpack.c.l.b16 %v2107
      %v2214 = vunpack.c.l.b16 %v2108
      %v2215 = vunpack.c.l.b16 %v2109
      %v2216 = vunpack.c.l.b16 %v2110
      %v2217 = vunpack.c.l.b16 %v2111
      %v2218 = vunpack.c.l.b16 %v2112
      %v2219 = vunpack.c.l.b16 %v2113
      %v2220 = vunpack.c.l.b16 %v2114
      %v2221 = vunpack.c.l.b16 %v2115
      %v2222 = vunpack.c.l.b16 %v2116
      %v2223 = vunpack.c.l.b16 %v2117
      %v2224 = vpack.c.b16 %v2209, %v2208
      %v2225 = vpack.c.b16 %v2211, %v2210
      %v2226 = vpack.c.b16 %v2213, %v2212
      %v2227 = vpack.c.b16 %v2215, %v2214
      %v2228 = vpack.c.b16 %v2217, %v2216
      %v2229 = vpack.c.b16 %v2219, %v2218
      %v2230 = vpack.c.b16 %v2221, %v2220
      %v2231 = vpack.c.b16 %v2223, %v2222
      %2240 = vmatpush.bf16.msra.mxu0 %v2231
      %2241 = vmatpush.bf16.msra.mxu0 %v2230
      %2242 = vmatpush.bf16.msra.mxu0 %v2229
      %2243 = vmatpush.bf16.msra.mxu0 %v2228
      %2244 = vmatpush.bf16.msra.mxu0 %v2227
      %2245 = vmatpush.bf16.msra.mxu0 %v2226
      %2246 = vmatpush.bf16.msra.mxu0 %v2225
      %2247 = vmatpush.bf16.msra.mxu0 %v2224
      %2248 = vmatmul.bf16.gmra.mxu0 %v2121
      %v2249 = vpop.f32.mrf.mxu0
      %v2250 = vadd.f32 0.0, %v2249
      %v2251 = vpop.f32.mrf.mxu0
      %v2252 = vadd.f32 0.0, %v2251
      %2253 = vmatmul.bf16.gmra.mxu0 %v2123
      %v2254 = vpop.f32.mrf.mxu0
      %v2255 = vadd.f32 0.0, %v2254
      %v2256 = vpop.f32.mrf.mxu0
      %v2257 = vadd.f32 0.0, %v2256
      %2258 = vmatmul.bf16.gmra.mxu0 %v2125
      %v2259 = vpop.f32.mrf.mxu0
      %v2260 = vadd.f32 0.0, %v2259
      %v2261 = vpop.f32.mrf.mxu0
      %v2262 = vadd.f32 0.0, %v2261
      %2263 = vmatmul.bf16.gmra.mxu0 %v2127
      %v2264 = vpop.f32.mrf.mxu0
      %v2265 = vadd.f32 0.0, %v2264
      %v2266 = vpop.f32.mrf.mxu0
      %v2267 = vadd.f32 0.0, %v2266
      %2268 = vmatmul.bf16.gmra.mxu0 %v2129
      %v2269 = vpop.f32.mrf.mxu0
      %v2270 = vadd.f32 0.0, %v2269
      %v2271 = vpop.f32.mrf.mxu0
      %v2272 = vadd.f32 0.0, %v2271
      %2273 = vmatmul.bf16.gmra.mxu0 %v2131
      %v2274 = vpop.f32.mrf.mxu0
      %v2275 = vadd.f32 0.0, %v2274
      %v2276 = vpop.f32.mrf.mxu0
      %v2277 = vadd.f32 0.0, %v2276
      %2278 = vmatmul.bf16.gmra.mxu0 %v2133
      %v2279 = vpop.f32.mrf.mxu0
      %v2280 = vadd.f32 0.0, %v2279
      %v2281 = vpop.f32.mrf.mxu0
      %v2282 = vadd.f32 0.0, %v2281
      %2283 = vmatmul.bf16.gmra.mxu0 %v2135
      %v2284 = vpop.f32.mrf.mxu0
      %v2285 = vadd.f32 0.0, %v2284
      %v2286 = vpop.f32.mrf.mxu0
      %v2287 = vadd.f32 0.0, %v2286
      %2288 = vmatmul.bf16.gmra.mxu0 %v2137
      %v2289 = vpop.f32.mrf.mxu0
      %v2290 = vadd.f32 0.0, %v2289
      %v2291 = vpop.f32.mrf.mxu0
      %v2292 = vadd.f32 0.0, %v2291
      %2293 = vmatmul.bf16.gmra.mxu0 %v2139
      %v2294 = vpop.f32.mrf.mxu0
      %v2295 = vadd.f32 0.0, %v2294
      %v2296 = vpop.f32.mrf.mxu0
      %v2297 = vadd.f32 0.0, %v2296
      %2298 = vmatmul.bf16.gmra.mxu0 %v2141
      %v2299 = vpop.f32.mrf.mxu0
      %v2300 = vadd.f32 0.0, %v2299
      %v2301 = vpop.f32.mrf.mxu0
      %v2302 = vadd.f32 0.0, %v2301
      %2303 = vmatmul.bf16.gmra.mxu0 %v2143
      %v2304 = vpop.f32.mrf.mxu0
      %v2305 = vadd.f32 0.0, %v2304
      %v2306 = vpop.f32.mrf.mxu0
      %v2307 = vadd.f32 0.0, %v2306
      %2308 = vmatmul.bf16.gmra.mxu0 %v2145
      %v2309 = vpop.f32.mrf.mxu0
      %v2310 = vadd.f32 0.0, %v2309
      %v2311 = vpop.f32.mrf.mxu0
      %v2312 = vadd.f32 0.0, %v2311
      %2313 = vmatmul.bf16.gmra.mxu0 %v2147
      %v2314 = vpop.f32.mrf.mxu0
      %v2315 = vadd.f32 0.0, %v2314
      %v2316 = vpop.f32.mrf.mxu0
      %v2317 = vadd.f32 0.0, %v2316
      %2318 = vmatmul.bf16.gmra.mxu0 %v2149
      %v2319 = vpop.f32.mrf.mxu0
      %v2320 = vadd.f32 0.0, %v2319
      %v2321 = vpop.f32.mrf.mxu0
      %v2322 = vadd.f32 0.0, %v2321
      %2323 = vmatmul.bf16.gmra.mxu0 %v2151
      %v2324 = vpop.f32.mrf.mxu0
      %v2325 = vadd.f32 0.0, %v2324
      %v2326 = vpop.f32.mrf.mxu0
      %v2327 = vadd.f32 0.0, %v2326
      %2328 = vmatmul.bf16.gmra.mxu0 %v2153
      %v2329 = vpop.f32.mrf.mxu0
      %v2330 = vadd.f32 0.0, %v2329
      %v2331 = vpop.f32.mrf.mxu0
      %v2332 = vadd.f32 0.0, %v2331
      %2333 = vmatmul.bf16.gmra.mxu0 %v2155
      %v2334 = vpop.f32.mrf.mxu0
      %v2335 = vadd.f32 0.0, %v2334
      %v2336 = vpop.f32.mrf.mxu0
      %v2337 = vadd.f32 0.0, %v2336
      %2338 = vmatmul.bf16.gmra.mxu0 %v2157
      %v2339 = vpop.f32.mrf.mxu0
      %v2340 = vadd.f32 0.0, %v2339
      %v2341 = vpop.f32.mrf.mxu0
      %v2342 = vadd.f32 0.0, %v2341
      %2343 = vmatmul.bf16.gmra.mxu0 %v2159
      %v2344 = vpop.f32.mrf.mxu0
      %v2345 = vadd.f32 0.0, %v2344
      %v2346 = vpop.f32.mrf.mxu0
      %v2347 = vadd.f32 0.0, %v2346
      %2348 = vmatmul.bf16.gmra.mxu0 %v2161
      %v2349 = vpop.f32.mrf.mxu0
      %v2350 = vadd.f32 0.0, %v2349
      %v2351 = vpop.f32.mrf.mxu0
      %v2352 = vadd.f32 0.0, %v2351
      %2353 = vmatmul.bf16.gmra.mxu0 %v2163
      %v2354 = vpop.f32.mrf.mxu0
      %v2355 = vadd.f32 0.0, %v2354
      %v2356 = vpop.f32.mrf.mxu0
      %v2357 = vadd.f32 0.0, %v2356
      %2358 = vmatmul.bf16.gmra.mxu0 %v2165
      %v2359 = vpop.f32.mrf.mxu0
      %v2360 = vadd.f32 0.0, %v2359
      %v2361 = vpop.f32.mrf.mxu0
      %v2362 = vadd.f32 0.0, %v2361
      %2363 = vmatmul.bf16.gmra.mxu0 %v2167
      %v2364 = vpop.f32.mrf.mxu0
      %v2365 = vadd.f32 0.0, %v2364
      %v2366 = vpop.f32.mrf.mxu0
      %v2367 = vadd.f32 0.0, %v2366
      %2368 = vdwg.mxu0
      %v2369 = vadd.f32 %v2053, %v2250
      %v2370 = vadd.f32 %v2054, %v2252
      %v2371 = vadd.f32 %v2055, %v2255
      %v2372 = vadd.f32 %v2056, %v2257
      %v2373 = vadd.f32 %v2057, %v2260
      %v2374 = vadd.f32 %v2058, %v2262
      %v2375 = vadd.f32 %v2059, %v2265
      %v2376 = vadd.f32 %v2060, %v2267
      %v2377 = vadd.f32 %v2061, %v2270
      %v2378 = vadd.f32 %v2062, %v2272
      %v2379 = vadd.f32 %v2063, %v2275
      %v2380 = vadd.f32 %v2064, %v2277
      %v2381 = vadd.f32 %v2065, %v2280
      %v2382 = vadd.f32 %v2066, %v2282
      %v2383 = vadd.f32 %v2067, %v2285
      %v2384 = vadd.f32 %v2068, %v2287
      %v2385 = vadd.f32 %v2069, %v2290
      %v2386 = vadd.f32 %v2070, %v2292
      %v2387 = vadd.f32 %v2071, %v2295
      %v2388 = vadd.f32 %v2072, %v2297
      %v2389 = vadd.f32 %v2073, %v2300
      %v2390 = vadd.f32 %v2074, %v2302
      %v2391 = vadd.f32 %v2075, %v2305
      %v2392 = vadd.f32 %v2076, %v2307
      %v2393 = vadd.f32 %v2077, %v2310
      %v2394 = vadd.f32 %v2078, %v2312
      %v2395 = vadd.f32 %v2079, %v2315
      %v2396 = vadd.f32 %v2080, %v2317
      %v2397 = vadd.f32 %v2081, %v2320
      %v2398 = vadd.f32 %v2082, %v2322
      %v2399 = vadd.f32 %v2083, %v2325
      %v2400 = vadd.f32 %v2084, %v2327
      %v2401 = vadd.f32 %v2085, %v2330
      %v2402 = vadd.f32 %v2086, %v2332
      %v2403 = vadd.f32 %v2087, %v2335
      %v2404 = vadd.f32 %v2088, %v2337
      %v2405 = vadd.f32 %v2089, %v2340
      %v2406 = vadd.f32 %v2090, %v2342
      %v2407 = vadd.f32 %v2091, %v2345
      %v2408 = vadd.f32 %v2092, %v2347
      %v2409 = vadd.f32 %v2093, %v2350
      %v2410 = vadd.f32 %v2094, %v2352
      %v2411 = vadd.f32 %v2095, %v2355
      %v2412 = vadd.f32 %v2096, %v2357
      %v2413 = vadd.f32 %v2097, %v2360
      %v2414 = vadd.f32 %v2098, %v2362
      %v2415 = vadd.f32 %v2099, %v2365
      %v2416 = vadd.f32 %v2100, %v2367
      %s2417 = scalar_lea.vmem %s1, 448
      %v2418 = vld [vmem:[%s2417] sm:$0xf]
      %v2419 = vld [vmem:[%s2417 + $0x4] sm:$0xf]
      %v2420 = vld [vmem:[%s2417 + $0x8] sm:$0xf]
      %v2421 = vld [vmem:[%s2417 + $0xc] sm:$0xf]
      %v2422 = vld [vmem:[%s2417 + $0x10] sm:$0xf]
      %v2423 = vld [vmem:[%s2417 + $0x14] sm:$0xf]
      %v2424 = vld [vmem:[%s2417 + $0x18] sm:$0xf]
      %v2425 = vld [vmem:[%s2417 + $0x1c] sm:$0xf]
      %v2426 = vld [vmem:[%s2417 + $0x20] sm:$0xf]
      %v2427 = vld [vmem:[%s2417 + $0x24] sm:$0xf]
      %v2428 = vld [vmem:[%s2417 + $0x28] sm:$0xf]
      %v2429 = vld [vmem:[%s2417 + $0x2c] sm:$0xf]
      %v2430 = vld [vmem:[%s2417 + $0x30] sm:$0xf]
      %v2431 = vld [vmem:[%s2417 + $0x34] sm:$0xf]
      %v2432 = vld [vmem:[%s2417 + $0x38] sm:$0xf]
      %v2433 = vld [vmem:[%s2417 + $0x3c] sm:$0xf]
      %v2450 = vunpack.c.l.b16 %v2418
      %v2451 = vunpack.c.l.b16 %v2419
      %v2452 = vunpack.c.l.b16 %v2420
      %v2453 = vunpack.c.l.b16 %v2421
      %v2454 = vunpack.c.l.b16 %v2422
      %v2455 = vunpack.c.l.b16 %v2423
      %v2456 = vunpack.c.l.b16 %v2424
      %v2457 = vunpack.c.l.b16 %v2425
      %v2458 = vunpack.c.l.b16 %v2426
      %v2459 = vunpack.c.l.b16 %v2427
      %v2460 = vunpack.c.l.b16 %v2428
      %v2461 = vunpack.c.l.b16 %v2429
      %v2462 = vunpack.c.l.b16 %v2430
      %v2463 = vunpack.c.l.b16 %v2431
      %v2464 = vunpack.c.l.b16 %v2432
      %v2465 = vunpack.c.l.b16 %v2433
      %v2466 = vpack.c.b16 %v2451, %v2450
      %v2467 = vpack.c.b16 %v2453, %v2452
      %v2468 = vpack.c.b16 %v2455, %v2454
      %v2469 = vpack.c.b16 %v2457, %v2456
      %v2470 = vpack.c.b16 %v2459, %v2458
      %v2471 = vpack.c.b16 %v2461, %v2460
      %v2472 = vpack.c.b16 %v2463, %v2462
      %v2473 = vpack.c.b16 %v2465, %v2464
      %2482 = vmatpush.bf16.msra.mxu0 %v2473
      %2483 = vmatpush.bf16.msra.mxu0 %v2472
      %2484 = vmatpush.bf16.msra.mxu0 %v2471
      %2485 = vmatpush.bf16.msra.mxu0 %v2470
      %2486 = vmatpush.bf16.msra.mxu0 %v2469
      %2487 = vmatpush.bf16.msra.mxu0 %v2468
      %2488 = vmatpush.bf16.msra.mxu0 %v2467
      %2489 = vmatpush.bf16.msra.mxu0 %v2466
      %2490 = vmatmul.bf16.gmra.mxu0 %v1643
      %v2491 = vpop.f32.mrf.mxu0
      %v2492 = vadd.f32 0.0, %v2491
      %v2493 = vpop.f32.mrf.mxu0
      %v2494 = vadd.f32 0.0, %v2493
      %2495 = vmatmul.bf16.gmra.mxu0 %v1651
      %v2496 = vpop.f32.mrf.mxu0
      %v2497 = vadd.f32 0.0, %v2496
      %v2498 = vpop.f32.mrf.mxu0
      %v2499 = vadd.f32 0.0, %v2498
      %2500 = vmatmul.bf16.gmra.mxu0 %v1659
      %v2501 = vpop.f32.mrf.mxu0
      %v2502 = vadd.f32 0.0, %v2501
      %v2503 = vpop.f32.mrf.mxu0
      %v2504 = vadd.f32 0.0, %v2503
      %2505 = vmatmul.bf16.gmra.mxu0 %v1667
      %v2506 = vpop.f32.mrf.mxu0
      %v2507 = vadd.f32 0.0, %v2506
      %v2508 = vpop.f32.mrf.mxu0
      %v2509 = vadd.f32 0.0, %v2508
      %2510 = vmatmul.bf16.gmra.mxu0 %v1675
      %v2511 = vpop.f32.mrf.mxu0
      %v2512 = vadd.f32 0.0, %v2511
      %v2513 = vpop.f32.mrf.mxu0
      %v2514 = vadd.f32 0.0, %v2513
      %2515 = vmatmul.bf16.gmra.mxu0 %v1683
      %v2516 = vpop.f32.mrf.mxu0
      %v2517 = vadd.f32 0.0, %v2516
      %v2518 = vpop.f32.mrf.mxu0
      %v2519 = vadd.f32 0.0, %v2518
      %2520 = vmatmul.bf16.gmra.mxu0 %v1691
      %v2521 = vpop.f32.mrf.mxu0
      %v2522 = vadd.f32 0.0, %v2521
      %v2523 = vpop.f32.mrf.mxu0
      %v2524 = vadd.f32 0.0, %v2523
      %2525 = vmatmul.bf16.gmra.mxu0 %v1699
      %v2526 = vpop.f32.mrf.mxu0
      %v2527 = vadd.f32 0.0, %v2526
      %v2528 = vpop.f32.mrf.mxu0
      %v2529 = vadd.f32 0.0, %v2528
      %2530 = vmatmul.bf16.gmra.mxu0 %v1707
      %v2531 = vpop.f32.mrf.mxu0
      %v2532 = vadd.f32 0.0, %v2531
      %v2533 = vpop.f32.mrf.mxu0
      %v2534 = vadd.f32 0.0, %v2533
      %2535 = vmatmul.bf16.gmra.mxu0 %v1715
      %v2536 = vpop.f32.mrf.mxu0
      %v2537 = vadd.f32 0.0, %v2536
      %v2538 = vpop.f32.mrf.mxu0
      %v2539 = vadd.f32 0.0, %v2538
      %2540 = vmatmul.bf16.gmra.mxu0 %v1723
      %v2541 = vpop.f32.mrf.mxu0
      %v2542 = vadd.f32 0.0, %v2541
      %v2543 = vpop.f32.mrf.mxu0
      %v2544 = vadd.f32 0.0, %v2543
      %2545 = vmatmul.bf16.gmra.mxu0 %v1731
      %v2546 = vpop.f32.mrf.mxu0
      %v2547 = vadd.f32 0.0, %v2546
      %v2548 = vpop.f32.mrf.mxu0
      %v2549 = vadd.f32 0.0, %v2548
      %2550 = vmatmul.bf16.gmra.mxu0 %v1739
      %v2551 = vpop.f32.mrf.mxu0
      %v2552 = vadd.f32 0.0, %v2551
      %v2553 = vpop.f32.mrf.mxu0
      %v2554 = vadd.f32 0.0, %v2553
      %2555 = vmatmul.bf16.gmra.mxu0 %v1747
      %v2556 = vpop.f32.mrf.mxu0
      %v2557 = vadd.f32 0.0, %v2556
      %v2558 = vpop.f32.mrf.mxu0
      %v2559 = vadd.f32 0.0, %v2558
      %2560 = vmatmul.bf16.gmra.mxu0 %v1755
      %v2561 = vpop.f32.mrf.mxu0
      %v2562 = vadd.f32 0.0, %v2561
      %v2563 = vpop.f32.mrf.mxu0
      %v2564 = vadd.f32 0.0, %v2563
      %2565 = vmatmul.bf16.gmra.mxu0 %v1763
      %v2566 = vpop.f32.mrf.mxu0
      %v2567 = vadd.f32 0.0, %v2566
      %v2568 = vpop.f32.mrf.mxu0
      %v2569 = vadd.f32 0.0, %v2568
      %2570 = vmatmul.bf16.gmra.mxu0 %v1771
      %v2571 = vpop.f32.mrf.mxu0
      %v2572 = vadd.f32 0.0, %v2571
      %v2573 = vpop.f32.mrf.mxu0
      %v2574 = vadd.f32 0.0, %v2573
      %2575 = vmatmul.bf16.gmra.mxu0 %v1779
      %v2576 = vpop.f32.mrf.mxu0
      %v2577 = vadd.f32 0.0, %v2576
      %v2578 = vpop.f32.mrf.mxu0
      %v2579 = vadd.f32 0.0, %v2578
      %2580 = vmatmul.bf16.gmra.mxu0 %v1787
      %v2581 = vpop.f32.mrf.mxu0
      %v2582 = vadd.f32 0.0, %v2581
      %v2583 = vpop.f32.mrf.mxu0
      %v2584 = vadd.f32 0.0, %v2583
      %2585 = vmatmul.bf16.gmra.mxu0 %v1795
      %v2586 = vpop.f32.mrf.mxu0
      %v2587 = vadd.f32 0.0, %v2586
      %v2588 = vpop.f32.mrf.mxu0
      %v2589 = vadd.f32 0.0, %v2588
      %2590 = vmatmul.bf16.gmra.mxu0 %v1803
      %v2591 = vpop.f32.mrf.mxu0
      %v2592 = vadd.f32 0.0, %v2591
      %v2593 = vpop.f32.mrf.mxu0
      %v2594 = vadd.f32 0.0, %v2593
      %2595 = vmatmul.bf16.gmra.mxu0 %v1811
      %v2596 = vpop.f32.mrf.mxu0
      %v2597 = vadd.f32 0.0, %v2596
      %v2598 = vpop.f32.mrf.mxu0
      %v2599 = vadd.f32 0.0, %v2598
      %2600 = vmatmul.bf16.gmra.mxu0 %v1819
      %v2601 = vpop.f32.mrf.mxu0
      %v2602 = vadd.f32 0.0, %v2601
      %v2603 = vpop.f32.mrf.mxu0
      %v2604 = vadd.f32 0.0, %v2603
      %2605 = vmatmul.bf16.gmra.mxu0 %v1858
      %v2606 = vpop.f32.mrf.mxu0
      %v2607 = vadd.f32 0.0, %v2606
      %v2608 = vpop.f32.mrf.mxu0
      %v2609 = vadd.f32 0.0, %v2608
      %2610 = vdwg.mxu0
      %v2611 = vadd.f32 %v2369, %v2492
      %v2612 = vadd.f32 %v2370, %v2494
      %v2613 = vadd.f32 %v2371, %v2497
      %v2614 = vadd.f32 %v2372, %v2499
      %v2615 = vadd.f32 %v2373, %v2502
      %v2616 = vadd.f32 %v2374, %v2504
      %v2617 = vadd.f32 %v2375, %v2507
      %v2618 = vadd.f32 %v2376, %v2509
      %v2619 = vadd.f32 %v2377, %v2512
      %v2620 = vadd.f32 %v2378, %v2514
      %v2621 = vadd.f32 %v2379, %v2517
      %v2622 = vadd.f32 %v2380, %v2519
      %v2623 = vadd.f32 %v2381, %v2522
      %v2624 = vadd.f32 %v2382, %v2524
      %v2625 = vadd.f32 %v2383, %v2527
      %v2626 = vadd.f32 %v2384, %v2529
      %v2627 = vadd.f32 %v2385, %v2532
      %v2628 = vadd.f32 %v2386, %v2534
      %v2629 = vadd.f32 %v2387, %v2537
      %v2630 = vadd.f32 %v2388, %v2539
      %v2631 = vadd.f32 %v2389, %v2542
      %v2632 = vadd.f32 %v2390, %v2544
      %v2633 = vadd.f32 %v2391, %v2547
      %v2634 = vadd.f32 %v2392, %v2549
      %v2635 = vadd.f32 %v2393, %v2552
      %v2636 = vadd.f32 %v2394, %v2554
      %v2637 = vadd.f32 %v2395, %v2557
      %v2638 = vadd.f32 %v2396, %v2559
      %v2639 = vadd.f32 %v2397, %v2562
      %v2640 = vadd.f32 %v2398, %v2564
      %v2641 = vadd.f32 %v2399, %v2567
      %v2642 = vadd.f32 %v2400, %v2569
      %v2643 = vadd.f32 %v2401, %v2572
      %v2644 = vadd.f32 %v2402, %v2574
      %v2645 = vadd.f32 %v2403, %v2577
      %v2646 = vadd.f32 %v2404, %v2579
      %v2647 = vadd.f32 %v2405, %v2582
      %v2648 = vadd.f32 %v2406, %v2584
      %v2649 = vadd.f32 %v2407, %v2587
      %v2650 = vadd.f32 %v2408, %v2589
      %v2651 = vadd.f32 %v2409, %v2592
      %v2652 = vadd.f32 %v2410, %v2594
      %v2653 = vadd.f32 %v2411, %v2597
      %v2654 = vadd.f32 %v2412, %v2599
      %v2655 = vadd.f32 %v2413, %v2602
      %v2656 = vadd.f32 %v2414, %v2604
      %v2657 = vadd.f32 %v2415, %v2607
      %v2658 = vadd.f32 %v2416, %v2609
      %vm2659 = vcmask 1046528
      %v2660 = vrot.slane %v1128, 1
      %v2661 = vrot.slane %v1129, 1
      %v2662 = vsel %vm2659, %v2660, %v2661
      %v2663 = vrot.slane %v1130, 1
      %v2664 = vsel %vm2659, %v2661, %v2663
      %v2665 = vrot.slane %v1131, 1
      %v2666 = vsel %vm2659, %v2663, %v2665
      %v2667 = vrot.slane %v1132, 1
      %v2668 = vsel %vm2659, %v2665, %v2667
      %v2669 = vrot.slane %v1133, 1
      %v2670 = vsel %vm2659, %v2667, %v2669
      %v2671 = vrot.slane %v1134, 1
      %v2672 = vsel %vm2659, %v2669, %v2671
      %v2673 = vrot.slane %v1135, 1
      %v2674 = vsel %vm2659, %v2671, %v2673
      %v2675 = vrot.slane %v1136, 1
      %v2676 = vsel %vm2659, %v2673, %v2675
      %v2677 = vrot.slane %v1137, 1
      %v2678 = vsel %vm2659, %v2675, %v2677
      %v2679 = vrot.slane %v1138, 1
      %v2680 = vsel %vm2659, %v2677, %v2679
      %v2681 = vrot.slane %v1139, 1
      %v2682 = vsel %vm2659, %v2679, %v2681
      %v2683 = vrot.slane %v1140, 1
      %v2684 = vsel %vm2659, %v2681, %v2683
      %v2685 = vrot.slane %v1141, 1
      %v2686 = vsel %vm2659, %v2683, %v2685
      %v2687 = vrot.slane %v1142, 1
      %v2688 = vsel %vm2659, %v2685, %v2687
      %v2689 = vrot.slane %v1143, 1
      %v2690 = vsel %vm2659, %v2687, %v2689
      %v2691 = vrot.slane %v1144, 1
      %v2692 = vsel %vm2659, %v2689, %v2691
      %v2693 = vrot.slane %v1145, 1
      %v2694 = vsel %vm2659, %v2691, %v2693
      %v2695 = vrot.slane %v1146, 1
      %v2696 = vsel %vm2659, %v2693, %v2695
      %v2697 = vrot.slane %v1147, 1
      %v2698 = vsel %vm2659, %v2695, %v2697
      %v2699 = vrot.slane %v1148, 1
      %v2700 = vsel %vm2659, %v2697, %v2699
      %v2701 = vrot.slane %v1149, 1
      %v2702 = vsel %vm2659, %v2699, %v2701
      %v2703 = vrot.slane %v1150, 1
      %v2704 = vsel %vm2659, %v2701, %v2703
      %v2705 = vrot.slane %v1151, 1
      %v2706 = vsel %vm2659, %v2703, %v2705
      %v2707 = vrot.slane %v1376, 1
      %v2708 = vsel %vm2659, %v2705, %v2707
      %v2709 = vrot.slane %v1377, 1
      %v2710 = vsel %vm2659, %v2707, %v2709
      %v2711 = vrot.slane %v1378, 1
      %v2712 = vsel %vm2659, %v2709, %v2711
      %v2739 = vrot.slane %v1850, 1
      %vm2740 = vcmask 1046528
      %v2743 = vsel %vm2740, %v2711, %v2739
      %s2745 = scalar_lea.vmem %s1, 128
      %v2746 = vld [vmem:[%s2745] sm:$0xf]
      %v2747 = vld [vmem:[%s2745 + $0x4] sm:$0xf]
      %v2748 = vld [vmem:[%s2745 + $0x8] sm:$0xf]
      %v2749 = vld [vmem:[%s2745 + $0xc] sm:$0xf]
      %v2750 = vld [vmem:[%s2745 + $0x10] sm:$0xf]
      %v2751 = vld [vmem:[%s2745 + $0x14] sm:$0xf]
      %v2752 = vld [vmem:[%s2745 + $0x18] sm:$0xf]
      %v2753 = vld [vmem:[%s2745 + $0x1c] sm:$0xf]
      %v2754 = vld [vmem:[%s2745 + $0x20] sm:$0xf]
      %v2755 = vld [vmem:[%s2745 + $0x24] sm:$0xf]
      %v2756 = vld [vmem:[%s2745 + $0x28] sm:$0xf]
      %v2757 = vld [vmem:[%s2745 + $0x2c] sm:$0xf]
      %v2758 = vld [vmem:[%s2745 + $0x30] sm:$0xf]
      %v2759 = vld [vmem:[%s2745 + $0x34] sm:$0xf]
      %v2760 = vld [vmem:[%s2745 + $0x38] sm:$0xf]
      %v2761 = vld [vmem:[%s2745 + $0x3c] sm:$0xf]
      %v2778 = vunpack.c.l.b16 %v2746
      %v2779 = vunpack.c.l.b16 %v2747
      %v2780 = vunpack.c.l.b16 %v2748
      %v2781 = vunpack.c.l.b16 %v2749
      %v2782 = vunpack.c.l.b16 %v2750
      %v2783 = vunpack.c.l.b16 %v2751
      %v2784 = vunpack.c.l.b16 %v2752
      %v2785 = vunpack.c.l.b16 %v2753
      %v2786 = vunpack.c.l.b16 %v2754
      %v2787 = vunpack.c.l.b16 %v2755
      %v2788 = vunpack.c.l.b16 %v2756
      %v2789 = vunpack.c.l.b16 %v2757
      %v2790 = vunpack.c.l.b16 %v2758
      %v2791 = vunpack.c.l.b16 %v2759
      %v2792 = vunpack.c.l.b16 %v2760
      %v2793 = vunpack.c.l.b16 %v2761
      %v2794 = vpack.c.b16 %v2779, %v2778
      %v2795 = vpack.c.b16 %v2781, %v2780
      %v2796 = vpack.c.b16 %v2783, %v2782
      %v2797 = vpack.c.b16 %v2785, %v2784
      %v2798 = vpack.c.b16 %v2787, %v2786
      %v2799 = vpack.c.b16 %v2789, %v2788
      %v2800 = vpack.c.b16 %v2791, %v2790
      %v2801 = vpack.c.b16 %v2793, %v2792
      %2810 = vmatpush.bf16.msra.mxu0 %v2801
      %2811 = vmatpush.bf16.msra.mxu0 %v2800
      %2812 = vmatpush.bf16.msra.mxu0 %v2799
      %2813 = vmatpush.bf16.msra.mxu0 %v2798
      %2814 = vmatpush.bf16.msra.mxu0 %v2797
      %2815 = vmatpush.bf16.msra.mxu0 %v2796
      %2816 = vmatpush.bf16.msra.mxu0 %v2795
      %2817 = vmatpush.bf16.msra.mxu0 %v2794
      %2818 = vmatmul.bf16.gmra.mxu0 %v2662
      %v2819 = vpop.f32.mrf.mxu0
      %v2820 = vadd.f32 0.0, %v2819
      %v2821 = vpop.f32.mrf.mxu0
      %v2822 = vadd.f32 0.0, %v2821
      %2823 = vmatmul.bf16.gmra.mxu0 %v2664
      %v2824 = vpop.f32.mrf.mxu0
      %v2825 = vadd.f32 0.0, %v2824
      %v2826 = vpop.f32.mrf.mxu0
      %v2827 = vadd.f32 0.0, %v2826
      %2828 = vmatmul.bf16.gmra.mxu0 %v2666
      %v2829 = vpop.f32.mrf.mxu0
      %v2830 = vadd.f32 0.0, %v2829
      %v2831 = vpop.f32.mrf.mxu0
      %v2832 = vadd.f32 0.0, %v2831
      %2833 = vmatmul.bf16.gmra.mxu0 %v2668
      %v2834 = vpop.f32.mrf.mxu0
      %v2835 = vadd.f32 0.0, %v2834
      %v2836 = vpop.f32.mrf.mxu0
      %v2837 = vadd.f32 0.0, %v2836
      %2838 = vmatmul.bf16.gmra.mxu0 %v2670
      %v2839 = vpop.f32.mrf.mxu0
      %v2840 = vadd.f32 0.0, %v2839
      %v2841 = vpop.f32.mrf.mxu0
      %v2842 = vadd.f32 0.0, %v2841
      %2843 = vmatmul.bf16.gmra.mxu0 %v2672
      %v2844 = vpop.f32.mrf.mxu0
      %v2845 = vadd.f32 0.0, %v2844
      %v2846 = vpop.f32.mrf.mxu0
      %v2847 = vadd.f32 0.0, %v2846
      %2848 = vmatmul.bf16.gmra.mxu0 %v2674
      %v2849 = vpop.f32.mrf.mxu0
      %v2850 = vadd.f32 0.0, %v2849
      %v2851 = vpop.f32.mrf.mxu0
      %v2852 = vadd.f32 0.0, %v2851
      %2853 = vmatmul.bf16.gmra.mxu0 %v2676
      %v2854 = vpop.f32.mrf.mxu0
      %v2855 = vadd.f32 0.0, %v2854
      %v2856 = vpop.f32.mrf.mxu0
      %v2857 = vadd.f32 0.0, %v2856
      %2858 = vmatmul.bf16.gmra.mxu0 %v2678
      %v2859 = vpop.f32.mrf.mxu0
      %v2860 = vadd.f32 0.0, %v2859
      %v2861 = vpop.f32.mrf.mxu0
      %v2862 = vadd.f32 0.0, %v2861
      %2863 = vmatmul.bf16.gmra.mxu0 %v2680
      %v2864 = vpop.f32.mrf.mxu0
      %v2865 = vadd.f32 0.0, %v2864
      %v2866 = vpop.f32.mrf.mxu0
      %v2867 = vadd.f32 0.0, %v2866
      %2868 = vmatmul.bf16.gmra.mxu0 %v2682
      %v2869 = vpop.f32.mrf.mxu0
      %v2870 = vadd.f32 0.0, %v2869
      %v2871 = vpop.f32.mrf.mxu0
      %v2872 = vadd.f32 0.0, %v2871
      %2873 = vmatmul.bf16.gmra.mxu0 %v2684
      %v2874 = vpop.f32.mrf.mxu0
      %v2875 = vadd.f32 0.0, %v2874
      %v2876 = vpop.f32.mrf.mxu0
      %v2877 = vadd.f32 0.0, %v2876
      %2878 = vmatmul.bf16.gmra.mxu0 %v2686
      %v2879 = vpop.f32.mrf.mxu0
      %v2880 = vadd.f32 0.0, %v2879
      %v2881 = vpop.f32.mrf.mxu0
      %v2882 = vadd.f32 0.0, %v2881
      %2883 = vmatmul.bf16.gmra.mxu0 %v2688
      %v2884 = vpop.f32.mrf.mxu0
      %v2885 = vadd.f32 0.0, %v2884
      %v2886 = vpop.f32.mrf.mxu0
      %v2887 = vadd.f32 0.0, %v2886
      %2888 = vmatmul.bf16.gmra.mxu0 %v2690
      %v2889 = vpop.f32.mrf.mxu0
      %v2890 = vadd.f32 0.0, %v2889
      %v2891 = vpop.f32.mrf.mxu0
      %v2892 = vadd.f32 0.0, %v2891
      %2893 = vmatmul.bf16.gmra.mxu0 %v2692
      %v2894 = vpop.f32.mrf.mxu0
      %v2895 = vadd.f32 0.0, %v2894
      %v2896 = vpop.f32.mrf.mxu0
      %v2897 = vadd.f32 0.0, %v2896
      %2898 = vmatmul.bf16.gmra.mxu0 %v2694
      %v2899 = vpop.f32.mrf.mxu0
      %v2900 = vadd.f32 0.0, %v2899
      %v2901 = vpop.f32.mrf.mxu0
      %v2902 = vadd.f32 0.0, %v2901
      %2903 = vmatmul.bf16.gmra.mxu0 %v2696
      %v2904 = vpop.f32.mrf.mxu0
      %v2905 = vadd.f32 0.0, %v2904
      %v2906 = vpop.f32.mrf.mxu0
      %v2907 = vadd.f32 0.0, %v2906
      %2908 = vmatmul.bf16.gmra.mxu0 %v2698
      %v2909 = vpop.f32.mrf.mxu0
      %v2910 = vadd.f32 0.0, %v2909
      %v2911 = vpop.f32.mrf.mxu0
      %v2912 = vadd.f32 0.0, %v2911
      %2913 = vmatmul.bf16.gmra.mxu0 %v2700
      %v2914 = vpop.f32.mrf.mxu0
      %v2915 = vadd.f32 0.0, %v2914
      %v2916 = vpop.f32.mrf.mxu0
      %v2917 = vadd.f32 0.0, %v2916
      %2918 = vmatmul.bf16.gmra.mxu0 %v2702
      %v2919 = vpop.f32.mrf.mxu0
      %v2920 = vadd.f32 0.0, %v2919
      %v2921 = vpop.f32.mrf.mxu0
      %v2922 = vadd.f32 0.0, %v2921
      %2923 = vmatmul.bf16.gmra.mxu0 %v2704
      %v2924 = vpop.f32.mrf.mxu0
      %v2925 = vadd.f32 0.0, %v2924
      %v2926 = vpop.f32.mrf.mxu0
      %v2927 = vadd.f32 0.0, %v2926
      %2928 = vmatmul.bf16.gmra.mxu0 %v2706
      %v2929 = vpop.f32.mrf.mxu0
      %v2930 = vadd.f32 0.0, %v2929
      %v2931 = vpop.f32.mrf.mxu0
      %v2932 = vadd.f32 0.0, %v2931
      %2933 = vmatmul.bf16.gmra.mxu0 %v2708
      %v2934 = vpop.f32.mrf.mxu0
      %v2935 = vadd.f32 0.0, %v2934
      %v2936 = vpop.f32.mrf.mxu0
      %v2937 = vadd.f32 0.0, %v2936
      %2938 = vdwg.mxu0
      %v2939 = vadd.f32 %v2611, %v2820
      %v2940 = vadd.f32 %v2612, %v2822
      %v2941 = vadd.f32 %v2613, %v2825
      %v2942 = vadd.f32 %v2614, %v2827
      %v2943 = vadd.f32 %v2615, %v2830
      %v2944 = vadd.f32 %v2616, %v2832
      %v2945 = vadd.f32 %v2617, %v2835
      %v2946 = vadd.f32 %v2618, %v2837
      %v2947 = vadd.f32 %v2619, %v2840
      %v2948 = vadd.f32 %v2620, %v2842
      %v2949 = vadd.f32 %v2621, %v2845
      %v2950 = vadd.f32 %v2622, %v2847
      %v2951 = vadd.f32 %v2623, %v2850
      %v2952 = vadd.f32 %v2624, %v2852
      %v2953 = vadd.f32 %v2625, %v2855
      %v2954 = vadd.f32 %v2626, %v2857
      %v2955 = vadd.f32 %v2627, %v2860
      %v2956 = vadd.f32 %v2628, %v2862
      %v2957 = vadd.f32 %v2629, %v2865
      %v2958 = vadd.f32 %v2630, %v2867
      %v2959 = vadd.f32 %v2631, %v2870
      %v2960 = vadd.f32 %v2632, %v2872
      %v2961 = vadd.f32 %v2633, %v2875
      %v2962 = vadd.f32 %v2634, %v2877
      %v2963 = vadd.f32 %v2635, %v2880
      %v2964 = vadd.f32 %v2636, %v2882
      %v2965 = vadd.f32 %v2637, %v2885
      %v2966 = vadd.f32 %v2638, %v2887
      %v2967 = vadd.f32 %v2639, %v2890
      %v2968 = vadd.f32 %v2640, %v2892
      %v2969 = vadd.f32 %v2641, %v2895
      %v2970 = vadd.f32 %v2642, %v2897
      %v2971 = vadd.f32 %v2643, %v2900
      %v2972 = vadd.f32 %v2644, %v2902
      %v2973 = vadd.f32 %v2645, %v2905
      %v2974 = vadd.f32 %v2646, %v2907
      %v2975 = vadd.f32 %v2647, %v2910
      %v2976 = vadd.f32 %v2648, %v2912
      %v2977 = vadd.f32 %v2649, %v2915
      %v2978 = vadd.f32 %v2650, %v2917
      %v2979 = vadd.f32 %v2651, %v2920
      %v2980 = vadd.f32 %v2652, %v2922
      %v2981 = vadd.f32 %v2653, %v2925
      %v2982 = vadd.f32 %v2654, %v2927
      %v2983 = vadd.f32 %v2655, %v2930
      %v2984 = vadd.f32 %v2656, %v2932
      %v2985 = vadd.f32 %v2657, %v2935
      %v2986 = vadd.f32 %v2658, %v2937
      %s2987 = scalar_lea.vmem %s1, 320
      %v2988 = vld [vmem:[%s2987] sm:$0xf]
      %v2989 = vld [vmem:[%s2987 + $0x4] sm:$0xf]
      %v2990 = vld [vmem:[%s2987 + $0x8] sm:$0xf]
      %v2991 = vld [vmem:[%s2987 + $0xc] sm:$0xf]
      %v2992 = vld [vmem:[%s2987 + $0x10] sm:$0xf]
      %v2993 = vld [vmem:[%s2987 + $0x14] sm:$0xf]
      %v2994 = vld [vmem:[%s2987 + $0x18] sm:$0xf]
      %v2995 = vld [vmem:[%s2987 + $0x1c] sm:$0xf]
      %v2996 = vld [vmem:[%s2987 + $0x20] sm:$0xf]
      %v2997 = vld [vmem:[%s2987 + $0x24] sm:$0xf]
      %v2998 = vld [vmem:[%s2987 + $0x28] sm:$0xf]
      %v2999 = vld [vmem:[%s2987 + $0x2c] sm:$0xf]
      %v3000 = vld [vmem:[%s2987 + $0x30] sm:$0xf]
      %v3001 = vld [vmem:[%s2987 + $0x34] sm:$0xf]
      %v3002 = vld [vmem:[%s2987 + $0x38] sm:$0xf]
      %v3003 = vld [vmem:[%s2987 + $0x3c] sm:$0xf]
      %v3004 = vrot.slane %v2664, 4
      %v3005 = vrot.slane %v2666, 4
      %v3006 = vsel %vm2118, %v3004, %v3005
      %v3007 = vrot.slane %v2668, 4
      %v3008 = vsel %vm2118, %v3005, %v3007
      %v3009 = vrot.slane %v2670, 4
      %v3010 = vsel %vm2118, %v3007, %v3009
      %v3011 = vrot.slane %v2672, 4
      %v3012 = vsel %vm2118, %v3009, %v3011
      %v3013 = vrot.slane %v2674, 4
      %v3014 = vsel %vm2118, %v3011, %v3013
      %v3015 = vrot.slane %v2676, 4
      %v3016 = vsel %vm2118, %v3013, %v3015
      %v3017 = vrot.slane %v2678, 4
      %v3018 = vsel %vm2118, %v3015, %v3017
      %v3019 = vrot.slane %v2680, 4
      %v3020 = vsel %vm2118, %v3017, %v3019
      %v3021 = vrot.slane %v2682, 4
      %v3022 = vsel %vm2118, %v3019, %v3021
      %v3023 = vrot.slane %v2684, 4
      %v3024 = vsel %vm2118, %v3021, %v3023
      %v3025 = vrot.slane %v2686, 4
      %v3026 = vsel %vm2118, %v3023, %v3025
      %v3027 = vrot.slane %v2688, 4
      %v3028 = vsel %vm2118, %v3025, %v3027
      %v3029 = vrot.slane %v2690, 4
      %v3030 = vsel %vm2118, %v3027, %v3029
      %v3031 = vrot.slane %v2692, 4
      %v3032 = vsel %vm2118, %v3029, %v3031
      %v3033 = vrot.slane %v2694, 4
      %v3034 = vsel %vm2118, %v3031, %v3033
      %v3035 = vrot.slane %v2696, 4
      %v3036 = vsel %vm2118, %v3033, %v3035
      %v3037 = vrot.slane %v2698, 4
      %v3038 = vsel %vm2118, %v3035, %v3037
      %v3039 = vrot.slane %v2700, 4
      %v3040 = vsel %vm2118, %v3037, %v3039
      %v3041 = vrot.slane %v2702, 4
      %v3042 = vsel %vm2118, %v3039, %v3041
      %v3043 = vrot.slane %v2704, 4
      %v3044 = vsel %vm2118, %v3041, %v3043
      %v3045 = vrot.slane %v2706, 4
      %v3046 = vsel %vm2118, %v3043, %v3045
      %v3047 = vrot.slane %v2708, 4
      %v3048 = vsel %vm2118, %v3045, %v3047
      %v3049 = vrot.slane %v2710, 4
      %v3050 = vsel %vm2118, %v3047, %v3049
      %v3051 = vrot.slane %v2712, 4
      %v3052 = vsel %vm2118, %v3049, %v3051
      %v3093 = vunpack.c.l.b16 %v2988
      %v3094 = vunpack.c.l.b16 %v2989
      %v3095 = vunpack.c.l.b16 %v2990
      %v3096 = vunpack.c.l.b16 %v2991
      %v3097 = vunpack.c.l.b16 %v2992
      %v3098 = vunpack.c.l.b16 %v2993
      %v3099 = vunpack.c.l.b16 %v2994
      %v3100 = vunpack.c.l.b16 %v2995
      %v3101 = vunpack.c.l.b16 %v2996
      %v3102 = vunpack.c.l.b16 %v2997
      %v3103 = vunpack.c.l.b16 %v2998
      %v3104 = vunpack.c.l.b16 %v2999
      %v3105 = vunpack.c.l.b16 %v3000
      %v3106 = vunpack.c.l.b16 %v3001
      %v3107 = vunpack.c.l.b16 %v3002
      %v3108 = vunpack.c.l.b16 %v3003
      %v3109 = vpack.c.b16 %v3094, %v3093
      %v3110 = vpack.c.b16 %v3096, %v3095
      %v3111 = vpack.c.b16 %v3098, %v3097
      %v3112 = vpack.c.b16 %v3100, %v3099
      %v3113 = vpack.c.b16 %v3102, %v3101
      %v3114 = vpack.c.b16 %v3104, %v3103
      %v3115 = vpack.c.b16 %v3106, %v3105
      %v3116 = vpack.c.b16 %v3108, %v3107
      %3125 = vmatpush.bf16.msra.mxu0 %v3116
      %3126 = vmatpush.bf16.msra.mxu0 %v3115
      %3127 = vmatpush.bf16.msra.mxu0 %v3114
      %3128 = vmatpush.bf16.msra.mxu0 %v3113
      %3129 = vmatpush.bf16.msra.mxu0 %v3112
      %3130 = vmatpush.bf16.msra.mxu0 %v3111
      %3131 = vmatpush.bf16.msra.mxu0 %v3110
      %3132 = vmatpush.bf16.msra.mxu0 %v3109
      %3133 = vmatmul.bf16.gmra.mxu0 %v3006
      %v3134 = vpop.f32.mrf.mxu0
      %v3135 = vadd.f32 0.0, %v3134
      %v3136 = vpop.f32.mrf.mxu0
      %v3137 = vadd.f32 0.0, %v3136
      %3138 = vmatmul.bf16.gmra.mxu0 %v3008
      %v3139 = vpop.f32.mrf.mxu0
      %v3140 = vadd.f32 0.0, %v3139
      %v3141 = vpop.f32.mrf.mxu0
      %v3142 = vadd.f32 0.0, %v3141
      %3143 = vmatmul.bf16.gmra.mxu0 %v3010
      %v3144 = vpop.f32.mrf.mxu0
      %v3145 = vadd.f32 0.0, %v3144
      %v3146 = vpop.f32.mrf.mxu0
      %v3147 = vadd.f32 0.0, %v3146
      %3148 = vmatmul.bf16.gmra.mxu0 %v3012
      %v3149 = vpop.f32.mrf.mxu0
      %v3150 = vadd.f32 0.0, %v3149
      %v3151 = vpop.f32.mrf.mxu0
      %v3152 = vadd.f32 0.0, %v3151
      %3153 = vmatmul.bf16.gmra.mxu0 %v3014
      %v3154 = vpop.f32.mrf.mxu0
      %v3155 = vadd.f32 0.0, %v3154
      %v3156 = vpop.f32.mrf.mxu0
      %v3157 = vadd.f32 0.0, %v3156
      %3158 = vmatmul.bf16.gmra.mxu0 %v3016
      %v3159 = vpop.f32.mrf.mxu0
      %v3160 = vadd.f32 0.0, %v3159
      %v3161 = vpop.f32.mrf.mxu0
      %v3162 = vadd.f32 0.0, %v3161
      %3163 = vmatmul.bf16.gmra.mxu0 %v3018
      %v3164 = vpop.f32.mrf.mxu0
      %v3165 = vadd.f32 0.0, %v3164
      %v3166 = vpop.f32.mrf.mxu0
      %v3167 = vadd.f32 0.0, %v3166
      %3168 = vmatmul.bf16.gmra.mxu0 %v3020
      %v3169 = vpop.f32.mrf.mxu0
      %v3170 = vadd.f32 0.0, %v3169
      %v3171 = vpop.f32.mrf.mxu0
      %v3172 = vadd.f32 0.0, %v3171
      %3173 = vmatmul.bf16.gmra.mxu0 %v3022
      %v3174 = vpop.f32.mrf.mxu0
      %v3175 = vadd.f32 0.0, %v3174
      %v3176 = vpop.f32.mrf.mxu0
      %v3177 = vadd.f32 0.0, %v3176
      %3178 = vmatmul.bf16.gmra.mxu0 %v3024
      %v3179 = vpop.f32.mrf.mxu0
      %v3180 = vadd.f32 0.0, %v3179
      %v3181 = vpop.f32.mrf.mxu0
      %v3182 = vadd.f32 0.0, %v3181
      %3183 = vmatmul.bf16.gmra.mxu0 %v3026
      %v3184 = vpop.f32.mrf.mxu0
      %v3185 = vadd.f32 0.0, %v3184
      %v3186 = vpop.f32.mrf.mxu0
      %v3187 = vadd.f32 0.0, %v3186
      %3188 = vmatmul.bf16.gmra.mxu0 %v3028
      %v3189 = vpop.f32.mrf.mxu0
      %v3190 = vadd.f32 0.0, %v3189
      %v3191 = vpop.f32.mrf.mxu0
      %v3192 = vadd.f32 0.0, %v3191
      %3193 = vmatmul.bf16.gmra.mxu0 %v3030
      %v3194 = vpop.f32.mrf.mxu0
      %v3195 = vadd.f32 0.0, %v3194
      %v3196 = vpop.f32.mrf.mxu0
      %v3197 = vadd.f32 0.0, %v3196
      %3198 = vmatmul.bf16.gmra.mxu0 %v3032
      %v3199 = vpop.f32.mrf.mxu0
      %v3200 = vadd.f32 0.0, %v3199
      %v3201 = vpop.f32.mrf.mxu0
      %v3202 = vadd.f32 0.0, %v3201
      %3203 = vmatmul.bf16.gmra.mxu0 %v3034
      %v3204 = vpop.f32.mrf.mxu0
      %v3205 = vadd.f32 0.0, %v3204
      %v3206 = vpop.f32.mrf.mxu0
      %v3207 = vadd.f32 0.0, %v3206
      %3208 = vmatmul.bf16.gmra.mxu0 %v3036
      %v3209 = vpop.f32.mrf.mxu0
      %v3210 = vadd.f32 0.0, %v3209
      %v3211 = vpop.f32.mrf.mxu0
      %v3212 = vadd.f32 0.0, %v3211
      %3213 = vmatmul.bf16.gmra.mxu0 %v3038
      %v3214 = vpop.f32.mrf.mxu0
      %v3215 = vadd.f32 0.0, %v3214
      %v3216 = vpop.f32.mrf.mxu0
      %v3217 = vadd.f32 0.0, %v3216
      %3218 = vmatmul.bf16.gmra.mxu0 %v3040
      %v3219 = vpop.f32.mrf.mxu0
      %v3220 = vadd.f32 0.0, %v3219
      %v3221 = vpop.f32.mrf.mxu0
      %v3222 = vadd.f32 0.0, %v3221
      %3223 = vmatmul.bf16.gmra.mxu0 %v3042
      %v3224 = vpop.f32.mrf.mxu0
      %v3225 = vadd.f32 0.0, %v3224
      %v3226 = vpop.f32.mrf.mxu0
      %v3227 = vadd.f32 0.0, %v3226
      %3228 = vmatmul.bf16.gmra.mxu0 %v3044
      %v3229 = vpop.f32.mrf.mxu0
      %v3230 = vadd.f32 0.0, %v3229
      %v3231 = vpop.f32.mrf.mxu0
      %v3232 = vadd.f32 0.0, %v3231
      %3233 = vmatmul.bf16.gmra.mxu0 %v3046
      %v3234 = vpop.f32.mrf.mxu0
      %v3235 = vadd.f32 0.0, %v3234
      %v3236 = vpop.f32.mrf.mxu0
      %v3237 = vadd.f32 0.0, %v3236
      %3238 = vmatmul.bf16.gmra.mxu0 %v3048
      %v3239 = vpop.f32.mrf.mxu0
      %v3240 = vadd.f32 0.0, %v3239
      %v3241 = vpop.f32.mrf.mxu0
      %v3242 = vadd.f32 0.0, %v3241
      %3243 = vmatmul.bf16.gmra.mxu0 %v3050
      %v3244 = vpop.f32.mrf.mxu0
      %v3245 = vadd.f32 0.0, %v3244
      %v3246 = vpop.f32.mrf.mxu0
      %v3247 = vadd.f32 0.0, %v3246
      %3248 = vmatmul.bf16.gmra.mxu0 %v3052
      %v3249 = vpop.f32.mrf.mxu0
      %v3250 = vadd.f32 0.0, %v3249
      %v3251 = vpop.f32.mrf.mxu0
      %v3252 = vadd.f32 0.0, %v3251
      %3253 = vdwg.mxu0
      %v3254 = vadd.f32 %v2939, %v3135
      %v3255 = vadd.f32 %v2940, %v3137
      %v3256 = vadd.f32 %v2941, %v3140
      %v3257 = vadd.f32 %v2942, %v3142
      %v3258 = vadd.f32 %v2943, %v3145
      %v3259 = vadd.f32 %v2944, %v3147
      %v3260 = vadd.f32 %v2945, %v3150
      %v3261 = vadd.f32 %v2946, %v3152
      %v3262 = vadd.f32 %v2947, %v3155
      %v3263 = vadd.f32 %v2948, %v3157
      %v3264 = vadd.f32 %v2949, %v3160
      %v3265 = vadd.f32 %v2950, %v3162
      %v3266 = vadd.f32 %v2951, %v3165
      %v3267 = vadd.f32 %v2952, %v3167
      %v3268 = vadd.f32 %v2953, %v3170
      %v3269 = vadd.f32 %v2954, %v3172
      %v3270 = vadd.f32 %v2955, %v3175
      %v3271 = vadd.f32 %v2956, %v3177
      %v3272 = vadd.f32 %v2957, %v3180
      %v3273 = vadd.f32 %v2958, %v3182
      %v3274 = vadd.f32 %v2959, %v3185
      %v3275 = vadd.f32 %v2960, %v3187
      %v3276 = vadd.f32 %v2961, %v3190
      %v3277 = vadd.f32 %v2962, %v3192
      %v3278 = vadd.f32 %v2963, %v3195
      %v3279 = vadd.f32 %v2964, %v3197
      %v3280 = vadd.f32 %v2965, %v3200
      %v3281 = vadd.f32 %v2966, %v3202
      %v3282 = vadd.f32 %v2967, %v3205
      %v3283 = vadd.f32 %v2968, %v3207
      %v3284 = vadd.f32 %v2969, %v3210
      %v3285 = vadd.f32 %v2970, %v3212
      %v3286 = vadd.f32 %v2971, %v3215
      %v3287 = vadd.f32 %v2972, %v3217
      %v3288 = vadd.f32 %v2973, %v3220
      %v3289 = vadd.f32 %v2974, %v3222
      %v3290 = vadd.f32 %v2975, %v3225
      %v3291 = vadd.f32 %v2976, %v3227
      %v3292 = vadd.f32 %v2977, %v3230
      %v3293 = vadd.f32 %v2978, %v3232
      %v3294 = vadd.f32 %v2979, %v3235
      %v3295 = vadd.f32 %v2980, %v3237
      %v3296 = vadd.f32 %v2981, %v3240
      %v3297 = vadd.f32 %v2982, %v3242
      %v3298 = vadd.f32 %v2983, %v3245
      %v3299 = vadd.f32 %v2984, %v3247
      %v3300 = vadd.f32 %v2985, %v3250
      %v3301 = vadd.f32 %v2986, %v3252
      %s3302 = scalar_lea.vmem %s1, 512
      %v3303 = vld [vmem:[%s3302] sm:$0xf]
      %v3304 = vld [vmem:[%s3302 + $0x4] sm:$0xf]
      %v3305 = vld [vmem:[%s3302 + $0x8] sm:$0xf]
      %v3306 = vld [vmem:[%s3302 + $0xc] sm:$0xf]
      %v3307 = vld [vmem:[%s3302 + $0x10] sm:$0xf]
      %v3308 = vld [vmem:[%s3302 + $0x14] sm:$0xf]
      %v3309 = vld [vmem:[%s3302 + $0x18] sm:$0xf]
      %v3310 = vld [vmem:[%s3302 + $0x1c] sm:$0xf]
      %v3311 = vld [vmem:[%s3302 + $0x20] sm:$0xf]
      %v3312 = vld [vmem:[%s3302 + $0x24] sm:$0xf]
      %v3313 = vld [vmem:[%s3302 + $0x28] sm:$0xf]
      %v3314 = vld [vmem:[%s3302 + $0x2c] sm:$0xf]
      %v3315 = vld [vmem:[%s3302 + $0x30] sm:$0xf]
      %v3316 = vld [vmem:[%s3302 + $0x34] sm:$0xf]
      %v3317 = vld [vmem:[%s3302 + $0x38] sm:$0xf]
      %v3318 = vld [vmem:[%s3302 + $0x3c] sm:$0xf]
      %v3335 = vunpack.c.l.b16 %v3303
      %v3336 = vunpack.c.l.b16 %v3304
      %v3337 = vunpack.c.l.b16 %v3305
      %v3338 = vunpack.c.l.b16 %v3306
      %v3339 = vunpack.c.l.b16 %v3307
      %v3340 = vunpack.c.l.b16 %v3308
      %v3341 = vunpack.c.l.b16 %v3309
      %v3342 = vunpack.c.l.b16 %v3310
      %v3343 = vunpack.c.l.b16 %v3311
      %v3344 = vunpack.c.l.b16 %v3312
      %v3345 = vunpack.c.l.b16 %v3313
      %v3346 = vunpack.c.l.b16 %v3314
      %v3347 = vunpack.c.l.b16 %v3315
      %v3348 = vunpack.c.l.b16 %v3316
      %v3349 = vunpack.c.l.b16 %v3317
      %v3350 = vunpack.c.l.b16 %v3318
      %v3351 = vpack.c.b16 %v3336, %v3335
      %v3352 = vpack.c.b16 %v3338, %v3337
      %v3353 = vpack.c.b16 %v3340, %v3339
      %v3354 = vpack.c.b16 %v3342, %v3341
      %v3355 = vpack.c.b16 %v3344, %v3343
      %v3356 = vpack.c.b16 %v3346, %v3345
      %v3357 = vpack.c.b16 %v3348, %v3347
      %v3358 = vpack.c.b16 %v3350, %v3349
      %3367 = vmatpush.bf16.msra.mxu0 %v3358
      %3368 = vmatpush.bf16.msra.mxu0 %v3357
      %3369 = vmatpush.bf16.msra.mxu0 %v3356
      %3370 = vmatpush.bf16.msra.mxu0 %v3355
      %3371 = vmatpush.bf16.msra.mxu0 %v3354
      %3372 = vmatpush.bf16.msra.mxu0 %v3353
      %3373 = vmatpush.bf16.msra.mxu0 %v3352
      %3374 = vmatpush.bf16.msra.mxu0 %v3351
      %3375 = vmatmul.bf16.gmra.mxu0 %v2668
      %v3376 = vpop.f32.mrf.mxu0
      %v3377 = vadd.f32 0.0, %v3376
      %v3378 = vpop.f32.mrf.mxu0
      %v3379 = vadd.f32 0.0, %v3378
      %3380 = vmatmul.bf16.gmra.mxu0 %v2670
      %v3381 = vpop.f32.mrf.mxu0
      %v3382 = vadd.f32 0.0, %v3381
      %v3383 = vpop.f32.mrf.mxu0
      %v3384 = vadd.f32 0.0, %v3383
      %3385 = vmatmul.bf16.gmra.mxu0 %v2672
      %v3386 = vpop.f32.mrf.mxu0
      %v3387 = vadd.f32 0.0, %v3386
      %v3388 = vpop.f32.mrf.mxu0
      %v3389 = vadd.f32 0.0, %v3388
      %3390 = vmatmul.bf16.gmra.mxu0 %v2674
      %v3391 = vpop.f32.mrf.mxu0
      %v3392 = vadd.f32 0.0, %v3391
      %v3393 = vpop.f32.mrf.mxu0
      %v3394 = vadd.f32 0.0, %v3393
      %3395 = vmatmul.bf16.gmra.mxu0 %v2676
      %v3396 = vpop.f32.mrf.mxu0
      %v3397 = vadd.f32 0.0, %v3396
      %v3398 = vpop.f32.mrf.mxu0
      %v3399 = vadd.f32 0.0, %v3398
      %3400 = vmatmul.bf16.gmra.mxu0 %v2678
      %v3401 = vpop.f32.mrf.mxu0
      %v3402 = vadd.f32 0.0, %v3401
      %v3403 = vpop.f32.mrf.mxu0
      %v3404 = vadd.f32 0.0, %v3403
      %3405 = vmatmul.bf16.gmra.mxu0 %v2680
      %v3406 = vpop.f32.mrf.mxu0
      %v3407 = vadd.f32 0.0, %v3406
      %v3408 = vpop.f32.mrf.mxu0
      %v3409 = vadd.f32 0.0, %v3408
      %3410 = vmatmul.bf16.gmra.mxu0 %v2682
      %v3411 = vpop.f32.mrf.mxu0
      %v3412 = vadd.f32 0.0, %v3411
      %v3413 = vpop.f32.mrf.mxu0
      %v3414 = vadd.f32 0.0, %v3413
      %3415 = vmatmul.bf16.gmra.mxu0 %v2684
      %v3416 = vpop.f32.mrf.mxu0
      %v3417 = vadd.f32 0.0, %v3416
      %v3418 = vpop.f32.mrf.mxu0
      %v3419 = vadd.f32 0.0, %v3418
      %3420 = vmatmul.bf16.gmra.mxu0 %v2686
      %v3421 = vpop.f32.mrf.mxu0
      %v3422 = vadd.f32 0.0, %v3421
      %v3423 = vpop.f32.mrf.mxu0
      %v3424 = vadd.f32 0.0, %v3423
      %3425 = vmatmul.bf16.gmra.mxu0 %v2688
      %v3426 = vpop.f32.mrf.mxu0
      %v3427 = vadd.f32 0.0, %v3426
      %v3428 = vpop.f32.mrf.mxu0
      %v3429 = vadd.f32 0.0, %v3428
      %3430 = vmatmul.bf16.gmra.mxu0 %v2690
      %v3431 = vpop.f32.mrf.mxu0
      %v3432 = vadd.f32 0.0, %v3431
      %v3433 = vpop.f32.mrf.mxu0
      %v3434 = vadd.f32 0.0, %v3433
      %3435 = vmatmul.bf16.gmra.mxu0 %v2692
      %v3436 = vpop.f32.mrf.mxu0
      %v3437 = vadd.f32 0.0, %v3436
      %v3438 = vpop.f32.mrf.mxu0
      %v3439 = vadd.f32 0.0, %v3438
      %3440 = vmatmul.bf16.gmra.mxu0 %v2694
      %v3441 = vpop.f32.mrf.mxu0
      %v3442 = vadd.f32 0.0, %v3441
      %v3443 = vpop.f32.mrf.mxu0
      %v3444 = vadd.f32 0.0, %v3443
      %3445 = vmatmul.bf16.gmra.mxu0 %v2696
      %v3446 = vpop.f32.mrf.mxu0
      %v3447 = vadd.f32 0.0, %v3446
      %v3448 = vpop.f32.mrf.mxu0
      %v3449 = vadd.f32 0.0, %v3448
      %3450 = vmatmul.bf16.gmra.mxu0 %v2698
      %v3451 = vpop.f32.mrf.mxu0
      %v3452 = vadd.f32 0.0, %v3451
      %v3453 = vpop.f32.mrf.mxu0
      %v3454 = vadd.f32 0.0, %v3453
      %3455 = vmatmul.bf16.gmra.mxu0 %v2700
      %v3456 = vpop.f32.mrf.mxu0
      %v3457 = vadd.f32 0.0, %v3456
      %v3458 = vpop.f32.mrf.mxu0
      %v3459 = vadd.f32 0.0, %v3458
      %3460 = vmatmul.bf16.gmra.mxu0 %v2702
      %v3461 = vpop.f32.mrf.mxu0
      %v3462 = vadd.f32 0.0, %v3461
      %v3463 = vpop.f32.mrf.mxu0
      %v3464 = vadd.f32 0.0, %v3463
      %3465 = vmatmul.bf16.gmra.mxu0 %v2704
      %v3466 = vpop.f32.mrf.mxu0
      %v3467 = vadd.f32 0.0, %v3466
      %v3468 = vpop.f32.mrf.mxu0
      %v3469 = vadd.f32 0.0, %v3468
      %3470 = vmatmul.bf16.gmra.mxu0 %v2706
      %v3471 = vpop.f32.mrf.mxu0
      %v3472 = vadd.f32 0.0, %v3471
      %v3473 = vpop.f32.mrf.mxu0
      %v3474 = vadd.f32 0.0, %v3473
      %3475 = vmatmul.bf16.gmra.mxu0 %v2708
      %v3476 = vpop.f32.mrf.mxu0
      %v3477 = vadd.f32 0.0, %v3476
      %v3478 = vpop.f32.mrf.mxu0
      %v3479 = vadd.f32 0.0, %v3478
      %3480 = vmatmul.bf16.gmra.mxu0 %v2710
      %v3481 = vpop.f32.mrf.mxu0
      %v3482 = vadd.f32 0.0, %v3481
      %v3483 = vpop.f32.mrf.mxu0
      %v3484 = vadd.f32 0.0, %v3483
      %3485 = vmatmul.bf16.gmra.mxu0 %v2712
      %v3486 = vpop.f32.mrf.mxu0
      %v3487 = vadd.f32 0.0, %v3486
      %v3488 = vpop.f32.mrf.mxu0
      %v3489 = vadd.f32 0.0, %v3488
      %3490 = vmatmul.bf16.gmra.mxu0 %v2743
      %v3491 = vpop.f32.mrf.mxu0
      %v3492 = vadd.f32 0.0, %v3491
      %v3493 = vpop.f32.mrf.mxu0
      %v3494 = vadd.f32 0.0, %v3493
      %3495 = vdwg.mxu0
      %v3496 = vadd.f32 %v3254, %v3377
      %v3497 = vadd.f32 %v3255, %v3379
      %v3498 = vadd.f32 %v3256, %v3382
      %v3499 = vadd.f32 %v3257, %v3384
      %v3500 = vadd.f32 %v3258, %v3387
      %v3501 = vadd.f32 %v3259, %v3389
      %v3502 = vadd.f32 %v3260, %v3392
      %v3503 = vadd.f32 %v3261, %v3394
      %v3504 = vadd.f32 %v3262, %v3397
      %v3505 = vadd.f32 %v3263, %v3399
      %v3506 = vadd.f32 %v3264, %v3402
      %v3507 = vadd.f32 %v3265, %v3404
      %v3508 = vadd.f32 %v3266, %v3407
      %v3509 = vadd.f32 %v3267, %v3409
      %v3510 = vadd.f32 %v3268, %v3412
      %v3511 = vadd.f32 %v3269, %v3414
      %v3512 = vadd.f32 %v3270, %v3417
      %v3513 = vadd.f32 %v3271, %v3419
      %v3514 = vadd.f32 %v3272, %v3422
      %v3515 = vadd.f32 %v3273, %v3424
      %v3516 = vadd.f32 %v3274, %v3427
      %v3517 = vadd.f32 %v3275, %v3429
      %v3518 = vadd.f32 %v3276, %v3432
      %v3519 = vadd.f32 %v3277, %v3434
      %v3520 = vadd.f32 %v3278, %v3437
      %v3521 = vadd.f32 %v3279, %v3439
      %v3522 = vadd.f32 %v3280, %v3442
      %v3523 = vadd.f32 %v3281, %v3444
      %v3524 = vadd.f32 %v3282, %v3447
      %v3525 = vadd.f32 %v3283, %v3449
      %v3526 = vadd.f32 %v3284, %v3452
      %v3527 = vadd.f32 %v3285, %v3454
      %v3528 = vadd.f32 %v3286, %v3457
      %v3529 = vadd.f32 %v3287, %v3459
      %v3530 = vadd.f32 %v3288, %v3462
      %v3531 = vadd.f32 %v3289, %v3464
      %v3532 = vadd.f32 %v3290, %v3467
      %v3533 = vadd.f32 %v3291, %v3469
      %v3534 = vadd.f32 %v3292, %v3472
      %v3535 = vadd.f32 %v3293, %v3474
      %v3536 = vadd.f32 %v3294, %v3477
      %v3537 = vadd.f32 %v3295, %v3479
      %v3538 = vadd.f32 %v3296, %v3482
      %v3539 = vadd.f32 %v3297, %v3484
      %v3540 = vadd.f32 %v3298, %v3487
      %v3541 = vadd.f32 %v3299, %v3489
      %v3542 = vadd.f32 %v3300, %v3492
      %v3543 = vadd.f32 %v3301, %v3494
      %vm3544 = vcmp.lt.s32.totalorder %v627, 16
      %vm3545 = vcmp.lt.s32.totalorder %v628, 16
      %vm3546 = vcmp.lt.s32.totalorder %v629, 16
      %v3547 = vsel %vm3544, 1, 0
      %v3548 = vsel %vm3545, 1, 0
      %v3549 = vsel %vm3546, 1, 0
      %vm3550 = vcmp.eq.s32.totalorder %v3547, 1
      %vm3551 = vcmp.eq.s32.totalorder %v3548, 1
      %vm3552 = vcmp.eq.s32.totalorder %v3549, 1
      %v3553 = vsel %vm3550, %v3496, 0.0
      %v3554 = vsel %vm3551, %v3497, 0.0
      %v3555 = vsel %vm3552, %v3498, 0.0
      %v3556 = vsel %vm3550, %v3499, 0.0
      %v3557 = vsel %vm3551, %v3500, 0.0
      %v3558 = vsel %vm3552, %v3501, 0.0
      %v3559 = vsel %vm3550, %v3502, 0.0
      %v3560 = vsel %vm3551, %v3503, 0.0
      %v3561 = vsel %vm3552, %v3504, 0.0
      %v3562 = vsel %vm3550, %v3505, 0.0
      %v3563 = vsel %vm3551, %v3506, 0.0
      %v3564 = vsel %vm3552, %v3507, 0.0
      %v3565 = vsel %vm3550, %v3508, 0.0
      %v3566 = vsel %vm3551, %v3509, 0.0
      %v3567 = vsel %vm3552, %v3510, 0.0
      %v3568 = vsel %vm3550, %v3511, 0.0
      %v3569 = vsel %vm3551, %v3512, 0.0
      %v3570 = vsel %vm3552, %v3513, 0.0
      %v3571 = vsel %vm3550, %v3514, 0.0
      %v3572 = vsel %vm3551, %v3515, 0.0
      %v3573 = vsel %vm3552, %v3516, 0.0
      %v3574 = vsel %vm3550, %v3517, 0.0
      %v3575 = vsel %vm3551, %v3518, 0.0
      %v3576 = vsel %vm3552, %v3519, 0.0
      %v3577 = vsel %vm3550, %v3520, 0.0
      %v3578 = vsel %vm3551, %v3521, 0.0
      %v3579 = vsel %vm3552, %v3522, 0.0
      %v3580 = vsel %vm3550, %v3523, 0.0
      %v3581 = vsel %vm3551, %v3524, 0.0
      %v3582 = vsel %vm3552, %v3525, 0.0
      %v3583 = vsel %vm3550, %v3526, 0.0
      %v3584 = vsel %vm3551, %v3527, 0.0
      %v3585 = vsel %vm3552, %v3528, 0.0
      %v3586 = vsel %vm3550, %v3529, 0.0
      %v3587 = vsel %vm3551, %v3530, 0.0
      %v3588 = vsel %vm3552, %v3531, 0.0
      %v3589 = vsel %vm3550, %v3532, 0.0
      %v3590 = vsel %vm3551, %v3533, 0.0
      %v3591 = vsel %vm3552, %v3534, 0.0
      %v3592 = vsel %vm3550, %v3535, 0.0
      %v3593 = vsel %vm3551, %v3536, 0.0
      %v3594 = vsel %vm3552, %v3537, 0.0
      %v3595 = vsel %vm3550, %v3538, 0.0
      %v3596 = vsel %vm3551, %v3539, 0.0
      %v3597 = vsel %vm3552, %v3540, 0.0
      %v3598 = vsel %vm3550, %v3541, 0.0
      %v3599 = vsel %vm3551, %v3542, 0.0
      %v3600 = vsel %vm3552, %v3543, 0.0
      %v3601 = vadd.f32 %v3553, %v3554
      %v3602 = vadd.f32 %v3601, %v3555
      %v3603 = vadd.f32 %v3602, %v3556
      %v3604 = vadd.f32 %v3603, %v3557
      %v3605 = vadd.f32 %v3604, %v3558
      %v3606 = vadd.f32 %v3605, %v3559
      %v3607 = vadd.f32 %v3606, %v3560
      %v3608 = vadd.f32 %v3607, %v3561
      %v3609 = vadd.f32 %v3608, %v3562
      %v3610 = vadd.f32 %v3609, %v3563
      %v3611 = vadd.f32 %v3610, %v3564
      %v3612 = vadd.f32 %v3611, %v3565
      %v3613 = vadd.f32 %v3612, %v3566
      %v3614 = vadd.f32 %v3613, %v3567
      %v3615 = vadd.f32 %v3614, %v3568
      %v3616 = vadd.f32 %v3615, %v3569
      %v3617 = vadd.f32 %v3616, %v3570
      %v3618 = vadd.f32 %v3617, %v3571
      %v3619 = vadd.f32 %v3618, %v3572
      %v3620 = vadd.f32 %v3619, %v3573
      %v3621 = vadd.f32 %v3620, %v3574
      %v3622 = vadd.f32 %v3621, %v3575
      %v3623 = vadd.f32 %v3622, %v3576
      %v3624 = vadd.f32 %v3623, %v3577
      %v3625 = vadd.f32 %v3624, %v3578
      %v3626 = vadd.f32 %v3625, %v3579
      %v3627 = vadd.f32 %v3626, %v3580
      %v3628 = vadd.f32 %v3627, %v3581
      %v3629 = vadd.f32 %v3628, %v3582
      %v3630 = vadd.f32 %v3629, %v3583
      %v3631 = vadd.f32 %v3630, %v3584
      %v3632 = vadd.f32 %v3631, %v3585
      %v3633 = vadd.f32 %v3632, %v3586
      %v3634 = vadd.f32 %v3633, %v3587
      %v3635 = vadd.f32 %v3634, %v3588
      %v3636 = vadd.f32 %v3635, %v3589
      %v3637 = vadd.f32 %v3636, %v3590
      %v3638 = vadd.f32 %v3637, %v3591
      %v3639 = vadd.f32 %v3638, %v3592
      %v3640 = vadd.f32 %v3639, %v3593
      %v3641 = vadd.f32 %v3640, %v3594
      %v3642 = vadd.f32 %v3641, %v3595
      %v3643 = vadd.f32 %v3642, %v3596
      %v3644 = vadd.f32 %v3643, %v3597
      %v3645 = vadd.f32 %v3644, %v3598
      %v3646 = vadd.f32 %v3645, %v3599
      %v3647 = vadd.f32 %v3646, %v3600
      %v3648 = vrot.slane %v3647, 4
      %v3649 = vadd.f32 %v3647, %v3648
      %v3650 = vrot.slane %v3649, 2
      %v3651 = vadd.f32 %v3649, %v3650
      %v3652 = vrot.slane %v3651, 1
      %v3653 = vadd.f32 %v3651, %v3652
      %3654 = vst [vmem:[%s321] sm:$0x1] %v3653
      %v3655 = vmul.f32 %v3553, %v3553
      %v3656 = vmul.f32 %v3554, %v3554
      %v3657 = vmul.f32 %v3555, %v3555
      %v3658 = vmul.f32 %v3556, %v3556
      %v3659 = vmul.f32 %v3557, %v3557
      %v3660 = vmul.f32 %v3558, %v3558
      %v3661 = vmul.f32 %v3559, %v3559
      %v3662 = vmul.f32 %v3560, %v3560
      %v3663 = vmul.f32 %v3561, %v3561
      %v3664 = vmul.f32 %v3562, %v3562
      %v3665 = vmul.f32 %v3563, %v3563
      %v3666 = vmul.f32 %v3564, %v3564
      %v3667 = vmul.f32 %v3565, %v3565
      %v3668 = vmul.f32 %v3566, %v3566
      %v3669 = vmul.f32 %v3567, %v3567
      %v3670 = vmul.f32 %v3568, %v3568
      %v3671 = vmul.f32 %v3569, %v3569
      %v3672 = vmul.f32 %v3570, %v3570
      %v3673 = vmul.f32 %v3571, %v3571
      %v3674 = vmul.f32 %v3572, %v3572
      %v3675 = vmul.f32 %v3573, %v3573
      %v3676 = vmul.f32 %v3574, %v3574
      %v3677 = vmul.f32 %v3575, %v3575
      %v3678 = vmul.f32 %v3576, %v3576
      %v3679 = vmul.f32 %v3577, %v3577
      %v3680 = vmul.f32 %v3578, %v3578
      %v3681 = vmul.f32 %v3579, %v3579
      %v3682 = vmul.f32 %v3580, %v3580
      %v3683 = vmul.f32 %v3581, %v3581
      %v3684 = vmul.f32 %v3582, %v3582
      %v3685 = vmul.f32 %v3583, %v3583
      %v3686 = vmul.f32 %v3584, %v3584
      %v3687 = vmul.f32 %v3585, %v3585
      %v3688 = vmul.f32 %v3586, %v3586
      %v3689 = vmul.f32 %v3587, %v3587
      %v3690 = vmul.f32 %v3588, %v3588
      %v3691 = vmul.f32 %v3589, %v3589
      %v3692 = vmul.f32 %v3590, %v3590
      %v3693 = vmul.f32 %v3591, %v3591
      %v3694 = vmul.f32 %v3592, %v3592
      %v3695 = vmul.f32 %v3593, %v3593
      %v3696 = vmul.f32 %v3594, %v3594
      %v3697 = vmul.f32 %v3595, %v3595
      %v3698 = vmul.f32 %v3596, %v3596
      %v3699 = vmul.f32 %v3597, %v3597
      %v3700 = vmul.f32 %v3598, %v3598
      %v3701 = vmul.f32 %v3599, %v3599
      %v3702 = vmul.f32 %v3600, %v3600
      %v3703 = vadd.f32 %v3655, %v3656
      %v3704 = vadd.f32 %v3703, %v3657
      %v3705 = vadd.f32 %v3704, %v3658
      %v3706 = vadd.f32 %v3705, %v3659
      %v3707 = vadd.f32 %v3706, %v3660
      %v3708 = vadd.f32 %v3707, %v3661
      %v3709 = vadd.f32 %v3708, %v3662
      %v3710 = vadd.f32 %v3709, %v3663
      %v3711 = vadd.f32 %v3710, %v3664
      %v3712 = vadd.f32 %v3711, %v3665
      %v3713 = vadd.f32 %v3712, %v3666
      %v3714 = vadd.f32 %v3713, %v3667
      %v3715 = vadd.f32 %v3714, %v3668
      %v3716 = vadd.f32 %v3715, %v3669
      %v3717 = vadd.f32 %v3716, %v3670
      %v3718 = vadd.f32 %v3717, %v3671
      %v3719 = vadd.f32 %v3718, %v3672
      %v3720 = vadd.f32 %v3719, %v3673
      %v3721 = vadd.f32 %v3720, %v3674
      %v3722 = vadd.f32 %v3721, %v3675
      %v3723 = vadd.f32 %v3722, %v3676
      %v3724 = vadd.f32 %v3723, %v3677
      %v3725 = vadd.f32 %v3724, %v3678
      %v3726 = vadd.f32 %v3725, %v3679
      %v3727 = vadd.f32 %v3726, %v3680
      %v3728 = vadd.f32 %v3727, %v3681
      %v3729 = vadd.f32 %v3728, %v3682
      %v3730 = vadd.f32 %v3729, %v3683
      %v3731 = vadd.f32 %v3730, %v3684
      %v3732 = vadd.f32 %v3731, %v3685
      %v3733 = vadd.f32 %v3732, %v3686
      %v3734 = vadd.f32 %v3733, %v3687
      %v3735 = vadd.f32 %v3734, %v3688
      %v3736 = vadd.f32 %v3735, %v3689
      %v3737 = vadd.f32 %v3736, %v3690
      %v3738 = vadd.f32 %v3737, %v3691
      %v3739 = vadd.f32 %v3738, %v3692
      %v3740 = vadd.f32 %v3739, %v3693
      %v3741 = vadd.f32 %v3740, %v3694
      %v3742 = vadd.f32 %v3741, %v3695
      %v3743 = vadd.f32 %v3742, %v3696
      %v3744 = vadd.f32 %v3743, %v3697
      %v3745 = vadd.f32 %v3744, %v3698
      %v3746 = vadd.f32 %v3745, %v3699
      %v3747 = vadd.f32 %v3746, %v3700
      %v3748 = vadd.f32 %v3747, %v3701
      %v3749 = vadd.f32 %v3748, %v3702
      %v3750 = vrot.slane %v3749, 4
      %v3751 = vadd.f32 %v3749, %v3750
      %v3752 = vrot.slane %v3751, 2
      %v3753 = vadd.f32 %v3751, %v3752
      %v3754 = vrot.slane %v3753, 1
      %v3755 = vadd.f32 %v3753, %v3754
      %3756 = vst [vmem:[%s324] sm:$0x1] %v3755
      %v3757 = vpack.c.bf16 %v3496, %v3496
      %v3758 = vpack.c.bf16 %v3497, %v3497
      %v3759 = vpack.c.bf16 %v3499, %v3499
      %v3760 = vpack.c.bf16 %v3500, %v3500
      %v3761 = vpack.c.bf16 %v3502, %v3502
      %v3762 = vpack.c.bf16 %v3503, %v3503
      %v3763 = vpack.c.bf16 %v3505, %v3505
      %v3764 = vpack.c.bf16 %v3506, %v3506
      %v3765 = vpack.c.bf16 %v3508, %v3508
      %v3766 = vpack.c.bf16 %v3509, %v3509
      %v3767 = vpack.c.bf16 %v3511, %v3511
      %v3768 = vpack.c.bf16 %v3512, %v3512
      %v3769 = vpack.c.bf16 %v3514, %v3514
      %v3770 = vpack.c.bf16 %v3515, %v3515
      %v3771 = vpack.c.bf16 %v3517, %v3517
      %v3772 = vpack.c.bf16 %v3518, %v3518
      %v3773 = vpack.c.bf16 %v3520, %v3520
      %v3774 = vpack.c.bf16 %v3521, %v3521
      %v3775 = vpack.c.bf16 %v3523, %v3523
      %v3776 = vpack.c.bf16 %v3524, %v3524
      %v3777 = vpack.c.bf16 %v3526, %v3526
      %v3778 = vpack.c.bf16 %v3527, %v3527
      %v3779 = vpack.c.bf16 %v3529, %v3529
      %v3780 = vpack.c.bf16 %v3530, %v3530
      %v3781 = vpack.c.bf16 %v3532, %v3532
      %v3782 = vpack.c.bf16 %v3533, %v3533
      %v3783 = vpack.c.bf16 %v3535, %v3535
      %v3784 = vpack.c.bf16 %v3536, %v3536
      %v3785 = vpack.c.bf16 %v3538, %v3538
      %v3786 = vpack.c.bf16 %v3539, %v3539
      %v3787 = vpack.c.bf16 %v3541, %v3541
      %v3788 = vpack.c.bf16 %v3542, %v3542
      %3789 = vst [vmem:[%s318] sm:$0xf] %v3757
      %3790 = vst [vmem:[%s318 + $0x4] sm:$0xf] %v3758
      %3791 = vst [vmem:[%s318 + $0x8] sm:$0xf] %v3759
      %3792 = vst [vmem:[%s318 + $0xc] sm:$0xf] %v3760
      %3793 = vst [vmem:[%s318 + $0x10] sm:$0xf] %v3761
      %3794 = vst [vmem:[%s318 + $0x14] sm:$0xf] %v3762
      %3795 = vst [vmem:[%s318 + $0x18] sm:$0xf] %v3763
      %3796 = vst [vmem:[%s318 + $0x1c] sm:$0xf] %v3764
      %3797 = vst [vmem:[%s318 + $0x20] sm:$0xf] %v3765
      %3798 = vst [vmem:[%s318 + $0x24] sm:$0xf] %v3766
      %3799 = vst [vmem:[%s318 + $0x28] sm:$0xf] %v3767
      %3800 = vst [vmem:[%s318 + $0x2c] sm:$0xf] %v3768
      %3801 = vst [vmem:[%s318 + $0x30] sm:$0xf] %v3769
      %3802 = vst [vmem:[%s318 + $0x34] sm:$0xf] %v3770
      %3803 = vst [vmem:[%s318 + $0x38] sm:$0xf] %v3771
      %3804 = vst [vmem:[%s318 + $0x3c] sm:$0xf] %v3772
      %3805 = vst [vmem:[%s318 + $0x40] sm:$0xf] %v3773
      %3806 = vst [vmem:[%s318 + $0x44] sm:$0xf] %v3774
      %3807 = vst [vmem:[%s318 + $0x48] sm:$0xf] %v3775
      %3808 = vst [vmem:[%s318 + $0x4c] sm:$0xf] %v3776
      %3809 = vst [vmem:[%s318 + $0x50] sm:$0xf] %v3777
      %3810 = vst [vmem:[%s318 + $0x54] sm:$0xf] %v3778
      %3811 = vst [vmem:[%s318 + $0x58] sm:$0xf] %v3779
      %3812 = vst [vmem:[%s318 + $0x5c] sm:$0xf] %v3780
      %3813 = vst [vmem:[%s318 + $0x60] sm:$0xf] %v3781
      %3814 = vst [vmem:[%s318 + $0x64] sm:$0xf] %v3782
      %3815 = vst [vmem:[%s318 + $0x68] sm:$0xf] %v3783
      %3816 = vst [vmem:[%s318 + $0x6c] sm:$0xf] %v3784
      %3817 = vst [vmem:[%s318 + $0x70] sm:$0xf] %v3785
      %3818 = vst [vmem:[%s318 + $0x74] sm:$0xf] %v3786
      %3819 = vst [vmem:[%s318 + $0x78] sm:$0xf] %v3787
      %3820 = vst [vmem:[%s318 + $0x7c] sm:$0xf] %v3788
      %p3821 = scmp.lt.s32.totalorder %s20, 1
      %s3822 = scalar_select %p3821, %s20, 1
      %s3823 = smul.addr %s3822, 32
      %s3824 = smul.addr %s3823, 4
      %s3825 = scalar_lea.vmem %s6, %s3824
      %p3826 = scmp.lt.s32.totalorder %s20, 1
      %s3827 = scalar_select %p3826, %s20, 1
      %s3828 = scalar_lea.vmem %s7, %s3827
      %p3829 = scmp.lt.s32.totalorder %s20, 1
      %s3830 = scalar_select %p3829, %s20, 1
      %s3831 = scalar_lea.vmem %s8, %s3830
      // Predicated region
      $region45: #{basic_block_nchw.4} parent=43 // pred_check
        %p3832 = pneg %p169
      $region46: #{basic_block_nchw.4} parent=43 // pred_check_branch
        %3834 = sbr.rel (%p3832) target = $region48
      $region47: #{basic_block_nchw.4} parent=43 // pred_region
        _
      $region48: #{basic_block_nchw.4} parent=43 // pred_fallthru
        _
      // Predicated region
      $region49: #{basic_block_nchw.4} parent=43 // pred_check
        %p3835 = pneg %p195
      $region50: #{basic_block_nchw.4} parent=43 // pred_check_branch
        %3837 = sbr.rel (%p3835) target = $region52
      $region51: #{basic_block_nchw.4} parent=43 // pred_region
        _
      $region52: #{basic_block_nchw.4} parent=43 // pred_fallthru
        _
      // Predicated region
      $region53: #{basic_block_nchw.4} parent=43 // pred_check
        %p3838 = pneg %p221
      $region54: #{basic_block_nchw.4} parent=43 // pred_check_branch
        %3840 = sbr.rel (%p3838) target = $region56
      $region55: #{basic_block_nchw.4} parent=43 // pred_region
        _
      $region56: #{basic_block_nchw.4} parent=43 // pred_fallthru
        _
    $region44: #{basic_block_nchw.4} parent=5 // pred_fallthru
      _
    %p3841 = scmp.le.s32.totalorder 2, %s15
    // Predicated region
    $region57: #{basic_block_nchw.4} parent=5 // pred_check
      %p3842 = pneg %p3841
    $region58: #{basic_block_nchw.4} parent=5 // pred_check_branch
      %3844 = sbr.rel (%p3842) target = $region60
    $region59: #{basic_block_nchw.4} parent=5 // pred_region
      %s3845 = ssub.s32 %s15, 2
      // Predicated region
      $region61: #{basic_block_nchw.4} parent=59 // pred_check
        %p3846 = pneg %p175
      $region62: #{basic_block_nchw.4} parent=59 // pred_check_branch
        %3848 = sbr.rel (%p3846) target = $region64
      $region63: #{basic_block_nchw.4} parent=59 // pred_region
        %p3849 = scmp.lt.s32.totalorder %s21, 1
        %s3850 = scalar_select %p3849, %s21, 1
        %s3851 = smul.addr %s3850, 32
        %s3852 = smul.addr %s3851, 4
        %s3853 = scalar_lea.vmem %s6, %s3852
      $region64: #{basic_block_nchw.4} parent=59 // pred_fallthru
        _
      // Predicated region
      $region65: #{basic_block_nchw.4} parent=59 // pred_check
        %p3854 = pneg %p201
      $region66: #{basic_block_nchw.4} parent=59 // pred_check_branch
        %3856 = sbr.rel (%p3854) target = $region68
      $region67: #{basic_block_nchw.4} parent=59 // pred_region
        %p3857 = scmp.lt.s32.totalorder %s21, 1
        %s3858 = scalar_select %p3857, %s21, 1
        %s3859 = scalar_lea.vmem %s7, %s3858
      $region68: #{basic_block_nchw.4} parent=59 // pred_fallthru
        _
      // Predicated region
      $region69: #{basic_block_nchw.4} parent=59 // pred_check
        %p3860 = pneg %p227
      $region70: #{basic_block_nchw.4} parent=59 // pred_check_branch
        %3862 = sbr.rel (%p3860) target = $region72
      $region71: #{basic_block_nchw.4} parent=59 // pred_region
        %p3863 = scmp.lt.s32.totalorder %s21, 1
        %s3864 = scalar_select %p3863, %s21, 1
        %s3865 = scalar_lea.vmem %s8, %s3864
      $region72: #{basic_block_nchw.4} parent=59 // pred_fallthru
        _
    $region60: #{basic_block_nchw.4} parent=5 // pred_fallthru
      _
  $region6: #{basic_block_nchw.4} parent=0 // loop_footer
    %s19 = sadd.s32 1, %s15
  $region7: #{basic_block_nchw.4} parent=0 // loop_footer_branch
    %14 = sbr.rel target = $region3
  $region8: #{basic_block_nchw.4} parent=0 // loop_exit
    _

</llo_original>
